<compile_context>
chip_gen: v6e
topology: v6e:2x2x1
jax: 0.10.0
libtpu: 0.0.40
codegen_flags: <defaults>
</compile_context>

<pallas_src>
import functools

import jax
import jax.numpy as jnp
from jax.experimental import pallas as pl
from jax.experimental.pallas import tpu as pltpu


def _fused_gru_decoder_kernel(*refs, n_layers, hid_dim, batch, seq_len):
    """Fused multi-layer GRU forward (eval mode).

    refs layout:
      [x_ref,
       (w_ih_r, w_ih_z, w_ih_n, w_hh_r, w_hh_z, w_hh_n, b_r, b_z, b_in, b_hn)
           * n_layers,
       o_ref]

      x_ref   : (T*B, D_in) bf16, time-major (t outer)
      w_ih_g  : (D_in, H)   bf16 per-gate input weights (gate order r, z, n)
      w_hh_g  : (H, H)      bf16 per-gate hidden weights
      b_r,b_z : (1, H)      f32, b_ih_g + b_hh_g folded (outside the r* term)
      b_in    : (1, H)      f32, b_ih_n
      b_hn    : (1, H)      f32, b_hh_n (must stay inside the r* multiply)
      o_ref   : (B, T*H)    f32, lane-dense output slab
    """
    H, B, T = hid_dim, batch, seq_len
    x_ref = refs[0]
    p = refs[1:1 + 10 * n_layers]
    o_ref = refs[1 + 10 * n_layers]

    layer_in = x_ref[...]                                # (T*B, D_in) bf16 value

    for layer in range(n_layers):
        (w_ih_r, w_ih_z, w_ih_n,
         w_hh_r, w_hh_z, w_hh_n,
         b_r, b_z, b_in, b_hn) = (p[10 * layer + i][...] for i in range(10))

        # Hoisted input projection for ALL timesteps at once (off the serial
        # path), one (T*B, H) result tile per gate.  f32 accumulation.
        gx_r = jnp.dot(layer_in, w_ih_r, preferred_element_type=jnp.float32) + b_r
        gx_z = jnp.dot(layer_in, w_ih_z, preferred_element_type=jnp.float32) + b_z
        gx_n = jnp.dot(layer_in, w_ih_n, preferred_element_type=jnp.float32) + b_in

        h = jnp.zeros((B, H), jnp.float32)
        hs = []
        for t in range(T):                               # static T -> fully unrolled
            lo = t * B                                   # contiguous leading-axis block
            h16 = h.astype(jnp.bfloat16)
            gh_r = jnp.dot(h16, w_hh_r, preferred_element_type=jnp.float32)
            gh_z = jnp.dot(h16, w_hh_z, preferred_element_type=jnp.float32)
            gh_n = jnp.dot(h16, w_hh_n, preferred_element_type=jnp.float32)
            # PyTorch gate order: r, z, n
            r = jax.nn.sigmoid(gx_r[lo:lo + B, :] + gh_r)
            z = jax.nn.sigmoid(gx_z[lo:lo + B, :] + gh_z)
            n = jnp.tanh(gx_n[lo:lo + B, :] + r * (gh_n + b_hn))
            h = (1.0 - z) * n + z * h
            hs.append(h)

        if layer == n_layers - 1:
            # Single lane-dense store: (B, T*H); wrapper reshapes to (B, T, H).
            o_ref[...] = jnp.concatenate(hs, axis=1).astype(o_ref.dtype)
        else:
            # Value-carried, time-major sequence -> next layer's hoisted matmul.
            layer_in = jnp.concatenate(hs, axis=0).astype(jnp.bfloat16)


def rnn_decoder_forward(x_btd, params):
    """Equivalent of RNNDecoder.forward: x (B, T, in_dim) -> (B, T, hid_dim)."""
    B, T, _ = x_btd.shape
    H = params[0][1].shape[0]
    n_layers = len(params)

    # Time-major layer-0 input, cast to bf16 (used only as an MXU operand).
    x_tm = jnp.transpose(x_btd, (1, 0, 2)).reshape(T * B, -1).astype(jnp.bfloat16)

    # Per-gate weight/bias packing (gate order r, z, n).  b_hh's r/z columns sit
    # outside the r* multiply, so fold them into the hoisted bias; keep b_hn.
    flat = []
    for (w_ih, w_hh, b_ih, b_hh) in params:
        w_ih16 = w_ih.astype(jnp.bfloat16)
        w_hh16 = w_hh.astype(jnp.bfloat16)
        flat += [
            w_ih16[:, 0:H], w_ih16[:, H:2 * H], w_ih16[:, 2 * H:],
            w_hh16[:, 0:H], w_hh16[:, H:2 * H], w_hh16[:, 2 * H:],
            b_ih[:, 0:H] + b_hh[:, 0:H],              # b_r
            b_ih[:, H:2 * H] + b_hh[:, H:2 * H],      # b_z
            b_ih[:, 2 * H:],                          # b_in
            b_hh[:, 2 * H:],                          # b_hn
        ]

    kernel = functools.partial(_fused_gru_decoder_kernel,
                               n_layers=n_layers, hid_dim=H, batch=B, seq_len=T)
    n_in = 1 + 10 * n_layers
    out_flat = pl.pallas_call(
        kernel,
        out_shape=jax.ShapeDtypeStruct((B, T * H), jnp.float32),
        in_specs=[pl.BlockSpec(memory_space=pltpu.MemorySpace.VMEM)] * n_in,
        out_specs=pl.BlockSpec(memory_space=pltpu.MemorySpace.VMEM),
    )(x_tm, *flat)
    return out_flat.reshape(B, T, H)


def init_gru_params(key, in_dim, hid_dim, n_layers):
    """Deterministic init matching nn.GRU shapes, stored pre-transposed:
    weights (D, 3H) / (H, 3H), biases (1, 3H), gate order (r, z, n)."""
    k = 1.0 / jnp.sqrt(jnp.float32(hid_dim))
    params = []
    for layer in range(n_layers):
        d_in = in_dim if layer == 0 else hid_dim
        key, k1, k2, k3, k4 = jax.random.split(key, 5)
        w_ih = jax.random.uniform(k1, (d_in, 3 * hid_dim), jnp.float32, -k, k)
        w_hh = jax.random.uniform(k2, (hid_dim, 3 * hid_dim), jnp.float32, -k, k)
        b_ih = jax.random.uniform(k3, (1, 3 * hid_dim), jnp.float32, -k, k)
        b_hh = jax.random.uniform(k4, (1, 3 * hid_dim), jnp.float32, -k, k)
        params.append((w_ih, w_hh, b_ih, b_hh))
    return params


def rnn_decoder_reference(x_btd, params):
    """Pure-JAX f32 reference (lax.scan) for correctness checking."""
    h_seq = jnp.transpose(x_btd, (1, 0, 2))
    for (w_ih, w_hh, b_ih, b_hh) in params:
        B = h_seq.shape[1]
        H = w_hh.shape[0]

        def step(h, x_t, w_ih=w_ih, w_hh=w_hh, b_ih=b_ih, b_hh=b_hh, H=H):
            gx = x_t @ w_ih + b_ih[0]
            gh = h @ w_hh + b_hh[0]
            r = jax.nn.sigmoid(gx[:, :H] + gh[:, :H])
            z = jax.nn.sigmoid(gx[:, H:2 * H] + gh[:, H:2 * H])
            n = jnp.tanh(gx[:, 2 * H:] + r * gh[:, 2 * H:])
            h_new = (1.0 - z) * n + z * h
            return h_new, h_new

        h0 = jnp.zeros((B, H), jnp.float32)
        _, h_seq = jax.lax.scan(step, h0, h_seq)
    return jnp.transpose(h_seq, (1, 0, 2))


if __name__ == "__main__":
    # Module config: RNNDecoder(in_dim=16, hid_dim=32, n_layers=2, dropout=0.1)
    B, T, IN_DIM, HID_DIM, N_LAYERS = 2, 8, 16, 32, 2

    key = jax.random.PRNGKey(0)
    key, kx = jax.random.split(key)
    x = jax.random.normal(kx, (B, T, IN_DIM), jnp.float32)
    params = init_gru_params(key, IN_DIM, HID_DIM, N_LAYERS)

    out = jax.block_until_ready(rnn_decoder_forward(x, params))
    ref = jax.block_until_ready(rnn_decoder_reference(x, params))

    assert out.shape == (B, T, HID_DIM)
    # Tolerance relaxed vs the f32 reference because matmul operands are bf16
    # (f32 accumulation); gate/elementwise math is f32.
    max_err = jnp.max(jnp.abs(out - ref))
    assert jnp.allclose(out, ref, atol=5e-2, rtol=5e-2), f"max abs err = {max_err}"

    print("KERNEL_OK")
</pallas_src>

<mosaic_0001>
module attributes {stable_mosaic.version = 11 : i64} {
  func.func @_fused_gru_decoder_kernel(%arg0: memref<16x16xbf16, #tpu.memory_space<vmem>>, %arg1: memref<16x32xbf16, #tpu.memory_space<vmem>>, %arg2: memref<16x32xbf16, #tpu.memory_space<vmem>>, %arg3: memref<16x32xbf16, #tpu.memory_space<vmem>>, %arg4: memref<32x32xbf16, #tpu.memory_space<vmem>>, %arg5: memref<32x32xbf16, #tpu.memory_space<vmem>>, %arg6: memref<32x32xbf16, #tpu.memory_space<vmem>>, %arg7: memref<1x32xf32, #tpu.memory_space<vmem>>, %arg8: memref<1x32xf32, #tpu.memory_space<vmem>>, %arg9: memref<1x32xf32, #tpu.memory_space<vmem>>, %arg10: memref<1x32xf32, #tpu.memory_space<vmem>>, %arg11: memref<32x32xbf16, #tpu.memory_space<vmem>>, %arg12: memref<32x32xbf16, #tpu.memory_space<vmem>>, %arg13: memref<32x32xbf16, #tpu.memory_space<vmem>>, %arg14: memref<32x32xbf16, #tpu.memory_space<vmem>>, %arg15: memref<32x32xbf16, #tpu.memory_space<vmem>>, %arg16: memref<32x32xbf16, #tpu.memory_space<vmem>>, %arg17: memref<1x32xf32, #tpu.memory_space<vmem>>, %arg18: memref<1x32xf32, #tpu.memory_space<vmem>>, %arg19: memref<1x32xf32, #tpu.memory_space<vmem>>, %arg20: memref<1x32xf32, #tpu.memory_space<vmem>>, %arg21: memref<2x256xf32, #tpu.memory_space<vmem>>) attributes {dimension_semantics = [], scalar_prefetch = 0 : i64, scratch_operands = 0 : i64, tpu.core_type = #tpu.core_type<tc>} {
    %c0 = arith.constant 0 : index
    %c0_0 = arith.constant 0 : index
    %0 = vector.load %arg0[%c0, %c0_0] : memref<16x16xbf16, #tpu.memory_space<vmem>>, vector<16x16xbf16>
    %c0_1 = arith.constant 0 : index
    %c0_2 = arith.constant 0 : index
    %1 = vector.load %arg1[%c0_1, %c0_2] : memref<16x32xbf16, #tpu.memory_space<vmem>>, vector<16x32xbf16>
    %c0_3 = arith.constant 0 : index
    %c0_4 = arith.constant 0 : index
    %2 = vector.load %arg2[%c0_3, %c0_4] : memref<16x32xbf16, #tpu.memory_space<vmem>>, vector<16x32xbf16>
    %c0_5 = arith.constant 0 : index
    %c0_6 = arith.constant 0 : index
    %3 = vector.load %arg3[%c0_5, %c0_6] : memref<16x32xbf16, #tpu.memory_space<vmem>>, vector<16x32xbf16>
    %c0_7 = arith.constant 0 : index
    %c0_8 = arith.constant 0 : index
    %4 = vector.load %arg4[%c0_7, %c0_8] : memref<32x32xbf16, #tpu.memory_space<vmem>>, vector<32x32xbf16>
    %c0_9 = arith.constant 0 : index
    %c0_10 = arith.constant 0 : index
    %5 = vector.load %arg5[%c0_9, %c0_10] : memref<32x32xbf16, #tpu.memory_space<vmem>>, vector<32x32xbf16>
    %c0_11 = arith.constant 0 : index
    %c0_12 = arith.constant 0 : index
    %6 = vector.load %arg6[%c0_11, %c0_12] : memref<32x32xbf16, #tpu.memory_space<vmem>>, vector<32x32xbf16>
    %c0_13 = arith.constant 0 : index
    %c0_14 = arith.constant 0 : index
    %7 = vector.load %arg7[%c0_13, %c0_14] : memref<1x32xf32, #tpu.memory_space<vmem>>, vector<1x32xf32>
    %c0_15 = arith.constant 0 : index
    %c0_16 = arith.constant 0 : index
    %8 = vector.load %arg8[%c0_15, %c0_16] : memref<1x32xf32, #tpu.memory_space<vmem>>, vector<1x32xf32>
    %c0_17 = arith.constant 0 : index
    %c0_18 = arith.constant 0 : index
    %9 = vector.load %arg9[%c0_17, %c0_18] : memref<1x32xf32, #tpu.memory_space<vmem>>, vector<1x32xf32>
    %c0_19 = arith.constant 0 : index
    %c0_20 = arith.constant 0 : index
    %10 = vector.load %arg10[%c0_19, %c0_20] : memref<1x32xf32, #tpu.memory_space<vmem>>, vector<1x32xf32>
    %cst = arith.constant dense<0.000000e+00> : vector<16x32xf32>
    %11 = tpu.matmul %0, %1, %cst {dimension_numbers = #tpu.dot_dimension_numbers<[1], [0], [0], [1], [0, 0, 1, 1], [], []>} : vector<16x16xbf16>, vector<16x32xbf16>, vector<16x32xf32> -> vector<16x32xf32>
    %12 = vector.broadcast %7 : vector<1x32xf32> to vector<16x32xf32>
    %13 = arith.addf %11, %12 : vector<16x32xf32>
    %cst_21 = arith.constant dense<0.000000e+00> : vector<16x32xf32>
    %14 = tpu.matmul %0, %2, %cst_21 {dimension_numbers = #tpu.dot_dimension_numbers<[1], [0], [0], [1], [0, 0, 1, 1], [], []>} : vector<16x16xbf16>, vector<16x32xbf16>, vector<16x32xf32> -> vector<16x32xf32>
    %15 = vector.broadcast %8 : vector<1x32xf32> to vector<16x32xf32>
    %16 = arith.addf %14, %15 : vector<16x32xf32>
    %cst_22 = arith.constant dense<0.000000e+00> : vector<16x32xf32>
    %17 = tpu.matmul %0, %3, %cst_22 {dimension_numbers = #tpu.dot_dimension_numbers<[1], [0], [0], [1], [0, 0, 1, 1], [], []>} : vector<16x16xbf16>, vector<16x32xbf16>, vector<16x32xf32> -> vector<16x32xf32>
    %18 = vector.broadcast %9 : vector<1x32xf32> to vector<16x32xf32>
    %19 = arith.addf %17, %18 : vector<16x32xf32>
    %cst_23 = arith.constant 0.000000e+00 : f32
    %20 = vector.broadcast %cst_23 : f32 to vector<2x32xf32>
    %21 = arith.truncf %20 : vector<2x32xf32> to vector<2x32xbf16>
    %cst_24 = arith.constant dense<0.000000e+00> : vector<2x32xf32>
    %22 = tpu.matmul %21, %4, %cst_24 {dimension_numbers = #tpu.dot_dimension_numbers<[1], [0], [0], [1], [0, 0, 1, 1], [], []>} : vector<2x32xbf16>, vector<32x32xbf16>, vector<2x32xf32> -> vector<2x32xf32>
    %cst_25 = arith.constant dense<0.000000e+00> : vector<2x32xf32>
    %23 = tpu.matmul %21, %5, %cst_25 {dimension_numbers = #tpu.dot_dimension_numbers<[1], [0], [0], [1], [0, 0, 1, 1], [], []>} : vector<2x32xbf16>, vector<32x32xbf16>, vector<2x32xf32> -> vector<2x32xf32>
    %cst_26 = arith.constant dense<0.000000e+00> : vector<2x32xf32>
    %24 = tpu.matmul %21, %6, %cst_26 {dimension_numbers = #tpu.dot_dimension_numbers<[1], [0], [0], [1], [0, 0, 1, 1], [], []>} : vector<2x32xbf16>, vector<32x32xbf16>, vector<2x32xf32> -> vector<2x32xf32>
    %25 = vector.extract_strided_slice %13 {offsets = [0, 0], sizes = [2, 32], strides = [1, 1]} : vector<16x32xf32> to vector<2x32xf32>
    %26 = arith.addf %25, %22 : vector<2x32xf32>
    %27 = arith.negf %26 : vector<2x32xf32>
    %28 = math.exp %27 : vector<2x32xf32>
    %cst_27 = arith.constant 1.000000e+00 : f32
    %29 = vector.broadcast %cst_27 : f32 to vector<2x32xf32>
    %30 = arith.addf %29, %28 : vector<2x32xf32>
    %31 = arith.divf %29, %30 : vector<2x32xf32>
    %32 = vector.extract_strided_slice %16 {offsets = [0, 0], sizes = [2, 32], strides = [1, 1]} : vector<16x32xf32> to vector<2x32xf32>
    %33 = arith.addf %32, %23 : vector<2x32xf32>
    %34 = arith.negf %33 : vector<2x32xf32>
    %35 = math.exp %34 : vector<2x32xf32>
    %cst_28 = arith.constant 1.000000e+00 : f32
    %36 = vector.broadcast %cst_28 : f32 to vector<2x32xf32>
    %37 = arith.addf %36, %35 : vector<2x32xf32>
    %38 = arith.divf %36, %37 : vector<2x32xf32>
    %39 = vector.extract_strided_slice %19 {offsets = [0, 0], sizes = [2, 32], strides = [1, 1]} : vector<16x32xf32> to vector<2x32xf32>
    %40 = vector.broadcast %10 : vector<1x32xf32> to vector<2x32xf32>
    %41 = arith.addf %24, %40 : vector<2x32xf32>
    %42 = arith.mulf %31, %41 : vector<2x32xf32>
    %43 = arith.addf %39, %42 : vector<2x32xf32>
    %44 = math.tanh %43 : vector<2x32xf32>
    %cst_29 = arith.constant 1.000000e+00 : f32
    %45 = vector.broadcast %cst_29 : f32 to vector<2x32xf32>
    %46 = arith.subf %45, %38 : vector<2x32xf32>
    %47 = arith.mulf %46, %44 : vector<2x32xf32>
    %48 = arith.mulf %38, %20 : vector<2x32xf32>
    %49 = arith.addf %47, %48 : vector<2x32xf32>
    %50 = arith.truncf %49 : vector<2x32xf32> to vector<2x32xbf16>
    %cst_30 = arith.constant dense<0.000000e+00> : vector<2x32xf32>
    %51 = tpu.matmul %50, %4, %cst_30 {dimension_numbers = #tpu.dot_dimension_numbers<[1], [0], [0], [1], [0, 0, 1, 1], [], []>} : vector<2x32xbf16>, vector<32x32xbf16>, vector<2x32xf32> -> vector<2x32xf32>
    %cst_31 = arith.constant dense<0.000000e+00> : vector<2x32xf32>
    %52 = tpu.matmul %50, %5, %cst_31 {dimension_numbers = #tpu.dot_dimension_numbers<[1], [0], [0], [1], [0, 0, 1, 1], [], []>} : vector<2x32xbf16>, vector<32x32xbf16>, vector<2x32xf32> -> vector<2x32xf32>
    %cst_32 = arith.constant dense<0.000000e+00> : vector<2x32xf32>
    %53 = tpu.matmul %50, %6, %cst_32 {dimension_numbers = #tpu.dot_dimension_numbers<[1], [0], [0], [1], [0, 0, 1, 1], [], []>} : vector<2x32xbf16>, vector<32x32xbf16>, vector<2x32xf32> -> vector<2x32xf32>
    %54 = vector.extract_strided_slice %13 {offsets = [2, 0], sizes = [2, 32], strides = [1, 1]} : vector<16x32xf32> to vector<2x32xf32>
    %55 = arith.addf %54, %51 : vector<2x32xf32>
    %56 = arith.negf %55 : vector<2x32xf32>
    %57 = math.exp %56 : vector<2x32xf32>
    %cst_33 = arith.constant 1.000000e+00 : f32
    %58 = vector.broadcast %cst_33 : f32 to vector<2x32xf32>
    %59 = arith.addf %58, %57 : vector<2x32xf32>
    %60 = arith.divf %58, %59 : vector<2x32xf32>
    %61 = vector.extract_strided_slice %16 {offsets = [2, 0], sizes = [2, 32], strides = [1, 1]} : vector<16x32xf32> to vector<2x32xf32>
    %62 = arith.addf %61, %52 : vector<2x32xf32>
    %63 = arith.negf %62 : vector<2x32xf32>
    %64 = math.exp %63 : vector<2x32xf32>
    %cst_34 = arith.constant 1.000000e+00 : f32
    %65 = vector.broadcast %cst_34 : f32 to vector<2x32xf32>
    %66 = arith.addf %65, %64 : vector<2x32xf32>
    %67 = arith.divf %65, %66 : vector<2x32xf32>
    %68 = vector.extract_strided_slice %19 {offsets = [2, 0], sizes = [2, 32], strides = [1, 1]} : vector<16x32xf32> to vector<2x32xf32>
    %69 = vector.broadcast %10 : vector<1x32xf32> to vector<2x32xf32>
    %70 = arith.addf %53, %69 : vector<2x32xf32>
    %71 = arith.mulf %60, %70 : vector<2x32xf32>
    %72 = arith.addf %68, %71 : vector<2x32xf32>
    %73 = math.tanh %72 : vector<2x32xf32>
    %cst_35 = arith.constant 1.000000e+00 : f32
    %74 = vector.broadcast %cst_35 : f32 to vector<2x32xf32>
    %75 = arith.subf %74, %67 : vector<2x32xf32>
    %76 = arith.mulf %75, %73 : vector<2x32xf32>
    %77 = arith.mulf %67, %49 : vector<2x32xf32>
    %78 = arith.addf %76, %77 : vector<2x32xf32>
    %79 = arith.truncf %78 : vector<2x32xf32> to vector<2x32xbf16>
    %cst_36 = arith.constant dense<0.000000e+00> : vector<2x32xf32>
    %80 = tpu.matmul %79, %4, %cst_36 {dimension_numbers = #tpu.dot_dimension_numbers<[1], [0], [0], [1], [0, 0, 1, 1], [], []>} : vector<2x32xbf16>, vector<32x32xbf16>, vector<2x32xf32> -> vector<2x32xf32>
    %cst_37 = arith.constant dense<0.000000e+00> : vector<2x32xf32>
    %81 = tpu.matmul %79, %5, %cst_37 {dimension_numbers = #tpu.dot_dimension_numbers<[1], [0], [0], [1], [0, 0, 1, 1], [], []>} : vector<2x32xbf16>, vector<32x32xbf16>, vector<2x32xf32> -> vector<2x32xf32>
    %cst_38 = arith.constant dense<0.000000e+00> : vector<2x32xf32>
    %82 = tpu.matmul %79, %6, %cst_38 {dimension_numbers = #tpu.dot_dimension_numbers<[1], [0], [0], [1], [0, 0, 1, 1], [], []>} : vector<2x32xbf16>, vector<32x32xbf16>, vector<2x32xf32> -> vector<2x32xf32>
    %83 = vector.extract_strided_slice %13 {offsets = [4, 0], sizes = [2, 32], strides = [1, 1]} : vector<16x32xf32> to vector<2x32xf32>
    %84 = arith.addf %83, %80 : vector<2x32xf32>
    %85 = arith.negf %84 : vector<2x32xf32>
    %86 = math.exp %85 : vector<2x32xf32>
    %cst_39 = arith.constant 1.000000e+00 : f32
    %87 = vector.broadcast %cst_39 : f32 to vector<2x32xf32>
    %88 = arith.addf %87, %86 : vector<2x32xf32>
    %89 = arith.divf %87, %88 : vector<2x32xf32>
    %90 = vector.extract_strided_slice %16 {offsets = [4, 0], sizes = [2, 32], strides = [1, 1]} : vector<16x32xf32> to vector<2x32xf32>
    %91 = arith.addf %90, %81 : vector<2x32xf32>
    %92 = arith.negf %91 : vector<2x32xf32>
    %93 = math.exp %92 : vector<2x32xf32>
    %cst_40 = arith.constant 1.000000e+00 : f32
    %94 = vector.broadcast %cst_40 : f32 to vector<2x32xf32>
    %95 = arith.addf %94, %93 : vector<2x32xf32>
    %96 = arith.divf %94, %95 : vector<2x32xf32>
    %97 = vector.extract_strided_slice %19 {offsets = [4, 0], sizes = [2, 32], strides = [1, 1]} : vector<16x32xf32> to vector<2x32xf32>
    %98 = vector.broadcast %10 : vector<1x32xf32> to vector<2x32xf32>
    %99 = arith.addf %82, %98 : vector<2x32xf32>
    %100 = arith.mulf %89, %99 : vector<2x32xf32>
    %101 = arith.addf %97, %100 : vector<2x32xf32>
    %102 = math.tanh %101 : vector<2x32xf32>
    %cst_41 = arith.constant 1.000000e+00 : f32
    %103 = vector.broadcast %cst_41 : f32 to vector<2x32xf32>
    %104 = arith.subf %103, %96 : vector<2x32xf32>
    %105 = arith.mulf %104, %102 : vector<2x32xf32>
    %106 = arith.mulf %96, %78 : vector<2x32xf32>
    %107 = arith.addf %105, %106 : vector<2x32xf32>
    %108 = arith.truncf %107 : vector<2x32xf32> to vector<2x32xbf16>
    %cst_42 = arith.constant dense<0.000000e+00> : vector<2x32xf32>
    %109 = tpu.matmul %108, %4, %cst_42 {dimension_numbers = #tpu.dot_dimension_numbers<[1], [0], [0], [1], [0, 0, 1, 1], [], []>} : vector<2x32xbf16>, vector<32x32xbf16>, vector<2x32xf32> -> vector<2x32xf32>
    %cst_43 = arith.constant dense<0.000000e+00> : vector<2x32xf32>
    %110 = tpu.matmul %108, %5, %cst_43 {dimension_numbers = #tpu.dot_dimension_numbers<[1], [0], [0], [1], [0, 0, 1, 1], [], []>} : vector<2x32xbf16>, vector<32x32xbf16>, vector<2x32xf32> -> vector<2x32xf32>
    %cst_44 = arith.constant dense<0.000000e+00> : vector<2x32xf32>
    %111 = tpu.matmul %108, %6, %cst_44 {dimension_numbers = #tpu.dot_dimension_numbers<[1], [0], [0], [1], [0, 0, 1, 1], [], []>} : vector<2x32xbf16>, vector<32x32xbf16>, vector<2x32xf32> -> vector<2x32xf32>
    %112 = vector.extract_strided_slice %13 {offsets = [6, 0], sizes = [2, 32], strides = [1, 1]} : vector<16x32xf32> to vector<2x32xf32>
    %113 = arith.addf %112, %109 : vector<2x32xf32>
    %114 = arith.negf %113 : vector<2x32xf32>
    %115 = math.exp %114 : vector<2x32xf32>
    %cst_45 = arith.constant 1.000000e+00 : f32
    %116 = vector.broadcast %cst_45 : f32 to vector<2x32xf32>
    %117 = arith.addf %116, %115 : vector<2x32xf32>
    %118 = arith.divf %116, %117 : vector<2x32xf32>
    %119 = vector.extract_strided_slice %16 {offsets = [6, 0], sizes = [2, 32], strides = [1, 1]} : vector<16x32xf32> to vector<2x32xf32>
    %120 = arith.addf %119, %110 : vector<2x32xf32>
    %121 = arith.negf %120 : vector<2x32xf32>
    %122 = math.exp %121 : vector<2x32xf32>
    %cst_46 = arith.constant 1.000000e+00 : f32
    %123 = vector.broadcast %cst_46 : f32 to vector<2x32xf32>
    %124 = arith.addf %123, %122 : vector<2x32xf32>
    %125 = arith.divf %123, %124 : vector<2x32xf32>
    %126 = vector.extract_strided_slice %19 {offsets = [6, 0], sizes = [2, 32], strides = [1, 1]} : vector<16x32xf32> to vector<2x32xf32>
    %127 = vector.broadcast %10 : vector<1x32xf32> to vector<2x32xf32>
    %128 = arith.addf %111, %127 : vector<2x32xf32>
    %129 = arith.mulf %118, %128 : vector<2x32xf32>
    %130 = arith.addf %126, %129 : vector<2x32xf32>
    %131 = math.tanh %130 : vector<2x32xf32>
    %cst_47 = arith.constant 1.000000e+00 : f32
    %132 = vector.broadcast %cst_47 : f32 to vector<2x32xf32>
    %133 = arith.subf %132, %125 : vector<2x32xf32>
    %134 = arith.mulf %133, %131 : vector<2x32xf32>
    %135 = arith.mulf %125, %107 : vector<2x32xf32>
    %136 = arith.addf %134, %135 : vector<2x32xf32>
    %137 = arith.truncf %136 : vector<2x32xf32> to vector<2x32xbf16>
    %cst_48 = arith.constant dense<0.000000e+00> : vector<2x32xf32>
    %138 = tpu.matmul %137, %4, %cst_48 {dimension_numbers = #tpu.dot_dimension_numbers<[1], [0], [0], [1], [0, 0, 1, 1], [], []>} : vector<2x32xbf16>, vector<32x32xbf16>, vector<2x32xf32> -> vector<2x32xf32>
    %cst_49 = arith.constant dense<0.000000e+00> : vector<2x32xf32>
    %139 = tpu.matmul %137, %5, %cst_49 {dimension_numbers = #tpu.dot_dimension_numbers<[1], [0], [0], [1], [0, 0, 1, 1], [], []>} : vector<2x32xbf16>, vector<32x32xbf16>, vector<2x32xf32> -> vector<2x32xf32>
    %cst_50 = arith.constant dense<0.000000e+00> : vector<2x32xf32>
    %140 = tpu.matmul %137, %6, %cst_50 {dimension_numbers = #tpu.dot_dimension_numbers<[1], [0], [0], [1], [0, 0, 1, 1], [], []>} : vector<2x32xbf16>, vector<32x32xbf16>, vector<2x32xf32> -> vector<2x32xf32>
    %141 = vector.extract_strided_slice %13 {offsets = [8, 0], sizes = [2, 32], strides = [1, 1]} : vector<16x32xf32> to vector<2x32xf32>
    %142 = arith.addf %141, %138 : vector<2x32xf32>
    %143 = arith.negf %142 : vector<2x32xf32>
    %144 = math.exp %143 : vector<2x32xf32>
    %cst_51 = arith.constant 1.000000e+00 : f32
    %145 = vector.broadcast %cst_51 : f32 to vector<2x32xf32>
    %146 = arith.addf %145, %144 : vector<2x32xf32>
    %147 = arith.divf %145, %146 : vector<2x32xf32>
    %148 = vector.extract_strided_slice %16 {offsets = [8, 0], sizes = [2, 32], strides = [1, 1]} : vector<16x32xf32> to vector<2x32xf32>
    %149 = arith.addf %148, %139 : vector<2x32xf32>
    %150 = arith.negf %149 : vector<2x32xf32>
    %151 = math.exp %150 : vector<2x32xf32>
    %cst_52 = arith.constant 1.000000e+00 : f32
    %152 = vector.broadcast %cst_52 : f32 to vector<2x32xf32>
    %153 = arith.addf %152, %151 : vector<2x32xf32>
    %154 = arith.divf %152, %153 : vector<2x32xf32>
    %155 = vector.extract_strided_slice %19 {offsets = [8, 0], sizes = [2, 32], strides = [1, 1]} : vector<16x32xf32> to vector<2x32xf32>
    %156 = vector.broadcast %10 : vector<1x32xf32> to vector<2x32xf32>
    %157 = arith.addf %140, %156 : vector<2x32xf32>
    %158 = arith.mulf %147, %157 : vector<2x32xf32>
    %159 = arith.addf %155, %158 : vector<2x32xf32>
    %160 = math.tanh %159 : vector<2x32xf32>
    %cst_53 = arith.constant 1.000000e+00 : f32
    %161 = vector.broadcast %cst_53 : f32 to vector<2x32xf32>
    %162 = arith.subf %161, %154 : vector<2x32xf32>
    %163 = arith.mulf %162, %160 : vector<2x32xf32>
    %164 = arith.mulf %154, %136 : vector<2x32xf32>
    %165 = arith.addf %163, %164 : vector<2x32xf32>
    %166 = arith.truncf %165 : vector<2x32xf32> to vector<2x32xbf16>
    %cst_54 = arith.constant dense<0.000000e+00> : vector<2x32xf32>
    %167 = tpu.matmul %166, %4, %cst_54 {dimension_numbers = #tpu.dot_dimension_numbers<[1], [0], [0], [1], [0, 0, 1, 1], [], []>} : vector<2x32xbf16>, vector<32x32xbf16>, vector<2x32xf32> -> vector<2x32xf32>
    %cst_55 = arith.constant dense<0.000000e+00> : vector<2x32xf32>
    %168 = tpu.matmul %166, %5, %cst_55 {dimension_numbers = #tpu.dot_dimension_numbers<[1], [0], [0], [1], [0, 0, 1, 1], [], []>} : vector<2x32xbf16>, vector<32x32xbf16>, vector<2x32xf32> -> vector<2x32xf32>
    %cst_56 = arith.constant dense<0.000000e+00> : vector<2x32xf32>
    %169 = tpu.matmul %166, %6, %cst_56 {dimension_numbers = #tpu.dot_dimension_numbers<[1], [0], [0], [1], [0, 0, 1, 1], [], []>} : vector<2x32xbf16>, vector<32x32xbf16>, vector<2x32xf32> -> vector<2x32xf32>
    %170 = vector.extract_strided_slice %13 {offsets = [10, 0], sizes = [2, 32], strides = [1, 1]} : vector<16x32xf32> to vector<2x32xf32>
    %171 = arith.addf %170, %167 : vector<2x32xf32>
    %172 = arith.negf %171 : vector<2x32xf32>
    %173 = math.exp %172 : vector<2x32xf32>
    %cst_57 = arith.constant 1.000000e+00 : f32
    %174 = vector.broadcast %cst_57 : f32 to vector<2x32xf32>
    %175 = arith.addf %174, %173 : vector<2x32xf32>
    %176 = arith.divf %174, %175 : vector<2x32xf32>
    %177 = vector.extract_strided_slice %16 {offsets = [10, 0], sizes = [2, 32], strides = [1, 1]} : vector<16x32xf32> to vector<2x32xf32>
    %178 = arith.addf %177, %168 : vector<2x32xf32>
    %179 = arith.negf %178 : vector<2x32xf32>
    %180 = math.exp %179 : vector<2x32xf32>
    %cst_58 = arith.constant 1.000000e+00 : f32
    %181 = vector.broadcast %cst_58 : f32 to vector<2x32xf32>
    %182 = arith.addf %181, %180 : vector<2x32xf32>
    %183 = arith.divf %181, %182 : vector<2x32xf32>
    %184 = vector.extract_strided_slice %19 {offsets = [10, 0], sizes = [2, 32], strides = [1, 1]} : vector<16x32xf32> to vector<2x32xf32>
    %185 = vector.broadcast %10 : vector<1x32xf32> to vector<2x32xf32>
    %186 = arith.addf %169, %185 : vector<2x32xf32>
    %187 = arith.mulf %176, %186 : vector<2x32xf32>
    %188 = arith.addf %184, %187 : vector<2x32xf32>
    %189 = math.tanh %188 : vector<2x32xf32>
    %cst_59 = arith.constant 1.000000e+00 : f32
    %190 = vector.broadcast %cst_59 : f32 to vector<2x32xf32>
    %191 = arith.subf %190, %183 : vector<2x32xf32>
    %192 = arith.mulf %191, %189 : vector<2x32xf32>
    %193 = arith.mulf %183, %165 : vector<2x32xf32>
    %194 = arith.addf %192, %193 : vector<2x32xf32>
    %195 = arith.truncf %194 : vector<2x32xf32> to vector<2x32xbf16>
    %cst_60 = arith.constant dense<0.000000e+00> : vector<2x32xf32>
    %196 = tpu.matmul %195, %4, %cst_60 {dimension_numbers = #tpu.dot_dimension_numbers<[1], [0], [0], [1], [0, 0, 1, 1], [], []>} : vector<2x32xbf16>, vector<32x32xbf16>, vector<2x32xf32> -> vector<2x32xf32>
    %cst_61 = arith.constant dense<0.000000e+00> : vector<2x32xf32>
    %197 = tpu.matmul %195, %5, %cst_61 {dimension_numbers = #tpu.dot_dimension_numbers<[1], [0], [0], [1], [0, 0, 1, 1], [], []>} : vector<2x32xbf16>, vector<32x32xbf16>, vector<2x32xf32> -> vector<2x32xf32>
    %cst_62 = arith.constant dense<0.000000e+00> : vector<2x32xf32>
    %198 = tpu.matmul %195, %6, %cst_62 {dimension_numbers = #tpu.dot_dimension_numbers<[1], [0], [0], [1], [0, 0, 1, 1], [], []>} : vector<2x32xbf16>, vector<32x32xbf16>, vector<2x32xf32> -> vector<2x32xf32>
    %199 = vector.extract_strided_slice %13 {offsets = [12, 0], sizes = [2, 32], strides = [1, 1]} : vector<16x32xf32> to vector<2x32xf32>
    %200 = arith.addf %199, %196 : vector<2x32xf32>
    %201 = arith.negf %200 : vector<2x32xf32>
    %202 = math.exp %201 : vector<2x32xf32>
    %cst_63 = arith.constant 1.000000e+00 : f32
    %203 = vector.broadcast %cst_63 : f32 to vector<2x32xf32>
    %204 = arith.addf %203, %202 : vector<2x32xf32>
    %205 = arith.divf %203, %204 : vector<2x32xf32>
    %206 = vector.extract_strided_slice %16 {offsets = [12, 0], sizes = [2, 32], strides = [1, 1]} : vector<16x32xf32> to vector<2x32xf32>
    %207 = arith.addf %206, %197 : vector<2x32xf32>
    %208 = arith.negf %207 : vector<2x32xf32>
    %209 = math.exp %208 : vector<2x32xf32>
    %cst_64 = arith.constant 1.000000e+00 : f32
    %210 = vector.broadcast %cst_64 : f32 to vector<2x32xf32>
    %211 = arith.addf %210, %209 : vector<2x32xf32>
    %212 = arith.divf %210, %211 : vector<2x32xf32>
    %213 = vector.extract_strided_slice %19 {offsets = [12, 0], sizes = [2, 32], strides = [1, 1]} : vector<16x32xf32> to vector<2x32xf32>
    %214 = vector.broadcast %10 : vector<1x32xf32> to vector<2x32xf32>
    %215 = arith.addf %198, %214 : vector<2x32xf32>
    %216 = arith.mulf %205, %215 : vector<2x32xf32>
    %217 = arith.addf %213, %216 : vector<2x32xf32>
    %218 = math.tanh %217 : vector<2x32xf32>
    %cst_65 = arith.constant 1.000000e+00 : f32
    %219 = vector.broadcast %cst_65 : f32 to vector<2x32xf32>
    %220 = arith.subf %219, %212 : vector<2x32xf32>
    %221 = arith.mulf %220, %218 : vector<2x32xf32>
    %222 = arith.mulf %212, %194 : vector<2x32xf32>
    %223 = arith.addf %221, %222 : vector<2x32xf32>
    %224 = arith.truncf %223 : vector<2x32xf32> to vector<2x32xbf16>
    %cst_66 = arith.constant dense<0.000000e+00> : vector<2x32xf32>
    %225 = tpu.matmul %224, %4, %cst_66 {dimension_numbers = #tpu.dot_dimension_numbers<[1], [0], [0], [1], [0, 0, 1, 1], [], []>} : vector<2x32xbf16>, vector<32x32xbf16>, vector<2x32xf32> -> vector<2x32xf32>
    %cst_67 = arith.constant dense<0.000000e+00> : vector<2x32xf32>
    %226 = tpu.matmul %224, %5, %cst_67 {dimension_numbers = #tpu.dot_dimension_numbers<[1], [0], [0], [1], [0, 0, 1, 1], [], []>} : vector<2x32xbf16>, vector<32x32xbf16>, vector<2x32xf32> -> vector<2x32xf32>
    %cst_68 = arith.constant dense<0.000000e+00> : vector<2x32xf32>
    %227 = tpu.matmul %224, %6, %cst_68 {dimension_numbers = #tpu.dot_dimension_numbers<[1], [0], [0], [1], [0, 0, 1, 1], [], []>} : vector<2x32xbf16>, vector<32x32xbf16>, vector<2x32xf32> -> vector<2x32xf32>
    %228 = vector.extract_strided_slice %13 {offsets = [14, 0], sizes = [2, 32], strides = [1, 1]} : vector<16x32xf32> to vector<2x32xf32>
    %229 = arith.addf %228, %225 : vector<2x32xf32>
    %230 = arith.negf %229 : vector<2x32xf32>
    %231 = math.exp %230 : vector<2x32xf32>
    %cst_69 = arith.constant 1.000000e+00 : f32
    %232 = vector.broadcast %cst_69 : f32 to vector<2x32xf32>
    %233 = arith.addf %232, %231 : vector<2x32xf32>
    %234 = arith.divf %232, %233 : vector<2x32xf32>
    %235 = vector.extract_strided_slice %16 {offsets = [14, 0], sizes = [2, 32], strides = [1, 1]} : vector<16x32xf32> to vector<2x32xf32>
    %236 = arith.addf %235, %226 : vector<2x32xf32>
    %237 = arith.negf %236 : vector<2x32xf32>
    %238 = math.exp %237 : vector<2x32xf32>
    %cst_70 = arith.constant 1.000000e+00 : f32
    %239 = vector.broadcast %cst_70 : f32 to vector<2x32xf32>
    %240 = arith.addf %239, %238 : vector<2x32xf32>
    %241 = arith.divf %239, %240 : vector<2x32xf32>
    %242 = vector.extract_strided_slice %19 {offsets = [14, 0], sizes = [2, 32], strides = [1, 1]} : vector<16x32xf32> to vector<2x32xf32>
    %243 = vector.broadcast %10 : vector<1x32xf32> to vector<2x32xf32>
    %244 = arith.addf %227, %243 : vector<2x32xf32>
    %245 = arith.mulf %234, %244 : vector<2x32xf32>
    %246 = arith.addf %242, %245 : vector<2x32xf32>
    %247 = math.tanh %246 : vector<2x32xf32>
    %cst_71 = arith.constant 1.000000e+00 : f32
    %248 = vector.broadcast %cst_71 : f32 to vector<2x32xf32>
    %249 = arith.subf %248, %241 : vector<2x32xf32>
    %250 = arith.mulf %249, %247 : vector<2x32xf32>
    %251 = arith.mulf %241, %223 : vector<2x32xf32>
    %252 = arith.addf %250, %251 : vector<2x32xf32>
    %253 = tpu.concatenate %49, %78, %107, %136, %165, %194, %223, %252 in 0 : vector<2x32xf32>, vector<2x32xf32>, vector<2x32xf32>, vector<2x32xf32>, vector<2x32xf32>, vector<2x32xf32>, vector<2x32xf32>, vector<2x32xf32> -> vector<16x32xf32>
    %254 = arith.truncf %253 : vector<16x32xf32> to vector<16x32xbf16>
    %c0_72 = arith.constant 0 : index
    %c0_73 = arith.constant 0 : index
    %255 = vector.load %arg11[%c0_72, %c0_73] : memref<32x32xbf16, #tpu.memory_space<vmem>>, vector<32x32xbf16>
    %c0_74 = arith.constant 0 : index
    %c0_75 = arith.constant 0 : index
    %256 = vector.load %arg12[%c0_74, %c0_75] : memref<32x32xbf16, #tpu.memory_space<vmem>>, vector<32x32xbf16>
    %c0_76 = arith.constant 0 : index
    %c0_77 = arith.constant 0 : index
    %257 = vector.load %arg13[%c0_76, %c0_77] : memref<32x32xbf16, #tpu.memory_space<vmem>>, vector<32x32xbf16>
    %c0_78 = arith.constant 0 : index
    %c0_79 = arith.constant 0 : index
    %258 = vector.load %arg14[%c0_78, %c0_79] : memref<32x32xbf16, #tpu.memory_space<vmem>>, vector<32x32xbf16>
    %c0_80 = arith.constant 0 : index
    %c0_81 = arith.constant 0 : index
    %259 = vector.load %arg15[%c0_80, %c0_81] : memref<32x32xbf16, #tpu.memory_space<vmem>>, vector<32x32xbf16>
    %c0_82 = arith.constant 0 : index
    %c0_83 = arith.constant 0 : index
    %260 = vector.load %arg16[%c0_82, %c0_83] : memref<32x32xbf16, #tpu.memory_space<vmem>>, vector<32x32xbf16>
    %c0_84 = arith.constant 0 : index
    %c0_85 = arith.constant 0 : index
    %261 = vector.load %arg17[%c0_84, %c0_85] : memref<1x32xf32, #tpu.memory_space<vmem>>, vector<1x32xf32>
    %c0_86 = arith.constant 0 : index
    %c0_87 = arith.constant 0 : index
    %262 = vector.load %arg18[%c0_86, %c0_87] : memref<1x32xf32, #tpu.memory_space<vmem>>, vector<1x32xf32>
    %c0_88 = arith.constant 0 : index
    %c0_89 = arith.constant 0 : index
    %263 = vector.load %arg19[%c0_88, %c0_89] : memref<1x32xf32, #tpu.memory_space<vmem>>, vector<1x32xf32>
    %c0_90 = arith.constant 0 : index
    %c0_91 = arith.constant 0 : index
    %264 = vector.load %arg20[%c0_90, %c0_91] : memref<1x32xf32, #tpu.memory_space<vmem>>, vector<1x32xf32>
    %cst_92 = arith.constant dense<0.000000e+00> : vector<16x32xf32>
    %265 = tpu.matmul %254, %255, %cst_92 {dimension_numbers = #tpu.dot_dimension_numbers<[1], [0], [0], [1], [0, 0, 1, 1], [], []>} : vector<16x32xbf16>, vector<32x32xbf16>, vector<16x32xf32> -> vector<16x32xf32>
    %266 = vector.broadcast %261 : vector<1x32xf32> to vector<16x32xf32>
    %267 = arith.addf %265, %266 : vector<16x32xf32>
    %cst_93 = arith.constant dense<0.000000e+00> : vector<16x32xf32>
    %268 = tpu.matmul %254, %256, %cst_93 {dimension_numbers = #tpu.dot_dimension_numbers<[1], [0], [0], [1], [0, 0, 1, 1], [], []>} : vector<16x32xbf16>, vector<32x32xbf16>, vector<16x32xf32> -> vector<16x32xf32>
    %269 = vector.broadcast %262 : vector<1x32xf32> to vector<16x32xf32>
    %270 = arith.addf %268, %269 : vector<16x32xf32>
    %cst_94 = arith.constant dense<0.000000e+00> : vector<16x32xf32>
    %271 = tpu.matmul %254, %257, %cst_94 {dimension_numbers = #tpu.dot_dimension_numbers<[1], [0], [0], [1], [0, 0, 1, 1], [], []>} : vector<16x32xbf16>, vector<32x32xbf16>, vector<16x32xf32> -> vector<16x32xf32>
    %272 = vector.broadcast %263 : vector<1x32xf32> to vector<16x32xf32>
    %273 = arith.addf %271, %272 : vector<16x32xf32>
    %cst_95 = arith.constant 0.000000e+00 : f32
    %274 = vector.broadcast %cst_95 : f32 to vector<2x32xf32>
    %275 = arith.truncf %274 : vector<2x32xf32> to vector<2x32xbf16>
    %cst_96 = arith.constant dense<0.000000e+00> : vector<2x32xf32>
    %276 = tpu.matmul %275, %258, %cst_96 {dimension_numbers = #tpu.dot_dimension_numbers<[1], [0], [0], [1], [0, 0, 1, 1], [], []>} : vector<2x32xbf16>, vector<32x32xbf16>, vector<2x32xf32> -> vector<2x32xf32>
    %cst_97 = arith.constant dense<0.000000e+00> : vector<2x32xf32>
    %277 = tpu.matmul %275, %259, %cst_97 {dimension_numbers = #tpu.dot_dimension_numbers<[1], [0], [0], [1], [0, 0, 1, 1], [], []>} : vector<2x32xbf16>, vector<32x32xbf16>, vector<2x32xf32> -> vector<2x32xf32>
    %cst_98 = arith.constant dense<0.000000e+00> : vector<2x32xf32>
    %278 = tpu.matmul %275, %260, %cst_98 {dimension_numbers = #tpu.dot_dimension_numbers<[1], [0], [0], [1], [0, 0, 1, 1], [], []>} : vector<2x32xbf16>, vector<32x32xbf16>, vector<2x32xf32> -> vector<2x32xf32>
    %279 = vector.extract_strided_slice %267 {offsets = [0, 0], sizes = [2, 32], strides = [1, 1]} : vector<16x32xf32> to vector<2x32xf32>
    %280 = arith.addf %279, %276 : vector<2x32xf32>
    %281 = arith.negf %280 : vector<2x32xf32>
    %282 = math.exp %281 : vector<2x32xf32>
    %cst_99 = arith.constant 1.000000e+00 : f32
    %283 = vector.broadcast %cst_99 : f32 to vector<2x32xf32>
    %284 = arith.addf %283, %282 : vector<2x32xf32>
    %285 = arith.divf %283, %284 : vector<2x32xf32>
    %286 = vector.extract_strided_slice %270 {offsets = [0, 0], sizes = [2, 32], strides = [1, 1]} : vector<16x32xf32> to vector<2x32xf32>
    %287 = arith.addf %286, %277 : vector<2x32xf32>
    %288 = arith.negf %287 : vector<2x32xf32>
    %289 = math.exp %288 : vector<2x32xf32>
    %cst_100 = arith.constant 1.000000e+00 : f32
    %290 = vector.broadcast %cst_100 : f32 to vector<2x32xf32>
    %291 = arith.addf %290, %289 : vector<2x32xf32>
    %292 = arith.divf %290, %291 : vector<2x32xf32>
    %293 = vector.extract_strided_slice %273 {offsets = [0, 0], sizes = [2, 32], strides = [1, 1]} : vector<16x32xf32> to vector<2x32xf32>
    %294 = vector.broadcast %264 : vector<1x32xf32> to vector<2x32xf32>
    %295 = arith.addf %278, %294 : vector<2x32xf32>
    %296 = arith.mulf %285, %295 : vector<2x32xf32>
    %297 = arith.addf %293, %296 : vector<2x32xf32>
    %298 = math.tanh %297 : vector<2x32xf32>
    %cst_101 = arith.constant 1.000000e+00 : f32
    %299 = vector.broadcast %cst_101 : f32 to vector<2x32xf32>
    %300 = arith.subf %299, %292 : vector<2x32xf32>
    %301 = arith.mulf %300, %298 : vector<2x32xf32>
    %302 = arith.mulf %292, %274 : vector<2x32xf32>
    %303 = arith.addf %301, %302 : vector<2x32xf32>
    %304 = arith.truncf %303 : vector<2x32xf32> to vector<2x32xbf16>
    %cst_102 = arith.constant dense<0.000000e+00> : vector<2x32xf32>
    %305 = tpu.matmul %304, %258, %cst_102 {dimension_numbers = #tpu.dot_dimension_numbers<[1], [0], [0], [1], [0, 0, 1, 1], [], []>} : vector<2x32xbf16>, vector<32x32xbf16>, vector<2x32xf32> -> vector<2x32xf32>
    %cst_103 = arith.constant dense<0.000000e+00> : vector<2x32xf32>
    %306 = tpu.matmul %304, %259, %cst_103 {dimension_numbers = #tpu.dot_dimension_numbers<[1], [0], [0], [1], [0, 0, 1, 1], [], []>} : vector<2x32xbf16>, vector<32x32xbf16>, vector<2x32xf32> -> vector<2x32xf32>
    %cst_104 = arith.constant dense<0.000000e+00> : vector<2x32xf32>
    %307 = tpu.matmul %304, %260, %cst_104 {dimension_numbers = #tpu.dot_dimension_numbers<[1], [0], [0], [1], [0, 0, 1, 1], [], []>} : vector<2x32xbf16>, vector<32x32xbf16>, vector<2x32xf32> -> vector<2x32xf32>
    %308 = vector.extract_strided_slice %267 {offsets = [2, 0], sizes = [2, 32], strides = [1, 1]} : vector<16x32xf32> to vector<2x32xf32>
    %309 = arith.addf %308, %305 : vector<2x32xf32>
    %310 = arith.negf %309 : vector<2x32xf32>
    %311 = math.exp %310 : vector<2x32xf32>
    %cst_105 = arith.constant 1.000000e+00 : f32
    %312 = vector.broadcast %cst_105 : f32 to vector<2x32xf32>
    %313 = arith.addf %312, %311 : vector<2x32xf32>
    %314 = arith.divf %312, %313 : vector<2x32xf32>
    %315 = vector.extract_strided_slice %270 {offsets = [2, 0], sizes = [2, 32], strides = [1, 1]} : vector<16x32xf32> to vector<2x32xf32>
    %316 = arith.addf %315, %306 : vector<2x32xf32>
    %317 = arith.negf %316 : vector<2x32xf32>
    %318 = math.exp %317 : vector<2x32xf32>
    %cst_106 = arith.constant 1.000000e+00 : f32
    %319 = vector.broadcast %cst_106 : f32 to vector<2x32xf32>
    %320 = arith.addf %319, %318 : vector<2x32xf32>
    %321 = arith.divf %319, %320 : vector<2x32xf32>
    %322 = vector.extract_strided_slice %273 {offsets = [2, 0], sizes = [2, 32], strides = [1, 1]} : vector<16x32xf32> to vector<2x32xf32>
    %323 = vector.broadcast %264 : vector<1x32xf32> to vector<2x32xf32>
    %324 = arith.addf %307, %323 : vector<2x32xf32>
    %325 = arith.mulf %314, %324 : vector<2x32xf32>
    %326 = arith.addf %322, %325 : vector<2x32xf32>
    %327 = math.tanh %326 : vector<2x32xf32>
    %cst_107 = arith.constant 1.000000e+00 : f32
    %328 = vector.broadcast %cst_107 : f32 to vector<2x32xf32>
    %329 = arith.subf %328, %321 : vector<2x32xf32>
    %330 = arith.mulf %329, %327 : vector<2x32xf32>
    %331 = arith.mulf %321, %303 : vector<2x32xf32>
    %332 = arith.addf %330, %331 : vector<2x32xf32>
    %333 = arith.truncf %332 : vector<2x32xf32> to vector<2x32xbf16>
    %cst_108 = arith.constant dense<0.000000e+00> : vector<2x32xf32>
    %334 = tpu.matmul %333, %258, %cst_108 {dimension_numbers = #tpu.dot_dimension_numbers<[1], [0], [0], [1], [0, 0, 1, 1], [], []>} : vector<2x32xbf16>, vector<32x32xbf16>, vector<2x32xf32> -> vector<2x32xf32>
    %cst_109 = arith.constant dense<0.000000e+00> : vector<2x32xf32>
    %335 = tpu.matmul %333, %259, %cst_109 {dimension_numbers = #tpu.dot_dimension_numbers<[1], [0], [0], [1], [0, 0, 1, 1], [], []>} : vector<2x32xbf16>, vector<32x32xbf16>, vector<2x32xf32> -> vector<2x32xf32>
    %cst_110 = arith.constant dense<0.000000e+00> : vector<2x32xf32>
    %336 = tpu.matmul %333, %260, %cst_110 {dimension_numbers = #tpu.dot_dimension_numbers<[1], [0], [0], [1], [0, 0, 1, 1], [], []>} : vector<2x32xbf16>, vector<32x32xbf16>, vector<2x32xf32> -> vector<2x32xf32>
    %337 = vector.extract_strided_slice %267 {offsets = [4, 0], sizes = [2, 32], strides = [1, 1]} : vector<16x32xf32> to vector<2x32xf32>
    %338 = arith.addf %337, %334 : vector<2x32xf32>
    %339 = arith.negf %338 : vector<2x32xf32>
    %340 = math.exp %339 : vector<2x32xf32>
    %cst_111 = arith.constant 1.000000e+00 : f32
    %341 = vector.broadcast %cst_111 : f32 to vector<2x32xf32>
    %342 = arith.addf %341, %340 : vector<2x32xf32>
    %343 = arith.divf %341, %342 : vector<2x32xf32>
    %344 = vector.extract_strided_slice %270 {offsets = [4, 0], sizes = [2, 32], strides = [1, 1]} : vector<16x32xf32> to vector<2x32xf32>
    %345 = arith.addf %344, %335 : vector<2x32xf32>
    %346 = arith.negf %345 : vector<2x32xf32>
    %347 = math.exp %346 : vector<2x32xf32>
    %cst_112 = arith.constant 1.000000e+00 : f32
    %348 = vector.broadcast %cst_112 : f32 to vector<2x32xf32>
    %349 = arith.addf %348, %347 : vector<2x32xf32>
    %350 = arith.divf %348, %349 : vector<2x32xf32>
    %351 = vector.extract_strided_slice %273 {offsets = [4, 0], sizes = [2, 32], strides = [1, 1]} : vector<16x32xf32> to vector<2x32xf32>
    %352 = vector.broadcast %264 : vector<1x32xf32> to vector<2x32xf32>
    %353 = arith.addf %336, %352 : vector<2x32xf32>
    %354 = arith.mulf %343, %353 : vector<2x32xf32>
    %355 = arith.addf %351, %354 : vector<2x32xf32>
    %356 = math.tanh %355 : vector<2x32xf32>
    %cst_113 = arith.constant 1.000000e+00 : f32
    %357 = vector.broadcast %cst_113 : f32 to vector<2x32xf32>
    %358 = arith.subf %357, %350 : vector<2x32xf32>
    %359 = arith.mulf %358, %356 : vector<2x32xf32>
    %360 = arith.mulf %350, %332 : vector<2x32xf32>
    %361 = arith.addf %359, %360 : vector<2x32xf32>
    %362 = arith.truncf %361 : vector<2x32xf32> to vector<2x32xbf16>
    %cst_114 = arith.constant dense<0.000000e+00> : vector<2x32xf32>
    %363 = tpu.matmul %362, %258, %cst_114 {dimension_numbers = #tpu.dot_dimension_numbers<[1], [0], [0], [1], [0, 0, 1, 1], [], []>} : vector<2x32xbf16>, vector<32x32xbf16>, vector<2x32xf32> -> vector<2x32xf32>
    %cst_115 = arith.constant dense<0.000000e+00> : vector<2x32xf32>
    %364 = tpu.matmul %362, %259, %cst_115 {dimension_numbers = #tpu.dot_dimension_numbers<[1], [0], [0], [1], [0, 0, 1, 1], [], []>} : vector<2x32xbf16>, vector<32x32xbf16>, vector<2x32xf32> -> vector<2x32xf32>
    %cst_116 = arith.constant dense<0.000000e+00> : vector<2x32xf32>
    %365 = tpu.matmul %362, %260, %cst_116 {dimension_numbers = #tpu.dot_dimension_numbers<[1], [0], [0], [1], [0, 0, 1, 1], [], []>} : vector<2x32xbf16>, vector<32x32xbf16>, vector<2x32xf32> -> vector<2x32xf32>
    %366 = vector.extract_strided_slice %267 {offsets = [6, 0], sizes = [2, 32], strides = [1, 1]} : vector<16x32xf32> to vector<2x32xf32>
    %367 = arith.addf %366, %363 : vector<2x32xf32>
    %368 = arith.negf %367 : vector<2x32xf32>
    %369 = math.exp %368 : vector<2x32xf32>
    %cst_117 = arith.constant 1.000000e+00 : f32
    %370 = vector.broadcast %cst_117 : f32 to vector<2x32xf32>
    %371 = arith.addf %370, %369 : vector<2x32xf32>
    %372 = arith.divf %370, %371 : vector<2x32xf32>
    %373 = vector.extract_strided_slice %270 {offsets = [6, 0], sizes = [2, 32], strides = [1, 1]} : vector<16x32xf32> to vector<2x32xf32>
    %374 = arith.addf %373, %364 : vector<2x32xf32>
    %375 = arith.negf %374 : vector<2x32xf32>
    %376 = math.exp %375 : vector<2x32xf32>
    %cst_118 = arith.constant 1.000000e+00 : f32
    %377 = vector.broadcast %cst_118 : f32 to vector<2x32xf32>
    %378 = arith.addf %377, %376 : vector<2x32xf32>
    %379 = arith.divf %377, %378 : vector<2x32xf32>
    %380 = vector.extract_strided_slice %273 {offsets = [6, 0], sizes = [2, 32], strides = [1, 1]} : vector<16x32xf32> to vector<2x32xf32>
    %381 = vector.broadcast %264 : vector<1x32xf32> to vector<2x32xf32>
    %382 = arith.addf %365, %381 : vector<2x32xf32>
    %383 = arith.mulf %372, %382 : vector<2x32xf32>
    %384 = arith.addf %380, %383 : vector<2x32xf32>
    %385 = math.tanh %384 : vector<2x32xf32>
    %cst_119 = arith.constant 1.000000e+00 : f32
    %386 = vector.broadcast %cst_119 : f32 to vector<2x32xf32>
    %387 = arith.subf %386, %379 : vector<2x32xf32>
    %388 = arith.mulf %387, %385 : vector<2x32xf32>
    %389 = arith.mulf %379, %361 : vector<2x32xf32>
    %390 = arith.addf %388, %389 : vector<2x32xf32>
    %391 = arith.truncf %390 : vector<2x32xf32> to vector<2x32xbf16>
    %cst_120 = arith.constant dense<0.000000e+00> : vector<2x32xf32>
    %392 = tpu.matmul %391, %258, %cst_120 {dimension_numbers = #tpu.dot_dimension_numbers<[1], [0], [0], [1], [0, 0, 1, 1], [], []>} : vector<2x32xbf16>, vector<32x32xbf16>, vector<2x32xf32> -> vector<2x32xf32>
    %cst_121 = arith.constant dense<0.000000e+00> : vector<2x32xf32>
    %393 = tpu.matmul %391, %259, %cst_121 {dimension_numbers = #tpu.dot_dimension_numbers<[1], [0], [0], [1], [0, 0, 1, 1], [], []>} : vector<2x32xbf16>, vector<32x32xbf16>, vector<2x32xf32> -> vector<2x32xf32>
    %cst_122 = arith.constant dense<0.000000e+00> : vector<2x32xf32>
    %394 = tpu.matmul %391, %260, %cst_122 {dimension_numbers = #tpu.dot_dimension_numbers<[1], [0], [0], [1], [0, 0, 1, 1], [], []>} : vector<2x32xbf16>, vector<32x32xbf16>, vector<2x32xf32> -> vector<2x32xf32>
    %395 = vector.extract_strided_slice %267 {offsets = [8, 0], sizes = [2, 32], strides = [1, 1]} : vector<16x32xf32> to vector<2x32xf32>
    %396 = arith.addf %395, %392 : vector<2x32xf32>
    %397 = arith.negf %396 : vector<2x32xf32>
    %398 = math.exp %397 : vector<2x32xf32>
    %cst_123 = arith.constant 1.000000e+00 : f32
    %399 = vector.broadcast %cst_123 : f32 to vector<2x32xf32>
    %400 = arith.addf %399, %398 : vector<2x32xf32>
    %401 = arith.divf %399, %400 : vector<2x32xf32>
    %402 = vector.extract_strided_slice %270 {offsets = [8, 0], sizes = [2, 32], strides = [1, 1]} : vector<16x32xf32> to vector<2x32xf32>
    %403 = arith.addf %402, %393 : vector<2x32xf32>
    %404 = arith.negf %403 : vector<2x32xf32>
    %405 = math.exp %404 : vector<2x32xf32>
    %cst_124 = arith.constant 1.000000e+00 : f32
    %406 = vector.broadcast %cst_124 : f32 to vector<2x32xf32>
    %407 = arith.addf %406, %405 : vector<2x32xf32>
    %408 = arith.divf %406, %407 : vector<2x32xf32>
    %409 = vector.extract_strided_slice %273 {offsets = [8, 0], sizes = [2, 32], strides = [1, 1]} : vector<16x32xf32> to vector<2x32xf32>
    %410 = vector.broadcast %264 : vector<1x32xf32> to vector<2x32xf32>
    %411 = arith.addf %394, %410 : vector<2x32xf32>
    %412 = arith.mulf %401, %411 : vector<2x32xf32>
    %413 = arith.addf %409, %412 : vector<2x32xf32>
    %414 = math.tanh %413 : vector<2x32xf32>
    %cst_125 = arith.constant 1.000000e+00 : f32
    %415 = vector.broadcast %cst_125 : f32 to vector<2x32xf32>
    %416 = arith.subf %415, %408 : vector<2x32xf32>
    %417 = arith.mulf %416, %414 : vector<2x32xf32>
    %418 = arith.mulf %408, %390 : vector<2x32xf32>
    %419 = arith.addf %417, %418 : vector<2x32xf32>
    %420 = arith.truncf %419 : vector<2x32xf32> to vector<2x32xbf16>
    %cst_126 = arith.constant dense<0.000000e+00> : vector<2x32xf32>
    %421 = tpu.matmul %420, %258, %cst_126 {dimension_numbers = #tpu.dot_dimension_numbers<[1], [0], [0], [1], [0, 0, 1, 1], [], []>} : vector<2x32xbf16>, vector<32x32xbf16>, vector<2x32xf32> -> vector<2x32xf32>
    %cst_127 = arith.constant dense<0.000000e+00> : vector<2x32xf32>
    %422 = tpu.matmul %420, %259, %cst_127 {dimension_numbers = #tpu.dot_dimension_numbers<[1], [0], [0], [1], [0, 0, 1, 1], [], []>} : vector<2x32xbf16>, vector<32x32xbf16>, vector<2x32xf32> -> vector<2x32xf32>
    %cst_128 = arith.constant dense<0.000000e+00> : vector<2x32xf32>
    %423 = tpu.matmul %420, %260, %cst_128 {dimension_numbers = #tpu.dot_dimension_numbers<[1], [0], [0], [1], [0, 0, 1, 1], [], []>} : vector<2x32xbf16>, vector<32x32xbf16>, vector<2x32xf32> -> vector<2x32xf32>
    %424 = vector.extract_strided_slice %267 {offsets = [10, 0], sizes = [2, 32], strides = [1, 1]} : vector<16x32xf32> to vector<2x32xf32>
    %425 = arith.addf %424, %421 : vector<2x32xf32>
    %426 = arith.negf %425 : vector<2x32xf32>
    %427 = math.exp %426 : vector<2x32xf32>
    %cst_129 = arith.constant 1.000000e+00 : f32
    %428 = vector.broadcast %cst_129 : f32 to vector<2x32xf32>
    %429 = arith.addf %428, %427 : vector<2x32xf32>
    %430 = arith.divf %428, %429 : vector<2x32xf32>
    %431 = vector.extract_strided_slice %270 {offsets = [10, 0], sizes = [2, 32], strides = [1, 1]} : vector<16x32xf32> to vector<2x32xf32>
    %432 = arith.addf %431, %422 : vector<2x32xf32>
    %433 = arith.negf %432 : vector<2x32xf32>
    %434 = math.exp %433 : vector<2x32xf32>
    %cst_130 = arith.constant 1.000000e+00 : f32
    %435 = vector.broadcast %cst_130 : f32 to vector<2x32xf32>
    %436 = arith.addf %435, %434 : vector<2x32xf32>
    %437 = arith.divf %435, %436 : vector<2x32xf32>
    %438 = vector.extract_strided_slice %273 {offsets = [10, 0], sizes = [2, 32], strides = [1, 1]} : vector<16x32xf32> to vector<2x32xf32>
    %439 = vector.broadcast %264 : vector<1x32xf32> to vector<2x32xf32>
    %440 = arith.addf %423, %439 : vector<2x32xf32>
    %441 = arith.mulf %430, %440 : vector<2x32xf32>
    %442 = arith.addf %438, %441 : vector<2x32xf32>
    %443 = math.tanh %442 : vector<2x32xf32>
    %cst_131 = arith.constant 1.000000e+00 : f32
    %444 = vector.broadcast %cst_131 : f32 to vector<2x32xf32>
    %445 = arith.subf %444, %437 : vector<2x32xf32>
    %446 = arith.mulf %445, %443 : vector<2x32xf32>
    %447 = arith.mulf %437, %419 : vector<2x32xf32>
    %448 = arith.addf %446, %447 : vector<2x32xf32>
    %449 = arith.truncf %448 : vector<2x32xf32> to vector<2x32xbf16>
    %cst_132 = arith.constant dense<0.000000e+00> : vector<2x32xf32>
    %450 = tpu.matmul %449, %258, %cst_132 {dimension_numbers = #tpu.dot_dimension_numbers<[1], [0], [0], [1], [0, 0, 1, 1], [], []>} : vector<2x32xbf16>, vector<32x32xbf16>, vector<2x32xf32> -> vector<2x32xf32>
    %cst_133 = arith.constant dense<0.000000e+00> : vector<2x32xf32>
    %451 = tpu.matmul %449, %259, %cst_133 {dimension_numbers = #tpu.dot_dimension_numbers<[1], [0], [0], [1], [0, 0, 1, 1], [], []>} : vector<2x32xbf16>, vector<32x32xbf16>, vector<2x32xf32> -> vector<2x32xf32>
    %cst_134 = arith.constant dense<0.000000e+00> : vector<2x32xf32>
    %452 = tpu.matmul %449, %260, %cst_134 {dimension_numbers = #tpu.dot_dimension_numbers<[1], [0], [0], [1], [0, 0, 1, 1], [], []>} : vector<2x32xbf16>, vector<32x32xbf16>, vector<2x32xf32> -> vector<2x32xf32>
    %453 = vector.extract_strided_slice %267 {offsets = [12, 0], sizes = [2, 32], strides = [1, 1]} : vector<16x32xf32> to vector<2x32xf32>
    %454 = arith.addf %453, %450 : vector<2x32xf32>
    %455 = arith.negf %454 : vector<2x32xf32>
    %456 = math.exp %455 : vector<2x32xf32>
    %cst_135 = arith.constant 1.000000e+00 : f32
    %457 = vector.broadcast %cst_135 : f32 to vector<2x32xf32>
    %458 = arith.addf %457, %456 : vector<2x32xf32>
    %459 = arith.divf %457, %458 : vector<2x32xf32>
    %460 = vector.extract_strided_slice %270 {offsets = [12, 0], sizes = [2, 32], strides = [1, 1]} : vector<16x32xf32> to vector<2x32xf32>
    %461 = arith.addf %460, %451 : vector<2x32xf32>
    %462 = arith.negf %461 : vector<2x32xf32>
    %463 = math.exp %462 : vector<2x32xf32>
    %cst_136 = arith.constant 1.000000e+00 : f32
    %464 = vector.broadcast %cst_136 : f32 to vector<2x32xf32>
    %465 = arith.addf %464, %463 : vector<2x32xf32>
    %466 = arith.divf %464, %465 : vector<2x32xf32>
    %467 = vector.extract_strided_slice %273 {offsets = [12, 0], sizes = [2, 32], strides = [1, 1]} : vector<16x32xf32> to vector<2x32xf32>
    %468 = vector.broadcast %264 : vector<1x32xf32> to vector<2x32xf32>
    %469 = arith.addf %452, %468 : vector<2x32xf32>
    %470 = arith.mulf %459, %469 : vector<2x32xf32>
    %471 = arith.addf %467, %470 : vector<2x32xf32>
    %472 = math.tanh %471 : vector<2x32xf32>
    %cst_137 = arith.constant 1.000000e+00 : f32
    %473 = vector.broadcast %cst_137 : f32 to vector<2x32xf32>
    %474 = arith.subf %473, %466 : vector<2x32xf32>
    %475 = arith.mulf %474, %472 : vector<2x32xf32>
    %476 = arith.mulf %466, %448 : vector<2x32xf32>
    %477 = arith.addf %475, %476 : vector<2x32xf32>
    %478 = arith.truncf %477 : vector<2x32xf32> to vector<2x32xbf16>
    %cst_138 = arith.constant dense<0.000000e+00> : vector<2x32xf32>
    %479 = tpu.matmul %478, %258, %cst_138 {dimension_numbers = #tpu.dot_dimension_numbers<[1], [0], [0], [1], [0, 0, 1, 1], [], []>} : vector<2x32xbf16>, vector<32x32xbf16>, vector<2x32xf32> -> vector<2x32xf32>
    %cst_139 = arith.constant dense<0.000000e+00> : vector<2x32xf32>
    %480 = tpu.matmul %478, %259, %cst_139 {dimension_numbers = #tpu.dot_dimension_numbers<[1], [0], [0], [1], [0, 0, 1, 1], [], []>} : vector<2x32xbf16>, vector<32x32xbf16>, vector<2x32xf32> -> vector<2x32xf32>
    %cst_140 = arith.constant dense<0.000000e+00> : vector<2x32xf32>
    %481 = tpu.matmul %478, %260, %cst_140 {dimension_numbers = #tpu.dot_dimension_numbers<[1], [0], [0], [1], [0, 0, 1, 1], [], []>} : vector<2x32xbf16>, vector<32x32xbf16>, vector<2x32xf32> -> vector<2x32xf32>
    %482 = vector.extract_strided_slice %267 {offsets = [14, 0], sizes = [2, 32], strides = [1, 1]} : vector<16x32xf32> to vector<2x32xf32>
    %483 = arith.addf %482, %479 : vector<2x32xf32>
    %484 = arith.negf %483 : vector<2x32xf32>
    %485 = math.exp %484 : vector<2x32xf32>
    %cst_141 = arith.constant 1.000000e+00 : f32
    %486 = vector.broadcast %cst_141 : f32 to vector<2x32xf32>
    %487 = arith.addf %486, %485 : vector<2x32xf32>
    %488 = arith.divf %486, %487 : vector<2x32xf32>
    %489 = vector.extract_strided_slice %270 {offsets = [14, 0], sizes = [2, 32], strides = [1, 1]} : vector<16x32xf32> to vector<2x32xf32>
    %490 = arith.addf %489, %480 : vector<2x32xf32>
    %491 = arith.negf %490 : vector<2x32xf32>
    %492 = math.exp %491 : vector<2x32xf32>
    %cst_142 = arith.constant 1.000000e+00 : f32
    %493 = vector.broadcast %cst_142 : f32 to vector<2x32xf32>
    %494 = arith.addf %493, %492 : vector<2x32xf32>
    %495 = arith.divf %493, %494 : vector<2x32xf32>
    %496 = vector.extract_strided_slice %273 {offsets = [14, 0], sizes = [2, 32], strides = [1, 1]} : vector<16x32xf32> to vector<2x32xf32>
    %497 = vector.broadcast %264 : vector<1x32xf32> to vector<2x32xf32>
    %498 = arith.addf %481, %497 : vector<2x32xf32>
    %499 = arith.mulf %488, %498 : vector<2x32xf32>
    %500 = arith.addf %496, %499 : vector<2x32xf32>
    %501 = math.tanh %500 : vector<2x32xf32>
    %cst_143 = arith.constant 1.000000e+00 : f32
    %502 = vector.broadcast %cst_143 : f32 to vector<2x32xf32>
    %503 = arith.subf %502, %495 : vector<2x32xf32>
    %504 = arith.mulf %503, %501 : vector<2x32xf32>
    %505 = arith.mulf %495, %477 : vector<2x32xf32>
    %506 = arith.addf %504, %505 : vector<2x32xf32>
    %507 = tpu.concatenate %303, %332, %361, %390, %419, %448, %477, %506 in 1 : vector<2x32xf32>, vector<2x32xf32>, vector<2x32xf32>, vector<2x32xf32>, vector<2x32xf32>, vector<2x32xf32>, vector<2x32xf32>, vector<2x32xf32> -> vector<2x256xf32>
    %c0_144 = arith.constant 0 : index
    %c0_145 = arith.constant 0 : index
    %508 = vector.load %arg21[%c0_144, %c0_145] : memref<2x256xf32, #tpu.memory_space<vmem>>, vector<2x256xf32>
    tpu.vector_store %arg21[%c0_144, %c0_145], %507 {strides = array<i32>} : memref<2x256xf32, #tpu.memory_space<vmem>>, vector<2x256xf32>,
    return
  }
}

</mosaic_0001>

<llo_original>
// kernel: tpu_custom_call.1
$region0: #{tpu_custom_call.1}
  #allocation0 [shape = 'u32[]', space=smem, size = 0x4, offset = 0x4, fixed_abs, tag = 'smem constant byte address 0x4 - core index']
  #allocation1 [shape = 'u32[144,128]{1,0:T(1,128)}', space=vmem, size = 0x12000, scoped, tag = 'internal scratch']
  %s0 = inlined_call_operand.hbm [shape: bf16[16,16], index: 0, kind: input, shape index: {}]
  %s1 = inlined_call_operand.hbm [shape: bf16[16,32], index: 1, kind: input, shape index: {}]
  %s2 = inlined_call_operand.hbm [shape: bf16[16,32], index: 2, kind: input, shape index: {}]
  %s3 = inlined_call_operand.hbm [shape: bf16[16,32], index: 3, kind: input, shape index: {}]
  %s4 = inlined_call_operand.hbm [shape: bf16[32,32], index: 4, kind: input, shape index: {}]
  %s5 = inlined_call_operand.hbm [shape: bf16[32,32], index: 5, kind: input, shape index: {}]
  %s6 = inlined_call_operand.hbm [shape: bf16[32,32], index: 6, kind: input, shape index: {}]
  %s7 = inlined_call_operand.vmem [shape: f32[1,32], index: 7, kind: input, shape index: {}]
  %s8 = inlined_call_operand.vmem [shape: f32[1,32], index: 8, kind: input, shape index: {}]
  %s9 = inlined_call_operand.vmem [shape: f32[1,32], index: 9, kind: input, shape index: {}]
  %s10 = inlined_call_operand.vmem [shape: f32[1,32], index: 10, kind: input, shape index: {}]
  %s11 = inlined_call_operand.vmem [shape: bf16[32,32], index: 11, kind: input, shape index: {}]
  %s12 = inlined_call_operand.hbm [shape: bf16[32,32], index: 12, kind: input, shape index: {}]
  %s13 = inlined_call_operand.hbm [shape: bf16[32,32], index: 13, kind: input, shape index: {}]
  %s14 = inlined_call_operand.hbm [shape: bf16[32,32], index: 14, kind: input, shape index: {}]
  %s15 = inlined_call_operand.hbm [shape: bf16[32,32], index: 15, kind: input, shape index: {}]
  %s16 = inlined_call_operand.hbm [shape: bf16[32,32], index: 16, kind: input, shape index: {}]
  %s17 = inlined_call_operand.vmem [shape: f32[1,32], index: 17, kind: input, shape index: {}]
  %s18 = inlined_call_operand.vmem [shape: f32[1,32], index: 18, kind: input, shape index: {}]
  %s19 = inlined_call_operand.vmem [shape: f32[1,32], index: 19, kind: input, shape index: {}]
  %s20 = inlined_call_operand.vmem [shape: f32[1,32], index: 20, kind: input, shape index: {}]
  %s21 = inlined_call_operand.hbm [shape: f32[2,256], index: 21, kind: output, shape index: {}]
  %s22 = sld [smem:[#allocation0]]
  $region142: #{tpu_custom_call.1} parent=0
    _
  %s24 = ssub.s32 1, %s22
  %s25 = scalar_select 0, %s24, %s22
  $region1: #{tpu_custom_call.1} parent=0
    #allocation2 [shape = 'u8[4096]{0}', space=vmem, size = 0x1000, scoped, tag = 'input window, operand 0, single buffered']
    #allocation3 [shape = 's32[1]{0}', space=sflag, size = 0x4, scoped, tag = 'scoped memory for tpu_custom_call.1']
    #allocation4 [shape = 's32[1]{0}', space=sflag, size = 0x4, scoped, tag = 'scoped memory for tpu_custom_call.1']
    #allocation5 [shape = 'u8[4096]{0}', space=vmem, size = 0x1000, scoped, tag = 'input window, operand 1, single buffered']
    #allocation6 [shape = 's32[1]{0}', space=sflag, size = 0x4, scoped, tag = 'scoped memory for tpu_custom_call.1']
    #allocation7 [shape = 'u8[4096]{0}', space=vmem, size = 0x1000, scoped, tag = 'input window, operand 2, single buffered']
    #allocation8 [shape = 'u8[4096]{0}', space=vmem, size = 0x1000, scoped, tag = 'input window, operand 3, single buffered']
    #allocation9 [shape = 's32[1]{0}', space=sflag, size = 0x4, scoped, tag = 'scoped memory for tpu_custom_call.1']
    #allocation10 [shape = 'u8[8192]{0}', space=vmem, size = 0x2000, scoped, tag = 'input window, operand 4, single buffered']
    #allocation11 [shape = 'u8[8192]{0}', space=vmem, size = 0x2000, scoped, tag = 'input window, operand 5, single buffered']
    #allocation12 [shape = 's32[1]{0}', space=sflag, size = 0x4, scoped, tag = 'scoped memory for tpu_custom_call.1']
    #allocation13 [shape = 'u8[8192]{0}', space=vmem, size = 0x2000, scoped, tag = 'input window, operand 6, single buffered']
    #allocation14 [shape = 'u8[8192]{0}', space=vmem, size = 0x2000, scoped, tag = 'input window, operand 12, single buffered']
    #allocation15 [shape = 's32[1]{0}', space=sflag, size = 0x4, scoped, tag = 'scoped memory for tpu_custom_call.1']
    #allocation16 [shape = 'u8[8192]{0}', space=vmem, size = 0x2000, scoped, tag = 'input window, operand 13, single buffered']
    #allocation17 [shape = 'u8[8192]{0}', space=vmem, size = 0x2000, scoped, tag = 'input window, operand 14, single buffered']
    #allocation18 [shape = 's32[1]{0}', space=sflag, size = 0x4, scoped, tag = 'scoped memory for tpu_custom_call.1']
    #allocation19 [shape = 'u8[8192]{0}', space=vmem, size = 0x2000, scoped, tag = 'input window, operand 15, single buffered']
    #allocation20 [shape = 'u8[8192]{0}', space=vmem, size = 0x2000, scoped, tag = 'input window, operand 16, single buffered']
    #allocation21 [shape = 's32[1]{0}', space=sflag, size = 0x4, scoped, tag = 'scoped memory for tpu_custom_call.1']
    #allocation22 [shape = 'u8[2048]{0}', space=vmem, size = 0x800, scoped, tag = 'output window, operand 0, single buffered']
    %26 = vsyncpa [#allocation3], 0
    %27 = vsyncpa [#allocation6], 0
    %28 = vsyncpa [#allocation9], 0
    %29 = vsyncpa [#allocation12], 0
    %30 = vsyncpa [#allocation15], 0
    %31 = vsyncpa [#allocation18], 0
    %32 = vsyncpa [#allocation21], 0
    %33 = vsyncpa [#allocation4], 0
    // Predicated region
    $region2: #{tpu_custom_call.1} parent=1 // pred_check
      _
    $region3: #{tpu_custom_call.1} parent=1 // pred_check_branch
      %35 = sbr.rel (0) target = $region5
    $region4: #{tpu_custom_call.1} parent=1 // pred_region
      %s37 = ssub.s32 128, 128
      %38 = vsyncadd [#allocation3], %s37
      %s39 = sshll.u32 [#allocation2], 4
      %s40 = int_to_ptr.vmem [resolvable:$true] %s39
      %45 = dma.hbm_to_vmem [thread:$0]  %s0, 128, %s40, [#allocation3], 64, 64, 4
    $region5: #{tpu_custom_call.1} parent=1 // pred_fallthru
      _
    // Predicated region
    $region6: #{tpu_custom_call.1} parent=1 // pred_check
      _
    $region7: #{tpu_custom_call.1} parent=1 // pred_check_branch
      %47 = sbr.rel (0) target = $region9
    $region8: #{tpu_custom_call.1} parent=1 // pred_region
      %s49 = ssub.s32 128, 128
      %50 = vsyncadd [#allocation6], %s49
      %s51 = sshll.u32 [#allocation5], 4
      %s52 = int_to_ptr.vmem [resolvable:$true] %s51
      %57 = dma.hbm_to_vmem [thread:$0]  %s1, 128, %s52, [#allocation6], 64, 64, 4
    $region9: #{tpu_custom_call.1} parent=1 // pred_fallthru
      _
    // Predicated region
    $region10: #{tpu_custom_call.1} parent=1 // pred_check
      _
    $region11: #{tpu_custom_call.1} parent=1 // pred_check_branch
      %59 = sbr.rel (0) target = $region13
    $region12: #{tpu_custom_call.1} parent=1 // pred_region
      %s61 = ssub.s32 128, 128
      %62 = vsyncadd [#allocation6], %s61
      %s63 = sshll.u32 [#allocation7], 4
      %s64 = int_to_ptr.vmem [resolvable:$true] %s63
      %69 = dma.hbm_to_vmem [thread:$0]  %s2, 128, %s64, [#allocation6], 64, 64, 4
    $region13: #{tpu_custom_call.1} parent=1 // pred_fallthru
      _
    // Predicated region
    $region14: #{tpu_custom_call.1} parent=1 // pred_check
      _
    $region15: #{tpu_custom_call.1} parent=1 // pred_check_branch
      %71 = sbr.rel (0) target = $region17
    $region16: #{tpu_custom_call.1} parent=1 // pred_region
      %s73 = ssub.s32 128, 128
      %74 = vsyncadd [#allocation9], %s73
      %s75 = sshll.u32 [#allocation8], 4
      %s76 = int_to_ptr.vmem [resolvable:$true] %s75
      %81 = dma.hbm_to_vmem [thread:$0]  %s3, 128, %s76, [#allocation9], 64, 64, 4
    $region17: #{tpu_custom_call.1} parent=1 // pred_fallthru
      _
    // Predicated region
    $region18: #{tpu_custom_call.1} parent=1 // pred_check
      _
    $region19: #{tpu_custom_call.1} parent=1 // pred_check_branch
      %83 = sbr.rel (0) target = $region21
    $region20: #{tpu_custom_call.1} parent=1 // pred_region
      %s85 = ssub.s32 256, 256
      %86 = vsyncadd [#allocation9], %s85
      %s87 = sshll.u32 [#allocation10], 4
      %s88 = int_to_ptr.vmem [resolvable:$true] %s87
      %93 = dma.hbm_to_vmem [thread:$0]  %s4, 256, %s88, [#allocation9], 64, 64, 4
    $region21: #{tpu_custom_call.1} parent=1 // pred_fallthru
      _
    // Predicated region
    $region22: #{tpu_custom_call.1} parent=1 // pred_check
      _
    $region23: #{tpu_custom_call.1} parent=1 // pred_check_branch
      %95 = sbr.rel (0) target = $region25
    $region24: #{tpu_custom_call.1} parent=1 // pred_region
      %s97 = ssub.s32 256, 256
      %98 = vsyncadd [#allocation12], %s97
      %s99 = sshll.u32 [#allocation11], 4
      %s100 = int_to_ptr.vmem [resolvable:$true] %s99
      %105 = dma.hbm_to_vmem [thread:$0]  %s5, 256, %s100, [#allocation12], 64, 64, 4
    $region25: #{tpu_custom_call.1} parent=1 // pred_fallthru
      _
    // Predicated region
    $region26: #{tpu_custom_call.1} parent=1 // pred_check
      _
    $region27: #{tpu_custom_call.1} parent=1 // pred_check_branch
      %107 = sbr.rel (0) target = $region29
    $region28: #{tpu_custom_call.1} parent=1 // pred_region
      %s109 = ssub.s32 256, 256
      %110 = vsyncadd [#allocation12], %s109
      %s111 = sshll.u32 [#allocation13], 4
      %s112 = int_to_ptr.vmem [resolvable:$true] %s111
      %117 = dma.hbm_to_vmem [thread:$0]  %s6, 256, %s112, [#allocation12], 64, 64, 4
    $region29: #{tpu_custom_call.1} parent=1 // pred_fallthru
      _
    // Predicated region
    $region30: #{tpu_custom_call.1} parent=1 // pred_check
      _
    $region31: #{tpu_custom_call.1} parent=1 // pred_check_branch
      %119 = sbr.rel (0) target = $region33
    $region32: #{tpu_custom_call.1} parent=1 // pred_region
      _
    $region33: #{tpu_custom_call.1} parent=1 // pred_fallthru
      _
    // Predicated region
    $region34: #{tpu_custom_call.1} parent=1 // pred_check
      _
    $region35: #{tpu_custom_call.1} parent=1 // pred_check_branch
      %121 = sbr.rel (0) target = $region37
    $region36: #{tpu_custom_call.1} parent=1 // pred_region
      _
    $region37: #{tpu_custom_call.1} parent=1 // pred_fallthru
      _
    // Predicated region
    $region38: #{tpu_custom_call.1} parent=1 // pred_check
      _
    $region39: #{tpu_custom_call.1} parent=1 // pred_check_branch
      %123 = sbr.rel (0) target = $region41
    $region40: #{tpu_custom_call.1} parent=1 // pred_region
      _
    $region41: #{tpu_custom_call.1} parent=1 // pred_fallthru
      _
    // Predicated region
    $region42: #{tpu_custom_call.1} parent=1 // pred_check
      _
    $region43: #{tpu_custom_call.1} parent=1 // pred_check_branch
      %125 = sbr.rel (0) target = $region45
    $region44: #{tpu_custom_call.1} parent=1 // pred_region
      _
    $region45: #{tpu_custom_call.1} parent=1 // pred_fallthru
      _
    // Predicated region
    $region46: #{tpu_custom_call.1} parent=1 // pred_check
      _
    $region47: #{tpu_custom_call.1} parent=1 // pred_check_branch
      %127 = sbr.rel (0) target = $region49
    $region48: #{tpu_custom_call.1} parent=1 // pred_region
      _
    $region49: #{tpu_custom_call.1} parent=1 // pred_fallthru
      _
    // Predicated region
    $region50: #{tpu_custom_call.1} parent=1 // pred_check
      _
    $region51: #{tpu_custom_call.1} parent=1 // pred_check_branch
      %129 = sbr.rel (0) target = $region53
    $region52: #{tpu_custom_call.1} parent=1 // pred_region
      %s131 = ssub.s32 256, 256
      %132 = vsyncadd [#allocation15], %s131
      %s133 = sshll.u32 [#allocation14], 4
      %s134 = int_to_ptr.vmem [resolvable:$true] %s133
      %139 = dma.hbm_to_vmem [thread:$0]  %s12, 256, %s134, [#allocation15], 64, 64, 4
    $region53: #{tpu_custom_call.1} parent=1 // pred_fallthru
      _
    // Predicated region
    $region54: #{tpu_custom_call.1} parent=1 // pred_check
      _
    $region55: #{tpu_custom_call.1} parent=1 // pred_check_branch
      %141 = sbr.rel (0) target = $region57
    $region56: #{tpu_custom_call.1} parent=1 // pred_region
      %s143 = ssub.s32 256, 256
      %144 = vsyncadd [#allocation15], %s143
      %s145 = sshll.u32 [#allocation16], 4
      %s146 = int_to_ptr.vmem [resolvable:$true] %s145
      %151 = dma.hbm_to_vmem [thread:$0]  %s13, 256, %s146, [#allocation15], 64, 64, 4
    $region57: #{tpu_custom_call.1} parent=1 // pred_fallthru
      _
    // Predicated region
    $region58: #{tpu_custom_call.1} parent=1 // pred_check
      _
    $region59: #{tpu_custom_call.1} parent=1 // pred_check_branch
      %153 = sbr.rel (0) target = $region61
    $region60: #{tpu_custom_call.1} parent=1 // pred_region
      %s155 = ssub.s32 256, 256
      %156 = vsyncadd [#allocation18], %s155
      %s157 = sshll.u32 [#allocation17], 4
      %s158 = int_to_ptr.vmem [resolvable:$true] %s157
      %163 = dma.hbm_to_vmem [thread:$0]  %s14, 256, %s158, [#allocation18], 64, 64, 4
    $region61: #{tpu_custom_call.1} parent=1 // pred_fallthru
      _
    // Predicated region
    $region62: #{tpu_custom_call.1} parent=1 // pred_check
      _
    $region63: #{tpu_custom_call.1} parent=1 // pred_check_branch
      %165 = sbr.rel (0) target = $region65
    $region64: #{tpu_custom_call.1} parent=1 // pred_region
      %s167 = ssub.s32 256, 256
      %168 = vsyncadd [#allocation18], %s167
      %s169 = sshll.u32 [#allocation19], 4
      %s170 = int_to_ptr.vmem [resolvable:$true] %s169
      %175 = dma.hbm_to_vmem [thread:$0]  %s15, 256, %s170, [#allocation18], 64, 64, 4
    $region65: #{tpu_custom_call.1} parent=1 // pred_fallthru
      _
    // Predicated region
    $region66: #{tpu_custom_call.1} parent=1 // pred_check
      _
    $region67: #{tpu_custom_call.1} parent=1 // pred_check_branch
      %177 = sbr.rel (0) target = $region69
    $region68: #{tpu_custom_call.1} parent=1 // pred_region
      %s179 = ssub.s32 256, 256
      %180 = vsyncadd [#allocation21], %s179
      %s181 = sshll.u32 [#allocation20], 4
      %s182 = int_to_ptr.vmem [resolvable:$true] %s181
      %187 = dma.hbm_to_vmem [thread:$0]  %s16, 256, %s182, [#allocation21], 64, 64, 4
    $region69: #{tpu_custom_call.1} parent=1 // pred_fallthru
      _
    // Predicated region
    $region70: #{tpu_custom_call.1} parent=1 // pred_check
      _
    $region71: #{tpu_custom_call.1} parent=1 // pred_check_branch
      %189 = sbr.rel (0) target = $region73
    $region72: #{tpu_custom_call.1} parent=1 // pred_region
      _
    $region73: #{tpu_custom_call.1} parent=1 // pred_fallthru
      _
    // Predicated region
    $region74: #{tpu_custom_call.1} parent=1 // pred_check
      _
    $region75: #{tpu_custom_call.1} parent=1 // pred_check_branch
      %191 = sbr.rel (0) target = $region77
    $region76: #{tpu_custom_call.1} parent=1 // pred_region
      _
    $region77: #{tpu_custom_call.1} parent=1 // pred_fallthru
      _
    // Predicated region
    $region78: #{tpu_custom_call.1} parent=1 // pred_check
      _
    $region79: #{tpu_custom_call.1} parent=1 // pred_check_branch
      %193 = sbr.rel (0) target = $region81
    $region80: #{tpu_custom_call.1} parent=1 // pred_region
      _
    $region81: #{tpu_custom_call.1} parent=1 // pred_fallthru
      _
    // Predicated region
    $region82: #{tpu_custom_call.1} parent=1 // pred_check
      _
    $region83: #{tpu_custom_call.1} parent=1 // pred_check_branch
      %195 = sbr.rel (0) target = $region85
    $region84: #{tpu_custom_call.1} parent=1 // pred_region
      _
    $region85: #{tpu_custom_call.1} parent=1 // pred_fallthru
      _
    // Predicated region
    $region86: #{tpu_custom_call.1} parent=1 // pred_check
      _
    $region87: #{tpu_custom_call.1} parent=1 // pred_check_branch
      %197 = sbr.rel (0) target = $region89
    $region88: #{tpu_custom_call.1} parent=1 // pred_region
      %198 = dma.done [#allocation3], 128
    $region89: #{tpu_custom_call.1} parent=1 // pred_fallthru
      _
    // Predicated region
    $region90: #{tpu_custom_call.1} parent=1 // pred_check
      _
    $region91: #{tpu_custom_call.1} parent=1 // pred_check_branch
      %200 = sbr.rel (0) target = $region93
    $region92: #{tpu_custom_call.1} parent=1 // pred_region
      %201 = dma.done [#allocation6], 128
    $region93: #{tpu_custom_call.1} parent=1 // pred_fallthru
      _
    // Predicated region
    $region94: #{tpu_custom_call.1} parent=1 // pred_check
      _
    $region95: #{tpu_custom_call.1} parent=1 // pred_check_branch
      %203 = sbr.rel (0) target = $region97
    $region96: #{tpu_custom_call.1} parent=1 // pred_region
      %204 = dma.done [#allocation6], 128
    $region97: #{tpu_custom_call.1} parent=1 // pred_fallthru
      _
    // Predicated region
    $region98: #{tpu_custom_call.1} parent=1 // pred_check
      _
    $region99: #{tpu_custom_call.1} parent=1 // pred_check_branch
      %206 = sbr.rel (0) target = $region101
    $region100: #{tpu_custom_call.1} parent=1 // pred_region
      %207 = dma.done [#allocation9], 128
    $region101: #{tpu_custom_call.1} parent=1 // pred_fallthru
      _
    // Predicated region
    $region102: #{tpu_custom_call.1} parent=1 // pred_check
      _
    $region103: #{tpu_custom_call.1} parent=1 // pred_check_branch
      %209 = sbr.rel (0) target = $region105
    $region104: #{tpu_custom_call.1} parent=1 // pred_region
      %210 = dma.done [#allocation9], 256
    $region105: #{tpu_custom_call.1} parent=1 // pred_fallthru
      _
    // Predicated region
    $region106: #{tpu_custom_call.1} parent=1 // pred_check
      _
    $region107: #{tpu_custom_call.1} parent=1 // pred_check_branch
      %212 = sbr.rel (0) target = $region109
    $region108: #{tpu_custom_call.1} parent=1 // pred_region
      %213 = dma.done [#allocation12], 256
    $region109: #{tpu_custom_call.1} parent=1 // pred_fallthru
      _
    // Predicated region
    $region110: #{tpu_custom_call.1} parent=1 // pred_check
      _
    $region111: #{tpu_custom_call.1} parent=1 // pred_check_branch
      %215 = sbr.rel (0) target = $region113
    $region112: #{tpu_custom_call.1} parent=1 // pred_region
      %216 = dma.done [#allocation12], 256
    $region113: #{tpu_custom_call.1} parent=1 // pred_fallthru
      _
    // Predicated region
    $region114: #{tpu_custom_call.1} parent=1 // pred_check
      _
    $region115: #{tpu_custom_call.1} parent=1 // pred_check_branch
      %218 = sbr.rel (0) target = $region117
    $region116: #{tpu_custom_call.1} parent=1 // pred_region
      %219 = dma.done [#allocation15], 256
    $region117: #{tpu_custom_call.1} parent=1 // pred_fallthru
      _
    // Predicated region
    $region118: #{tpu_custom_call.1} parent=1 // pred_check
      _
    $region119: #{tpu_custom_call.1} parent=1 // pred_check_branch
      %221 = sbr.rel (0) target = $region121
    $region120: #{tpu_custom_call.1} parent=1 // pred_region
      %222 = dma.done [#allocation15], 256
    $region121: #{tpu_custom_call.1} parent=1 // pred_fallthru
      _
    // Predicated region
    $region122: #{tpu_custom_call.1} parent=1 // pred_check
      _
    $region123: #{tpu_custom_call.1} parent=1 // pred_check_branch
      %224 = sbr.rel (0) target = $region125
    $region124: #{tpu_custom_call.1} parent=1 // pred_region
      %225 = dma.done [#allocation18], 256
    $region125: #{tpu_custom_call.1} parent=1 // pred_fallthru
      _
    // Predicated region
    $region126: #{tpu_custom_call.1} parent=1 // pred_check
      _
    $region127: #{tpu_custom_call.1} parent=1 // pred_check_branch
      %227 = sbr.rel (0) target = $region129
    $region128: #{tpu_custom_call.1} parent=1 // pred_region
      %228 = dma.done [#allocation18], 256
    $region129: #{tpu_custom_call.1} parent=1 // pred_fallthru
      _
    // Predicated region
    $region130: #{tpu_custom_call.1} parent=1 // pred_check
      _
    $region131: #{tpu_custom_call.1} parent=1 // pred_check_branch
      %230 = sbr.rel (0) target = $region133
    $region132: #{tpu_custom_call.1} parent=1 // pred_region
      %231 = dma.done [#allocation21], 256
    $region133: #{tpu_custom_call.1} parent=1 // pred_fallthru
      _
    %v233 = vld [vmem:[#allocation2] sm:$0xf]
    %v234 = vld [vmem:[#allocation2 + $0x4] sm:$0xf]
    %v235 = vld [vmem:[#allocation5] sm:$0xf]
    %v236 = vld [vmem:[#allocation5 + $0x4] sm:$0xf]
    %v237 = vld [vmem:[#allocation7] sm:$0xf]
    %v238 = vld [vmem:[#allocation7 + $0x4] sm:$0xf]
    %v239 = vld [vmem:[#allocation8] sm:$0xf]
    %v240 = vld [vmem:[#allocation8 + $0x4] sm:$0xf]
    %v241 = vld [vmem:[#allocation10] sm:$0xf]
    %v242 = vld [vmem:[#allocation10 + $0x4] sm:$0xf]
    %v243 = vld [vmem:[#allocation10 + $0x8] sm:$0xf]
    %v244 = vld [vmem:[#allocation10 + $0xc] sm:$0xf]
    %v245 = vld [vmem:[#allocation11] sm:$0xf]
    %v246 = vld [vmem:[#allocation11 + $0x4] sm:$0xf]
    %v247 = vld [vmem:[#allocation11 + $0x8] sm:$0xf]
    %v248 = vld [vmem:[#allocation11 + $0xc] sm:$0xf]
    %v249 = vld [vmem:[#allocation13] sm:$0xf]
    %v250 = vld [vmem:[#allocation13 + $0x4] sm:$0xf]
    %v251 = vld [vmem:[#allocation13 + $0x8] sm:$0xf]
    %v252 = vld [vmem:[#allocation13 + $0xc] sm:$0xf]
    %v253 = vld [vmem:[%s7] sm:$0x1]
    %v254 = vld [vmem:[%s8] sm:$0x1]
    %v255 = vld [vmem:[%s9] sm:$0x1]
    %v256 = vld [vmem:[%s10] sm:$0x1]
    %v258 = vlaneseq
    %v259 = vshrl.u32 %v258, 7
    %v260 = vsub.s32 0, %v259
    %v261 = vrot.slane %v253, %v260
    %v265 = vunpack.c.l.b16 %v233
    %v266 = vunpack.c.l.b16 %v234
    %v267 = vpack.c.b16 %v266, %v265
    %v270 = vunpack.c.l.b16 %v235
    %v271 = vunpack.c.l.b16 %v236
    %v272 = vpack.c.b16 %v271, %v270
    %vm274 = vcmask 130048
    %v276 = vsel %vm274, %v267, 0
    %278 = vmatprep.subr.bf16.mxu0 0
    %279 = vmatpush1.bf16.msra.mxu0 0
    %280 = vmatprep.subr.bf16.mxu0 0
    %281 = vmatpush1.bf16.msra.mxu0 0
    %282 = vmatprep.subr.bf16.mxu0 0
    %283 = vmatpush1.bf16.msra.mxu0 0
    %284 = vmatprep.subr.bf16.mxu0 0
    %285 = vmatpush1.bf16.msra.mxu0 0
    %286 = vmatprep.subr.bf16.mxu0 0
    %287 = vmatpush1.bf16.msra.mxu0 0
    %288 = vmatprep.subr.bf16.mxu0 0
    %289 = vmatpush1.bf16.msra.mxu0 0
    %290 = vmatprep.subr.bf16.mxu0 0
    %291 = vmatpush1.bf16.msra.mxu0 0
    %292 = vmatprep.subr.bf16.mxu0 0
    %293 = vmatpush1.bf16.msra.mxu0 %v272
    %294 = vmatprep.subr.bf16.mxu0 0
    %295 = vmatpush2.bf16.msra.mxu0 0
    %296 = vmatprep.subr.bf16.mxu0 0
    %297 = vmatpush2.bf16.msra.mxu0 0
    %298 = vmatprep.subr.bf16.mxu0 0
    %299 = vmatpush2.bf16.msra.mxu0 0
    %300 = vmatprep.subr.bf16.mxu0 0
    %301 = vmatpush2.bf16.msra.mxu0 0
    %302 = vmatprep.subr.bf16.mxu0 0
    %303 = vmatpush2.bf16.msra.mxu0 0
    %304 = vmatprep.subr.bf16.mxu0 0
    %305 = vmatpush2.bf16.msra.mxu0 0
    %306 = vmatprep.subr.bf16.mxu0 0
    %307 = vmatpush2.bf16.msra.mxu0 0
    %308 = vmatprep.subr.bf16.mxu0 0
    %309 = vmatpush2.bf16.msra.mxu0 0
    %310 = vmatprep.mubr.bf16.mxu0 0
    %311 = vmatmul.mubr.bf16.gmra.mxu0 %v276
    %v312 = vpop.f32.mrf.mxu0
    %v313 = vadd.f32 %v261, %v312
    %v314 = vpop.f32.mrf.mxu0
    %v315 = vpop.f32.mrf.mxu0
    %v316 = vadd.f32 %v261, %v315
    %v317 = vpop.f32.mrf.mxu0
    %318 = vdwg.mxu0
    %v320 = vlaneseq
    %v321 = vshrl.u32 %v320, 7
    %v322 = vsub.s32 0, %v321
    %v323 = vrot.slane %v254, %v322
    %v327 = vunpack.c.l.b16 %v237
    %v328 = vunpack.c.l.b16 %v238
    %v329 = vpack.c.b16 %v328, %v327
    %331 = vmatprep.subr.bf16.mxu0 0
    %332 = vmatpush1.bf16.msra.mxu0 0
    %333 = vmatprep.subr.bf16.mxu0 0
    %334 = vmatpush1.bf16.msra.mxu0 0
    %335 = vmatprep.subr.bf16.mxu0 0
    %336 = vmatpush1.bf16.msra.mxu0 0
    %337 = vmatprep.subr.bf16.mxu0 0
    %338 = vmatpush1.bf16.msra.mxu0 0
    %339 = vmatprep.subr.bf16.mxu0 0
    %340 = vmatpush1.bf16.msra.mxu0 0
    %341 = vmatprep.subr.bf16.mxu0 0
    %342 = vmatpush1.bf16.msra.mxu0 0
    %343 = vmatprep.subr.bf16.mxu0 0
    %344 = vmatpush1.bf16.msra.mxu0 0
    %345 = vmatprep.subr.bf16.mxu0 0
    %346 = vmatpush1.bf16.msra.mxu0 %v329
    %347 = vmatprep.subr.bf16.mxu0 0
    %348 = vmatpush2.bf16.msra.mxu0 0
    %349 = vmatprep.subr.bf16.mxu0 0
    %350 = vmatpush2.bf16.msra.mxu0 0
    %351 = vmatprep.subr.bf16.mxu0 0
    %352 = vmatpush2.bf16.msra.mxu0 0
    %353 = vmatprep.subr.bf16.mxu0 0
    %354 = vmatpush2.bf16.msra.mxu0 0
    %355 = vmatprep.subr.bf16.mxu0 0
    %356 = vmatpush2.bf16.msra.mxu0 0
    %357 = vmatprep.subr.bf16.mxu0 0
    %358 = vmatpush2.bf16.msra.mxu0 0
    %359 = vmatprep.subr.bf16.mxu0 0
    %360 = vmatpush2.bf16.msra.mxu0 0
    %361 = vmatprep.subr.bf16.mxu0 0
    %362 = vmatpush2.bf16.msra.mxu0 0
    %363 = vmatprep.mubr.bf16.mxu0 0
    %364 = vmatmul.mubr.bf16.gmra.mxu0 %v276
    %v365 = vpop.f32.mrf.mxu0
    %v366 = vadd.f32 %v323, %v365
    %v367 = vpop.f32.mrf.mxu0
    %v368 = vpop.f32.mrf.mxu0
    %v369 = vadd.f32 %v323, %v368
    %v370 = vpop.f32.mrf.mxu0
    %371 = vdwg.mxu0
    %v373 = vlaneseq
    %v374 = vshrl.u32 %v373, 7
    %v375 = vsub.s32 0, %v374
    %v376 = vrot.slane %v255, %v375
    %v380 = vunpack.c.l.b16 %v239
    %v381 = vunpack.c.l.b16 %v240
    %v382 = vpack.c.b16 %v381, %v380
    %384 = vmatprep.subr.bf16.mxu0 0
    %385 = vmatpush1.bf16.msra.mxu0 0
    %386 = vmatprep.subr.bf16.mxu0 0
    %387 = vmatpush1.bf16.msra.mxu0 0
    %388 = vmatprep.subr.bf16.mxu0 0
    %389 = vmatpush1.bf16.msra.mxu0 0
    %390 = vmatprep.subr.bf16.mxu0 0
    %391 = vmatpush1.bf16.msra.mxu0 0
    %392 = vmatprep.subr.bf16.mxu0 0
    %393 = vmatpush1.bf16.msra.mxu0 0
    %394 = vmatprep.subr.bf16.mxu0 0
    %395 = vmatpush1.bf16.msra.mxu0 0
    %396 = vmatprep.subr.bf16.mxu0 0
    %397 = vmatpush1.bf16.msra.mxu0 0
    %398 = vmatprep.subr.bf16.mxu0 0
    %399 = vmatpush1.bf16.msra.mxu0 %v382
    %400 = vmatprep.subr.bf16.mxu0 0
    %401 = vmatpush2.bf16.msra.mxu0 0
    %402 = vmatprep.subr.bf16.mxu0 0
    %403 = vmatpush2.bf16.msra.mxu0 0
    %404 = vmatprep.subr.bf16.mxu0 0
    %405 = vmatpush2.bf16.msra.mxu0 0
    %406 = vmatprep.subr.bf16.mxu0 0
    %407 = vmatpush2.bf16.msra.mxu0 0
    %408 = vmatprep.subr.bf16.mxu0 0
    %409 = vmatpush2.bf16.msra.mxu0 0
    %410 = vmatprep.subr.bf16.mxu0 0
    %411 = vmatpush2.bf16.msra.mxu0 0
    %412 = vmatprep.subr.bf16.mxu0 0
    %413 = vmatpush2.bf16.msra.mxu0 0
    %414 = vmatprep.subr.bf16.mxu0 0
    %415 = vmatpush2.bf16.msra.mxu0 0
    %416 = vmatprep.mubr.bf16.mxu0 0
    %417 = vmatmul.mubr.bf16.gmra.mxu0 %v276
    %v418 = vpop.f32.mrf.mxu0
    %v419 = vadd.f32 %v376, %v418
    %v420 = vpop.f32.mrf.mxu0
    %v421 = vpop.f32.mrf.mxu0
    %v422 = vadd.f32 %v376, %v421
    %v423 = vpop.f32.mrf.mxu0
    %424 = vdwg.mxu0
    %v429 = vunpack.c.l.b16 %v241
    %v430 = vunpack.c.l.b16 %v242
    %v431 = vunpack.c.l.b16 %v243
    %v432 = vunpack.c.l.b16 %v244
    %v433 = vpack.c.b16 %v430, %v429
    %v434 = vpack.c.b16 %v432, %v431
    %vm437 = vcmask 261120
    %v439 = vsel %vm437, 0, 0
    %441 = vmatprep.subr.bf16.mxu0 0
    %442 = vmatpush1.bf16.msra.mxu0 0
    %443 = vmatprep.subr.bf16.mxu0 0
    %444 = vmatpush1.bf16.msra.mxu0 0
    %445 = vmatprep.subr.bf16.mxu0 0
    %446 = vmatpush1.bf16.msra.mxu0 0
    %447 = vmatprep.subr.bf16.mxu0 0
    %448 = vmatpush1.bf16.msra.mxu0 0
    %449 = vmatprep.subr.bf16.mxu0 0
    %450 = vmatpush1.bf16.msra.mxu0 0
    %451 = vmatprep.subr.bf16.mxu0 0
    %452 = vmatpush1.bf16.msra.mxu0 0
    %453 = vmatprep.subr.bf16.mxu0 0
    %454 = vmatpush1.bf16.msra.mxu0 %v434
    %455 = vmatprep.subr.bf16.mxu0 0
    %456 = vmatpush1.bf16.msra.mxu0 %v433
    %457 = vmatprep.subr.bf16.mxu0 0
    %458 = vmatpush2.bf16.msra.mxu0 0
    %459 = vmatprep.subr.bf16.mxu0 0
    %460 = vmatpush2.bf16.msra.mxu0 0
    %461 = vmatprep.subr.bf16.mxu0 0
    %462 = vmatpush2.bf16.msra.mxu0 0
    %463 = vmatprep.subr.bf16.mxu0 0
    %464 = vmatpush2.bf16.msra.mxu0 0
    %465 = vmatprep.subr.bf16.mxu0 0
    %466 = vmatpush2.bf16.msra.mxu0 0
    %467 = vmatprep.subr.bf16.mxu0 0
    %468 = vmatpush2.bf16.msra.mxu0 0
    %469 = vmatprep.subr.bf16.mxu0 0
    %470 = vmatpush2.bf16.msra.mxu0 0
    %471 = vmatprep.subr.bf16.mxu0 0
    %472 = vmatpush2.bf16.msra.mxu0 0
    %473 = vmatprep.mubr.bf16.mxu0 0
    %474 = vmatmul.mubr.bf16.gmra.mxu0 %v439
    %v475 = vpop.f32.mrf.mxu0
    %v476 = vadd.f32 0.0, %v475
    %v477 = vpop.f32.mrf.mxu0
    %v478 = vpop.f32.mrf.mxu0
    %v479 = vpop.f32.mrf.mxu0
    %480 = vdwg.mxu0
    %v485 = vunpack.c.l.b16 %v245
    %v486 = vunpack.c.l.b16 %v246
    %v487 = vunpack.c.l.b16 %v247
    %v488 = vunpack.c.l.b16 %v248
    %v489 = vpack.c.b16 %v486, %v485
    %v490 = vpack.c.b16 %v488, %v487
    %493 = vmatprep.subr.bf16.mxu0 0
    %494 = vmatpush1.bf16.msra.mxu0 0
    %495 = vmatprep.subr.bf16.mxu0 0
    %496 = vmatpush1.bf16.msra.mxu0 0
    %497 = vmatprep.subr.bf16.mxu0 0
    %498 = vmatpush1.bf16.msra.mxu0 0
    %499 = vmatprep.subr.bf16.mxu0 0
    %500 = vmatpush1.bf16.msra.mxu0 0
    %501 = vmatprep.subr.bf16.mxu0 0
    %502 = vmatpush1.bf16.msra.mxu0 0
    %503 = vmatprep.subr.bf16.mxu0 0
    %504 = vmatpush1.bf16.msra.mxu0 0
    %505 = vmatprep.subr.bf16.mxu0 0
    %506 = vmatpush1.bf16.msra.mxu0 %v490
    %507 = vmatprep.subr.bf16.mxu0 0
    %508 = vmatpush1.bf16.msra.mxu0 %v489
    %509 = vmatprep.subr.bf16.mxu0 0
    %510 = vmatpush2.bf16.msra.mxu0 0
    %511 = vmatprep.subr.bf16.mxu0 0
    %512 = vmatpush2.bf16.msra.mxu0 0
    %513 = vmatprep.subr.bf16.mxu0 0
    %514 = vmatpush2.bf16.msra.mxu0 0
    %515 = vmatprep.subr.bf16.mxu0 0
    %516 = vmatpush2.bf16.msra.mxu0 0
    %517 = vmatprep.subr.bf16.mxu0 0
    %518 = vmatpush2.bf16.msra.mxu0 0
    %519 = vmatprep.subr.bf16.mxu0 0
    %520 = vmatpush2.bf16.msra.mxu0 0
    %521 = vmatprep.subr.bf16.mxu0 0
    %522 = vmatpush2.bf16.msra.mxu0 0
    %523 = vmatprep.subr.bf16.mxu0 0
    %524 = vmatpush2.bf16.msra.mxu0 0
    %525 = vmatprep.mubr.bf16.mxu0 0
    %526 = vmatmul.mubr.bf16.gmra.mxu0 %v439
    %v527 = vpop.f32.mrf.mxu0
    %v528 = vadd.f32 0.0, %v527
    %v529 = vpop.f32.mrf.mxu0
    %v530 = vpop.f32.mrf.mxu0
    %v531 = vpop.f32.mrf.mxu0
    %532 = vdwg.mxu0
    %v533 = vadd.f32 %v313, %v476
    %v534 = vxor.u32 %v533, 2147483648
    %v535 = vmul.f32 %v534, 1.442695
    %v536 = vpow.pop %v535
    %v537 = vadd.f32 %v536, 1.0
    %v538 = vrcp.pop %v537
    %v539 = vmul.f32 1.0, %v538
    %v540 = vadd.f32 %v366, %v528
    %v541 = vxor.u32 %v540, 2147483648
    %v542 = vmul.f32 %v541, 1.442695
    %v543 = vpow.pop %v542
    %v544 = vadd.f32 %v543, 1.0
    %v545 = vrcp.pop %v544
    %v546 = vmul.f32 1.0, %v545
    %v548 = vlaneseq
    %v549 = vshrl.u32 %v548, 7
    %v550 = vsub.s32 0, %v549
    %v551 = vrot.slane %v256, %v550
    %v557 = vunpack.c.l.b16 %v249
    %v558 = vunpack.c.l.b16 %v250
    %v559 = vunpack.c.l.b16 %v251
    %v560 = vunpack.c.l.b16 %v252
    %v561 = vpack.c.b16 %v558, %v557
    %v562 = vpack.c.b16 %v560, %v559
    %565 = vmatprep.subr.bf16.mxu0 0
    %566 = vmatpush1.bf16.msra.mxu0 0
    %567 = vmatprep.subr.bf16.mxu0 0
    %568 = vmatpush1.bf16.msra.mxu0 0
    %569 = vmatprep.subr.bf16.mxu0 0
    %570 = vmatpush1.bf16.msra.mxu0 0
    %571 = vmatprep.subr.bf16.mxu0 0
    %572 = vmatpush1.bf16.msra.mxu0 0
    %573 = vmatprep.subr.bf16.mxu0 0
    %574 = vmatpush1.bf16.msra.mxu0 0
    %575 = vmatprep.subr.bf16.mxu0 0
    %576 = vmatpush1.bf16.msra.mxu0 0
    %577 = vmatprep.subr.bf16.mxu0 0
    %578 = vmatpush1.bf16.msra.mxu0 %v562
    %579 = vmatprep.subr.bf16.mxu0 0
    %580 = vmatpush1.bf16.msra.mxu0 %v561
    %581 = vmatprep.subr.bf16.mxu0 0
    %582 = vmatpush2.bf16.msra.mxu0 0
    %583 = vmatprep.subr.bf16.mxu0 0
    %584 = vmatpush2.bf16.msra.mxu0 0
    %585 = vmatprep.subr.bf16.mxu0 0
    %586 = vmatpush2.bf16.msra.mxu0 0
    %587 = vmatprep.subr.bf16.mxu0 0
    %588 = vmatpush2.bf16.msra.mxu0 0
    %589 = vmatprep.subr.bf16.mxu0 0
    %590 = vmatpush2.bf16.msra.mxu0 0
    %591 = vmatprep.subr.bf16.mxu0 0
    %592 = vmatpush2.bf16.msra.mxu0 0
    %593 = vmatprep.subr.bf16.mxu0 0
    %594 = vmatpush2.bf16.msra.mxu0 0
    %595 = vmatprep.subr.bf16.mxu0 0
    %596 = vmatpush2.bf16.msra.mxu0 0
    %597 = vmatprep.mubr.bf16.mxu0 0
    %598 = vmatmul.mubr.bf16.gmra.mxu0 %v439
    %v599 = vpop.f32.mrf.mxu0
    %v600 = vadd.f32 %v551, %v599
    %v601 = vpop.f32.mrf.mxu0
    %v602 = vpop.f32.mrf.mxu0
    %v603 = vpop.f32.mrf.mxu0
    %604 = vdwg.mxu0
    %v605 = vmul.f32 %v539, %v600
    %v606 = vadd.f32 %v419, %v605
    %v607 = vtanh.pop %v606
    %v608 = vsub.f32 1.0, %v546
    %v609 = vmul.f32 %v608, %v607
    %v610 = vmul.f32 %v546, 0.0
    %v611 = vadd.f32 %v609, %v610
    %v612 = vpack.c.bf16 %v611, %v611
    %v614 = vsel %vm437, %v612, 0
    %616 = vmatprep.subr.bf16.mxu0 0
    %617 = vmatpush1.bf16.msra.mxu0 0
    %618 = vmatprep.subr.bf16.mxu0 0
    %619 = vmatpush1.bf16.msra.mxu0 0
    %620 = vmatprep.subr.bf16.mxu0 0
    %621 = vmatpush1.bf16.msra.mxu0 0
    %622 = vmatprep.subr.bf16.mxu0 0
    %623 = vmatpush1.bf16.msra.mxu0 0
    %624 = vmatprep.subr.bf16.mxu0 0
    %625 = vmatpush1.bf16.msra.mxu0 0
    %626 = vmatprep.subr.bf16.mxu0 0
    %627 = vmatpush1.bf16.msra.mxu0 0
    %628 = vmatprep.subr.bf16.mxu0 0
    %629 = vmatpush1.bf16.msra.mxu0 %v434
    %630 = vmatprep.subr.bf16.mxu0 0
    %631 = vmatpush1.bf16.msra.mxu0 %v433
    %632 = vmatprep.subr.bf16.mxu0 0
    %633 = vmatpush2.bf16.msra.mxu0 0
    %634 = vmatprep.subr.bf16.mxu0 0
    %635 = vmatpush2.bf16.msra.mxu0 0
    %636 = vmatprep.subr.bf16.mxu0 0
    %637 = vmatpush2.bf16.msra.mxu0 0
    %638 = vmatprep.subr.bf16.mxu0 0
    %639 = vmatpush2.bf16.msra.mxu0 0
    %640 = vmatprep.subr.bf16.mxu0 0
    %641 = vmatpush2.bf16.msra.mxu0 0
    %642 = vmatprep.subr.bf16.mxu0 0
    %643 = vmatpush2.bf16.msra.mxu0 0
    %644 = vmatprep.subr.bf16.mxu0 0
    %645 = vmatpush2.bf16.msra.mxu0 0
    %646 = vmatprep.subr.bf16.mxu0 0
    %647 = vmatpush2.bf16.msra.mxu0 0
    %648 = vmatprep.mubr.bf16.mxu0 0
    %649 = vmatmul.mubr.bf16.gmra.mxu0 %v614
    %v650 = vpop.f32.mrf.mxu0
    %v651 = vadd.f32 0.0, %v650
    %v652 = vpop.f32.mrf.mxu0
    %v653 = vpop.f32.mrf.mxu0
    %v654 = vpop.f32.mrf.mxu0
    %655 = vdwg.mxu0
    %656 = vmatprep.subr.bf16.mxu0 0
    %657 = vmatpush1.bf16.msra.mxu0 0
    %658 = vmatprep.subr.bf16.mxu0 0
    %659 = vmatpush1.bf16.msra.mxu0 0
    %660 = vmatprep.subr.bf16.mxu0 0
    %661 = vmatpush1.bf16.msra.mxu0 0
    %662 = vmatprep.subr.bf16.mxu0 0
    %663 = vmatpush1.bf16.msra.mxu0 0
    %664 = vmatprep.subr.bf16.mxu0 0
    %665 = vmatpush1.bf16.msra.mxu0 0
    %666 = vmatprep.subr.bf16.mxu0 0
    %667 = vmatpush1.bf16.msra.mxu0 0
    %668 = vmatprep.subr.bf16.mxu0 0
    %669 = vmatpush1.bf16.msra.mxu0 %v490
    %670 = vmatprep.subr.bf16.mxu0 0
    %671 = vmatpush1.bf16.msra.mxu0 %v489
    %672 = vmatprep.subr.bf16.mxu0 0
    %673 = vmatpush2.bf16.msra.mxu0 0
    %674 = vmatprep.subr.bf16.mxu0 0
    %675 = vmatpush2.bf16.msra.mxu0 0
    %676 = vmatprep.subr.bf16.mxu0 0
    %677 = vmatpush2.bf16.msra.mxu0 0
    %678 = vmatprep.subr.bf16.mxu0 0
    %679 = vmatpush2.bf16.msra.mxu0 0
    %680 = vmatprep.subr.bf16.mxu0 0
    %681 = vmatpush2.bf16.msra.mxu0 0
    %682 = vmatprep.subr.bf16.mxu0 0
    %683 = vmatpush2.bf16.msra.mxu0 0
    %684 = vmatprep.subr.bf16.mxu0 0
    %685 = vmatpush2.bf16.msra.mxu0 0
    %686 = vmatprep.subr.bf16.mxu0 0
    %687 = vmatpush2.bf16.msra.mxu0 0
    %688 = vmatprep.mubr.bf16.mxu0 0
    %689 = vmatmul.mubr.bf16.gmra.mxu0 %v614
    %v690 = vpop.f32.mrf.mxu0
    %v691 = vadd.f32 0.0, %v690
    %v692 = vpop.f32.mrf.mxu0
    %v693 = vpop.f32.mrf.mxu0
    %v694 = vpop.f32.mrf.mxu0
    %695 = vdwg.mxu0
    %v697 = vrot.slane %v651, 6
    %v699 = vadd.f32 %v313, %v697
    %v700 = vxor.u32 %v699, 2147483648
    %v701 = vmul.f32 %v700, 1.442695
    %v702 = vpow.pop %v701
    %v703 = vadd.f32 %v702, 1.0
    %v704 = vrcp.pop %v703
    %v705 = vmul.f32 1.0, %v704
    %v707 = vrot.slane %v691, 6
    %v709 = vadd.f32 %v366, %v707
    %v710 = vxor.u32 %v709, 2147483648
    %v711 = vmul.f32 %v710, 1.442695
    %v712 = vpow.pop %v711
    %v713 = vadd.f32 %v712, 1.0
    %v714 = vrcp.pop %v713
    %v715 = vmul.f32 1.0, %v714
    %716 = vmatprep.subr.bf16.mxu0 0
    %717 = vmatpush1.bf16.msra.mxu0 0
    %718 = vmatprep.subr.bf16.mxu0 0
    %719 = vmatpush1.bf16.msra.mxu0 0
    %720 = vmatprep.subr.bf16.mxu0 0
    %721 = vmatpush1.bf16.msra.mxu0 0
    %722 = vmatprep.subr.bf16.mxu0 0
    %723 = vmatpush1.bf16.msra.mxu0 0
    %724 = vmatprep.subr.bf16.mxu0 0
    %725 = vmatpush1.bf16.msra.mxu0 0
    %726 = vmatprep.subr.bf16.mxu0 0
    %727 = vmatpush1.bf16.msra.mxu0 0
    %728 = vmatprep.subr.bf16.mxu0 0
    %729 = vmatpush1.bf16.msra.mxu0 %v562
    %730 = vmatprep.subr.bf16.mxu0 0
    %731 = vmatpush1.bf16.msra.mxu0 %v561
    %732 = vmatprep.subr.bf16.mxu0 0
    %733 = vmatpush2.bf16.msra.mxu0 0
    %734 = vmatprep.subr.bf16.mxu0 0
    %735 = vmatpush2.bf16.msra.mxu0 0
    %736 = vmatprep.subr.bf16.mxu0 0
    %737 = vmatpush2.bf16.msra.mxu0 0
    %738 = vmatprep.subr.bf16.mxu0 0
    %739 = vmatpush2.bf16.msra.mxu0 0
    %740 = vmatprep.subr.bf16.mxu0 0
    %741 = vmatpush2.bf16.msra.mxu0 0
    %742 = vmatprep.subr.bf16.mxu0 0
    %743 = vmatpush2.bf16.msra.mxu0 0
    %744 = vmatprep.subr.bf16.mxu0 0
    %745 = vmatpush2.bf16.msra.mxu0 0
    %746 = vmatprep.subr.bf16.mxu0 0
    %747 = vmatpush2.bf16.msra.mxu0 0
    %748 = vmatprep.mubr.bf16.mxu0 0
    %749 = vmatmul.mubr.bf16.gmra.mxu0 %v614
    %v750 = vpop.f32.mrf.mxu0
    %v751 = vadd.f32 %v551, %v750
    %v752 = vpop.f32.mrf.mxu0
    %v753 = vpop.f32.mrf.mxu0
    %v754 = vpop.f32.mrf.mxu0
    %755 = vdwg.mxu0
    %v757 = vrot.slane %v751, 6
    %v759 = vmul.f32 %v705, %v757
    %v760 = vadd.f32 %v419, %v759
    %v761 = vtanh.pop %v760
    %v762 = vsub.f32 1.0, %v715
    %v763 = vmul.f32 %v762, %v761
    %v765 = vrot.slane %v611, 6
    %v767 = vmul.f32 %v715, %v765
    %v768 = vadd.f32 %v763, %v767
    %v769 = vpack.c.bf16 %v768, %v768
    %v771 = vrot.slane %v769, 1
    %v773 = vsel %vm437, %v771, 0
    %775 = vmatprep.subr.bf16.mxu0 0
    %776 = vmatpush1.bf16.msra.mxu0 0
    %777 = vmatprep.subr.bf16.mxu0 0
    %778 = vmatpush1.bf16.msra.mxu0 0
    %779 = vmatprep.subr.bf16.mxu0 0
    %780 = vmatpush1.bf16.msra.mxu0 0
    %781 = vmatprep.subr.bf16.mxu0 0
    %782 = vmatpush1.bf16.msra.mxu0 0
    %783 = vmatprep.subr.bf16.mxu0 0
    %784 = vmatpush1.bf16.msra.mxu0 0
    %785 = vmatprep.subr.bf16.mxu0 0
    %786 = vmatpush1.bf16.msra.mxu0 0
    %787 = vmatprep.subr.bf16.mxu0 0
    %788 = vmatpush1.bf16.msra.mxu0 %v434
    %789 = vmatprep.subr.bf16.mxu0 0
    %790 = vmatpush1.bf16.msra.mxu0 %v433
    %791 = vmatprep.subr.bf16.mxu0 0
    %792 = vmatpush2.bf16.msra.mxu0 0
    %793 = vmatprep.subr.bf16.mxu0 0
    %794 = vmatpush2.bf16.msra.mxu0 0
    %795 = vmatprep.subr.bf16.mxu0 0
    %796 = vmatpush2.bf16.msra.mxu0 0
    %797 = vmatprep.subr.bf16.mxu0 0
    %798 = vmatpush2.bf16.msra.mxu0 0
    %799 = vmatprep.subr.bf16.mxu0 0
    %800 = vmatpush2.bf16.msra.mxu0 0
    %801 = vmatprep.subr.bf16.mxu0 0
    %802 = vmatpush2.bf16.msra.mxu0 0
    %803 = vmatprep.subr.bf16.mxu0 0
    %804 = vmatpush2.bf16.msra.mxu0 0
    %805 = vmatprep.subr.bf16.mxu0 0
    %806 = vmatpush2.bf16.msra.mxu0 0
    %807 = vmatprep.mubr.bf16.mxu0 0
    %808 = vmatmul.mubr.bf16.gmra.mxu0 %v773
    %v809 = vpop.f32.mrf.mxu0
    %v810 = vadd.f32 0.0, %v809
    %v811 = vpop.f32.mrf.mxu0
    %v812 = vpop.f32.mrf.mxu0
    %v813 = vpop.f32.mrf.mxu0
    %814 = vdwg.mxu0
    %815 = vmatprep.subr.bf16.mxu0 0
    %816 = vmatpush1.bf16.msra.mxu0 0
    %817 = vmatprep.subr.bf16.mxu0 0
    %818 = vmatpush1.bf16.msra.mxu0 0
    %819 = vmatprep.subr.bf16.mxu0 0
    %820 = vmatpush1.bf16.msra.mxu0 0
    %821 = vmatprep.subr.bf16.mxu0 0
    %822 = vmatpush1.bf16.msra.mxu0 0
    %823 = vmatprep.subr.bf16.mxu0 0
    %824 = vmatpush1.bf16.msra.mxu0 0
    %825 = vmatprep.subr.bf16.mxu0 0
    %826 = vmatpush1.bf16.msra.mxu0 0
    %827 = vmatprep.subr.bf16.mxu0 0
    %828 = vmatpush1.bf16.msra.mxu0 %v490
    %829 = vmatprep.subr.bf16.mxu0 0
    %830 = vmatpush1.bf16.msra.mxu0 %v489
    %831 = vmatprep.subr.bf16.mxu0 0
    %832 = vmatpush2.bf16.msra.mxu0 0
    %833 = vmatprep.subr.bf16.mxu0 0
    %834 = vmatpush2.bf16.msra.mxu0 0
    %835 = vmatprep.subr.bf16.mxu0 0
    %836 = vmatpush2.bf16.msra.mxu0 0
    %837 = vmatprep.subr.bf16.mxu0 0
    %838 = vmatpush2.bf16.msra.mxu0 0
    %839 = vmatprep.subr.bf16.mxu0 0
    %840 = vmatpush2.bf16.msra.mxu0 0
    %841 = vmatprep.subr.bf16.mxu0 0
    %842 = vmatpush2.bf16.msra.mxu0 0
    %843 = vmatprep.subr.bf16.mxu0 0
    %844 = vmatpush2.bf16.msra.mxu0 0
    %845 = vmatprep.subr.bf16.mxu0 0
    %846 = vmatpush2.bf16.msra.mxu0 0
    %847 = vmatprep.mubr.bf16.mxu0 0
    %848 = vmatmul.mubr.bf16.gmra.mxu0 %v773
    %v849 = vpop.f32.mrf.mxu0
    %v850 = vadd.f32 0.0, %v849
    %v851 = vpop.f32.mrf.mxu0
    %v852 = vpop.f32.mrf.mxu0
    %v853 = vpop.f32.mrf.mxu0
    %854 = vdwg.mxu0
    %v856 = vrot.slane %v810, 4
    %v858 = vadd.f32 %v313, %v856
    %v859 = vxor.u32 %v858, 2147483648
    %v860 = vmul.f32 %v859, 1.442695
    %v861 = vpow.pop %v860
    %v862 = vadd.f32 %v861, 1.0
    %v863 = vrcp.pop %v862
    %v864 = vmul.f32 1.0, %v863
    %v866 = vrot.slane %v850, 4
    %v868 = vadd.f32 %v366, %v866
    %v869 = vxor.u32 %v868, 2147483648
    %v870 = vmul.f32 %v869, 1.442695
    %v871 = vpow.pop %v870
    %v872 = vadd.f32 %v871, 1.0
    %v873 = vrcp.pop %v872
    %v874 = vmul.f32 1.0, %v873
    %875 = vmatprep.subr.bf16.mxu0 0
    %876 = vmatpush1.bf16.msra.mxu0 0
    %877 = vmatprep.subr.bf16.mxu0 0
    %878 = vmatpush1.bf16.msra.mxu0 0
    %879 = vmatprep.subr.bf16.mxu0 0
    %880 = vmatpush1.bf16.msra.mxu0 0
    %881 = vmatprep.subr.bf16.mxu0 0
    %882 = vmatpush1.bf16.msra.mxu0 0
    %883 = vmatprep.subr.bf16.mxu0 0
    %884 = vmatpush1.bf16.msra.mxu0 0
    %885 = vmatprep.subr.bf16.mxu0 0
    %886 = vmatpush1.bf16.msra.mxu0 0
    %887 = vmatprep.subr.bf16.mxu0 0
    %888 = vmatpush1.bf16.msra.mxu0 %v562
    %889 = vmatprep.subr.bf16.mxu0 0
    %890 = vmatpush1.bf16.msra.mxu0 %v561
    %891 = vmatprep.subr.bf16.mxu0 0
    %892 = vmatpush2.bf16.msra.mxu0 0
    %893 = vmatprep.subr.bf16.mxu0 0
    %894 = vmatpush2.bf16.msra.mxu0 0
    %895 = vmatprep.subr.bf16.mxu0 0
    %896 = vmatpush2.bf16.msra.mxu0 0
    %897 = vmatprep.subr.bf16.mxu0 0
    %898 = vmatpush2.bf16.msra.mxu0 0
    %899 = vmatprep.subr.bf16.mxu0 0
    %900 = vmatpush2.bf16.msra.mxu0 0
    %901 = vmatprep.subr.bf16.mxu0 0
    %902 = vmatpush2.bf16.msra.mxu0 0
    %903 = vmatprep.subr.bf16.mxu0 0
    %904 = vmatpush2.bf16.msra.mxu0 0
    %905 = vmatprep.subr.bf16.mxu0 0
    %906 = vmatpush2.bf16.msra.mxu0 0
    %907 = vmatprep.mubr.bf16.mxu0 0
    %908 = vmatmul.mubr.bf16.gmra.mxu0 %v773
    %v909 = vpop.f32.mrf.mxu0
    %v910 = vadd.f32 %v551, %v909
    %v911 = vpop.f32.mrf.mxu0
    %v912 = vpop.f32.mrf.mxu0
    %v913 = vpop.f32.mrf.mxu0
    %914 = vdwg.mxu0
    %v916 = vrot.slane %v910, 4
    %v918 = vmul.f32 %v864, %v916
    %v919 = vadd.f32 %v419, %v918
    %v920 = vtanh.pop %v919
    %v921 = vsub.f32 1.0, %v874
    %v922 = vmul.f32 %v921, %v920
    %v924 = vrot.slane %v768, 6
    %v926 = vmul.f32 %v874, %v924
    %v927 = vadd.f32 %v922, %v926
    %v928 = vpack.c.bf16 %v927, %v927
    %v930 = vrot.slane %v928, 2
    %v932 = vsel %vm437, %v930, 0
    %934 = vmatprep.subr.bf16.mxu0 0
    %935 = vmatpush1.bf16.msra.mxu0 0
    %936 = vmatprep.subr.bf16.mxu0 0
    %937 = vmatpush1.bf16.msra.mxu0 0
    %938 = vmatprep.subr.bf16.mxu0 0
    %939 = vmatpush1.bf16.msra.mxu0 0
    %940 = vmatprep.subr.bf16.mxu0 0
    %941 = vmatpush1.bf16.msra.mxu0 0
    %942 = vmatprep.subr.bf16.mxu0 0
    %943 = vmatpush1.bf16.msra.mxu0 0
    %944 = vmatprep.subr.bf16.mxu0 0
    %945 = vmatpush1.bf16.msra.mxu0 0
    %946 = vmatprep.subr.bf16.mxu0 0
    %947 = vmatpush1.bf16.msra.mxu0 %v434
    %948 = vmatprep.subr.bf16.mxu0 0
    %949 = vmatpush1.bf16.msra.mxu0 %v433
    %950 = vmatprep.subr.bf16.mxu0 0
    %951 = vmatpush2.bf16.msra.mxu0 0
    %952 = vmatprep.subr.bf16.mxu0 0
    %953 = vmatpush2.bf16.msra.mxu0 0
    %954 = vmatprep.subr.bf16.mxu0 0
    %955 = vmatpush2.bf16.msra.mxu0 0
    %956 = vmatprep.subr.bf16.mxu0 0
    %957 = vmatpush2.bf16.msra.mxu0 0
    %958 = vmatprep.subr.bf16.mxu0 0
    %959 = vmatpush2.bf16.msra.mxu0 0
    %960 = vmatprep.subr.bf16.mxu0 0
    %961 = vmatpush2.bf16.msra.mxu0 0
    %962 = vmatprep.subr.bf16.mxu0 0
    %963 = vmatpush2.bf16.msra.mxu0 0
    %964 = vmatprep.subr.bf16.mxu0 0
    %965 = vmatpush2.bf16.msra.mxu0 0
    %966 = vmatprep.mubr.bf16.mxu0 0
    %967 = vmatmul.mubr.bf16.gmra.mxu0 %v932
    %v968 = vpop.f32.mrf.mxu0
    %v969 = vadd.f32 0.0, %v968
    %v970 = vpop.f32.mrf.mxu0
    %v971 = vpop.f32.mrf.mxu0
    %v972 = vpop.f32.mrf.mxu0
    %973 = vdwg.mxu0
    %974 = vmatprep.subr.bf16.mxu0 0
    %975 = vmatpush1.bf16.msra.mxu0 0
    %976 = vmatprep.subr.bf16.mxu0 0
    %977 = vmatpush1.bf16.msra.mxu0 0
    %978 = vmatprep.subr.bf16.mxu0 0
    %979 = vmatpush1.bf16.msra.mxu0 0
    %980 = vmatprep.subr.bf16.mxu0 0
    %981 = vmatpush1.bf16.msra.mxu0 0
    %982 = vmatprep.subr.bf16.mxu0 0
    %983 = vmatpush1.bf16.msra.mxu0 0
    %984 = vmatprep.subr.bf16.mxu0 0
    %985 = vmatpush1.bf16.msra.mxu0 0
    %986 = vmatprep.subr.bf16.mxu0 0
    %987 = vmatpush1.bf16.msra.mxu0 %v490
    %988 = vmatprep.subr.bf16.mxu0 0
    %989 = vmatpush1.bf16.msra.mxu0 %v489
    %990 = vmatprep.subr.bf16.mxu0 0
    %991 = vmatpush2.bf16.msra.mxu0 0
    %992 = vmatprep.subr.bf16.mxu0 0
    %993 = vmatpush2.bf16.msra.mxu0 0
    %994 = vmatprep.subr.bf16.mxu0 0
    %995 = vmatpush2.bf16.msra.mxu0 0
    %996 = vmatprep.subr.bf16.mxu0 0
    %997 = vmatpush2.bf16.msra.mxu0 0
    %998 = vmatprep.subr.bf16.mxu0 0
    %999 = vmatpush2.bf16.msra.mxu0 0
    %1000 = vmatprep.subr.bf16.mxu0 0
    %1001 = vmatpush2.bf16.msra.mxu0 0
    %1002 = vmatprep.subr.bf16.mxu0 0
    %1003 = vmatpush2.bf16.msra.mxu0 0
    %1004 = vmatprep.subr.bf16.mxu0 0
    %1005 = vmatpush2.bf16.msra.mxu0 0
    %1006 = vmatprep.mubr.bf16.mxu0 0
    %1007 = vmatmul.mubr.bf16.gmra.mxu0 %v932
    %v1008 = vpop.f32.mrf.mxu0
    %v1009 = vadd.f32 0.0, %v1008
    %v1010 = vpop.f32.mrf.mxu0
    %v1011 = vpop.f32.mrf.mxu0
    %v1012 = vpop.f32.mrf.mxu0
    %1013 = vdwg.mxu0
    %v1015 = vrot.slane %v969, 2
    %v1017 = vadd.f32 %v313, %v1015
    %v1018 = vxor.u32 %v1017, 2147483648
    %v1019 = vmul.f32 %v1018, 1.442695
    %v1020 = vpow.pop %v1019
    %v1021 = vadd.f32 %v1020, 1.0
    %v1022 = vrcp.pop %v1021
    %v1023 = vmul.f32 1.0, %v1022
    %v1025 = vrot.slane %v1009, 2
    %v1027 = vadd.f32 %v366, %v1025
    %v1028 = vxor.u32 %v1027, 2147483648
    %v1029 = vmul.f32 %v1028, 1.442695
    %v1030 = vpow.pop %v1029
    %v1031 = vadd.f32 %v1030, 1.0
    %v1032 = vrcp.pop %v1031
    %v1033 = vmul.f32 1.0, %v1032
    %1034 = vmatprep.subr.bf16.mxu0 0
    %1035 = vmatpush1.bf16.msra.mxu0 0
    %1036 = vmatprep.subr.bf16.mxu0 0
    %1037 = vmatpush1.bf16.msra.mxu0 0
    %1038 = vmatprep.subr.bf16.mxu0 0
    %1039 = vmatpush1.bf16.msra.mxu0 0
    %1040 = vmatprep.subr.bf16.mxu0 0
    %1041 = vmatpush1.bf16.msra.mxu0 0
    %1042 = vmatprep.subr.bf16.mxu0 0
    %1043 = vmatpush1.bf16.msra.mxu0 0
    %1044 = vmatprep.subr.bf16.mxu0 0
    %1045 = vmatpush1.bf16.msra.mxu0 0
    %1046 = vmatprep.subr.bf16.mxu0 0
    %1047 = vmatpush1.bf16.msra.mxu0 %v562
    %1048 = vmatprep.subr.bf16.mxu0 0
    %1049 = vmatpush1.bf16.msra.mxu0 %v561
    %1050 = vmatprep.subr.bf16.mxu0 0
    %1051 = vmatpush2.bf16.msra.mxu0 0
    %1052 = vmatprep.subr.bf16.mxu0 0
    %1053 = vmatpush2.bf16.msra.mxu0 0
    %1054 = vmatprep.subr.bf16.mxu0 0
    %1055 = vmatpush2.bf16.msra.mxu0 0
    %1056 = vmatprep.subr.bf16.mxu0 0
    %1057 = vmatpush2.bf16.msra.mxu0 0
    %1058 = vmatprep.subr.bf16.mxu0 0
    %1059 = vmatpush2.bf16.msra.mxu0 0
    %1060 = vmatprep.subr.bf16.mxu0 0
    %1061 = vmatpush2.bf16.msra.mxu0 0
    %1062 = vmatprep.subr.bf16.mxu0 0
    %1063 = vmatpush2.bf16.msra.mxu0 0
    %1064 = vmatprep.subr.bf16.mxu0 0
    %1065 = vmatpush2.bf16.msra.mxu0 0
    %1066 = vmatprep.mubr.bf16.mxu0 0
    %1067 = vmatmul.mubr.bf16.gmra.mxu0 %v932
    %v1068 = vpop.f32.mrf.mxu0
    %v1069 = vadd.f32 %v551, %v1068
    %v1070 = vpop.f32.mrf.mxu0
    %v1071 = vpop.f32.mrf.mxu0
    %v1072 = vpop.f32.mrf.mxu0
    %1073 = vdwg.mxu0
    %v1075 = vrot.slane %v1069, 2
    %v1077 = vmul.f32 %v1023, %v1075
    %v1078 = vadd.f32 %v419, %v1077
    %v1079 = vtanh.pop %v1078
    %v1080 = vsub.f32 1.0, %v1033
    %v1081 = vmul.f32 %v1080, %v1079
    %v1083 = vrot.slane %v927, 6
    %v1085 = vmul.f32 %v1033, %v1083
    %v1086 = vadd.f32 %v1081, %v1085
    %v1087 = vpack.c.bf16 %v1086, %v1086
    %v1089 = vrot.slane %v1087, 3
    %v1091 = vsel %vm437, %v1089, 0
    %1093 = vmatprep.subr.bf16.mxu0 0
    %1094 = vmatpush1.bf16.msra.mxu0 0
    %1095 = vmatprep.subr.bf16.mxu0 0
    %1096 = vmatpush1.bf16.msra.mxu0 0
    %1097 = vmatprep.subr.bf16.mxu0 0
    %1098 = vmatpush1.bf16.msra.mxu0 0
    %1099 = vmatprep.subr.bf16.mxu0 0
    %1100 = vmatpush1.bf16.msra.mxu0 0
    %1101 = vmatprep.subr.bf16.mxu0 0
    %1102 = vmatpush1.bf16.msra.mxu0 0
    %1103 = vmatprep.subr.bf16.mxu0 0
    %1104 = vmatpush1.bf16.msra.mxu0 0
    %1105 = vmatprep.subr.bf16.mxu0 0
    %1106 = vmatpush1.bf16.msra.mxu0 %v434
    %1107 = vmatprep.subr.bf16.mxu0 0
    %1108 = vmatpush1.bf16.msra.mxu0 %v433
    %1109 = vmatprep.subr.bf16.mxu0 0
    %1110 = vmatpush2.bf16.msra.mxu0 0
    %1111 = vmatprep.subr.bf16.mxu0 0
    %1112 = vmatpush2.bf16.msra.mxu0 0
    %1113 = vmatprep.subr.bf16.mxu0 0
    %1114 = vmatpush2.bf16.msra.mxu0 0
    %1115 = vmatprep.subr.bf16.mxu0 0
    %1116 = vmatpush2.bf16.msra.mxu0 0
    %1117 = vmatprep.subr.bf16.mxu0 0
    %1118 = vmatpush2.bf16.msra.mxu0 0
    %1119 = vmatprep.subr.bf16.mxu0 0
    %1120 = vmatpush2.bf16.msra.mxu0 0
    %1121 = vmatprep.subr.bf16.mxu0 0
    %1122 = vmatpush2.bf16.msra.mxu0 0
    %1123 = vmatprep.subr.bf16.mxu0 0
    %1124 = vmatpush2.bf16.msra.mxu0 0
    %1125 = vmatprep.mubr.bf16.mxu0 0
    %1126 = vmatmul.mubr.bf16.gmra.mxu0 %v1091
    %v1127 = vpop.f32.mrf.mxu0
    %v1128 = vadd.f32 0.0, %v1127
    %v1129 = vpop.f32.mrf.mxu0
    %v1130 = vpop.f32.mrf.mxu0
    %v1131 = vpop.f32.mrf.mxu0
    %1132 = vdwg.mxu0
    %1133 = vmatprep.subr.bf16.mxu0 0
    %1134 = vmatpush1.bf16.msra.mxu0 0
    %1135 = vmatprep.subr.bf16.mxu0 0
    %1136 = vmatpush1.bf16.msra.mxu0 0
    %1137 = vmatprep.subr.bf16.mxu0 0
    %1138 = vmatpush1.bf16.msra.mxu0 0
    %1139 = vmatprep.subr.bf16.mxu0 0
    %1140 = vmatpush1.bf16.msra.mxu0 0
    %1141 = vmatprep.subr.bf16.mxu0 0
    %1142 = vmatpush1.bf16.msra.mxu0 0
    %1143 = vmatprep.subr.bf16.mxu0 0
    %1144 = vmatpush1.bf16.msra.mxu0 0
    %1145 = vmatprep.subr.bf16.mxu0 0
    %1146 = vmatpush1.bf16.msra.mxu0 %v490
    %1147 = vmatprep.subr.bf16.mxu0 0
    %1148 = vmatpush1.bf16.msra.mxu0 %v489
    %1149 = vmatprep.subr.bf16.mxu0 0
    %1150 = vmatpush2.bf16.msra.mxu0 0
    %1151 = vmatprep.subr.bf16.mxu0 0
    %1152 = vmatpush2.bf16.msra.mxu0 0
    %1153 = vmatprep.subr.bf16.mxu0 0
    %1154 = vmatpush2.bf16.msra.mxu0 0
    %1155 = vmatprep.subr.bf16.mxu0 0
    %1156 = vmatpush2.bf16.msra.mxu0 0
    %1157 = vmatprep.subr.bf16.mxu0 0
    %1158 = vmatpush2.bf16.msra.mxu0 0
    %1159 = vmatprep.subr.bf16.mxu0 0
    %1160 = vmatpush2.bf16.msra.mxu0 0
    %1161 = vmatprep.subr.bf16.mxu0 0
    %1162 = vmatpush2.bf16.msra.mxu0 0
    %1163 = vmatprep.subr.bf16.mxu0 0
    %1164 = vmatpush2.bf16.msra.mxu0 0
    %1165 = vmatprep.mubr.bf16.mxu0 0
    %1166 = vmatmul.mubr.bf16.gmra.mxu0 %v1091
    %v1167 = vpop.f32.mrf.mxu0
    %v1168 = vadd.f32 0.0, %v1167
    %v1169 = vpop.f32.mrf.mxu0
    %v1170 = vpop.f32.mrf.mxu0
    %v1171 = vpop.f32.mrf.mxu0
    %1172 = vdwg.mxu0
    %v1173 = vadd.f32 %v316, %v1128
    %v1174 = vxor.u32 %v1173, 2147483648
    %v1175 = vmul.f32 %v1174, 1.442695
    %v1176 = vpow.pop %v1175
    %v1177 = vadd.f32 %v1176, 1.0
    %v1178 = vrcp.pop %v1177
    %v1179 = vmul.f32 1.0, %v1178
    %v1180 = vadd.f32 %v369, %v1168
    %v1181 = vxor.u32 %v1180, 2147483648
    %v1182 = vmul.f32 %v1181, 1.442695
    %v1183 = vpow.pop %v1182
    %v1184 = vadd.f32 %v1183, 1.0
    %v1185 = vrcp.pop %v1184
    %v1186 = vmul.f32 1.0, %v1185
    %1187 = vmatprep.subr.bf16.mxu0 0
    %1188 = vmatpush1.bf16.msra.mxu0 0
    %1189 = vmatprep.subr.bf16.mxu0 0
    %1190 = vmatpush1.bf16.msra.mxu0 0
    %1191 = vmatprep.subr.bf16.mxu0 0
    %1192 = vmatpush1.bf16.msra.mxu0 0
    %1193 = vmatprep.subr.bf16.mxu0 0
    %1194 = vmatpush1.bf16.msra.mxu0 0
    %1195 = vmatprep.subr.bf16.mxu0 0
    %1196 = vmatpush1.bf16.msra.mxu0 0
    %1197 = vmatprep.subr.bf16.mxu0 0
    %1198 = vmatpush1.bf16.msra.mxu0 0
    %1199 = vmatprep.subr.bf16.mxu0 0
    %1200 = vmatpush1.bf16.msra.mxu0 %v562
    %1201 = vmatprep.subr.bf16.mxu0 0
    %1202 = vmatpush1.bf16.msra.mxu0 %v561
    %1203 = vmatprep.subr.bf16.mxu0 0
    %1204 = vmatpush2.bf16.msra.mxu0 0
    %1205 = vmatprep.subr.bf16.mxu0 0
    %1206 = vmatpush2.bf16.msra.mxu0 0
    %1207 = vmatprep.subr.bf16.mxu0 0
    %1208 = vmatpush2.bf16.msra.mxu0 0
    %1209 = vmatprep.subr.bf16.mxu0 0
    %1210 = vmatpush2.bf16.msra.mxu0 0
    %1211 = vmatprep.subr.bf16.mxu0 0
    %1212 = vmatpush2.bf16.msra.mxu0 0
    %1213 = vmatprep.subr.bf16.mxu0 0
    %1214 = vmatpush2.bf16.msra.mxu0 0
    %1215 = vmatprep.subr.bf16.mxu0 0
    %1216 = vmatpush2.bf16.msra.mxu0 0
    %1217 = vmatprep.subr.bf16.mxu0 0
    %1218 = vmatpush2.bf16.msra.mxu0 0
    %1219 = vmatprep.mubr.bf16.mxu0 0
    %1220 = vmatmul.mubr.bf16.gmra.mxu0 %v1091
    %v1221 = vpop.f32.mrf.mxu0
    %v1222 = vadd.f32 %v551, %v1221
    %v1223 = vpop.f32.mrf.mxu0
    %v1224 = vpop.f32.mrf.mxu0
    %v1225 = vpop.f32.mrf.mxu0
    %1226 = vdwg.mxu0
    %v1227 = vmul.f32 %v1179, %v1222
    %v1228 = vadd.f32 %v422, %v1227
    %v1229 = vtanh.pop %v1228
    %v1230 = vsub.f32 1.0, %v1186
    %v1231 = vmul.f32 %v1230, %v1229
    %v1233 = vrot.slane %v1086, 6
    %v1235 = vmul.f32 %v1186, %v1233
    %v1236 = vadd.f32 %v1231, %v1235
    %v1237 = vpack.c.bf16 %v1236, %v1236
    %v1239 = vsel %vm437, %v1237, 0
    %1241 = vmatprep.subr.bf16.mxu0 0
    %1242 = vmatpush1.bf16.msra.mxu0 0
    %1243 = vmatprep.subr.bf16.mxu0 0
    %1244 = vmatpush1.bf16.msra.mxu0 0
    %1245 = vmatprep.subr.bf16.mxu0 0
    %1246 = vmatpush1.bf16.msra.mxu0 0
    %1247 = vmatprep.subr.bf16.mxu0 0
    %1248 = vmatpush1.bf16.msra.mxu0 0
    %1249 = vmatprep.subr.bf16.mxu0 0
    %1250 = vmatpush1.bf16.msra.mxu0 0
    %1251 = vmatprep.subr.bf16.mxu0 0
    %1252 = vmatpush1.bf16.msra.mxu0 0
    %1253 = vmatprep.subr.bf16.mxu0 0
    %1254 = vmatpush1.bf16.msra.mxu0 %v434
    %1255 = vmatprep.subr.bf16.mxu0 0
    %1256 = vmatpush1.bf16.msra.mxu0 %v433
    %1257 = vmatprep.subr.bf16.mxu0 0
    %1258 = vmatpush2.bf16.msra.mxu0 0
    %1259 = vmatprep.subr.bf16.mxu0 0
    %1260 = vmatpush2.bf16.msra.mxu0 0
    %1261 = vmatprep.subr.bf16.mxu0 0
    %1262 = vmatpush2.bf16.msra.mxu0 0
    %1263 = vmatprep.subr.bf16.mxu0 0
    %1264 = vmatpush2.bf16.msra.mxu0 0
    %1265 = vmatprep.subr.bf16.mxu0 0
    %1266 = vmatpush2.bf16.msra.mxu0 0
    %1267 = vmatprep.subr.bf16.mxu0 0
    %1268 = vmatpush2.bf16.msra.mxu0 0
    %1269 = vmatprep.subr.bf16.mxu0 0
    %1270 = vmatpush2.bf16.msra.mxu0 0
    %1271 = vmatprep.subr.bf16.mxu0 0
    %1272 = vmatpush2.bf16.msra.mxu0 0
    %1273 = vmatprep.mubr.bf16.mxu0 0
    %1274 = vmatmul.mubr.bf16.gmra.mxu0 %v1239
    %v1275 = vpop.f32.mrf.mxu0
    %v1276 = vadd.f32 0.0, %v1275
    %v1277 = vpop.f32.mrf.mxu0
    %v1278 = vpop.f32.mrf.mxu0
    %v1279 = vpop.f32.mrf.mxu0
    %1280 = vdwg.mxu0
    %1281 = vmatprep.subr.bf16.mxu0 0
    %1282 = vmatpush1.bf16.msra.mxu0 0
    %1283 = vmatprep.subr.bf16.mxu0 0
    %1284 = vmatpush1.bf16.msra.mxu0 0
    %1285 = vmatprep.subr.bf16.mxu0 0
    %1286 = vmatpush1.bf16.msra.mxu0 0
    %1287 = vmatprep.subr.bf16.mxu0 0
    %1288 = vmatpush1.bf16.msra.mxu0 0
    %1289 = vmatprep.subr.bf16.mxu0 0
    %1290 = vmatpush1.bf16.msra.mxu0 0
    %1291 = vmatprep.subr.bf16.mxu0 0
    %1292 = vmatpush1.bf16.msra.mxu0 0
    %1293 = vmatprep.subr.bf16.mxu0 0
    %1294 = vmatpush1.bf16.msra.mxu0 %v490
    %1295 = vmatprep.subr.bf16.mxu0 0
    %1296 = vmatpush1.bf16.msra.mxu0 %v489
    %1297 = vmatprep.subr.bf16.mxu0 0
    %1298 = vmatpush2.bf16.msra.mxu0 0
    %1299 = vmatprep.subr.bf16.mxu0 0
    %1300 = vmatpush2.bf16.msra.mxu0 0
    %1301 = vmatprep.subr.bf16.mxu0 0
    %1302 = vmatpush2.bf16.msra.mxu0 0
    %1303 = vmatprep.subr.bf16.mxu0 0
    %1304 = vmatpush2.bf16.msra.mxu0 0
    %1305 = vmatprep.subr.bf16.mxu0 0
    %1306 = vmatpush2.bf16.msra.mxu0 0
    %1307 = vmatprep.subr.bf16.mxu0 0
    %1308 = vmatpush2.bf16.msra.mxu0 0
    %1309 = vmatprep.subr.bf16.mxu0 0
    %1310 = vmatpush2.bf16.msra.mxu0 0
    %1311 = vmatprep.subr.bf16.mxu0 0
    %1312 = vmatpush2.bf16.msra.mxu0 0
    %1313 = vmatprep.mubr.bf16.mxu0 0
    %1314 = vmatmul.mubr.bf16.gmra.mxu0 %v1239
    %v1315 = vpop.f32.mrf.mxu0
    %v1316 = vadd.f32 0.0, %v1315
    %v1317 = vpop.f32.mrf.mxu0
    %v1318 = vpop.f32.mrf.mxu0
    %v1319 = vpop.f32.mrf.mxu0
    %1320 = vdwg.mxu0
    %v1322 = vrot.slane %v1276, 6
    %v1324 = vadd.f32 %v316, %v1322
    %v1325 = vxor.u32 %v1324, 2147483648
    %v1326 = vmul.f32 %v1325, 1.442695
    %v1327 = vpow.pop %v1326
    %v1328 = vadd.f32 %v1327, 1.0
    %v1329 = vrcp.pop %v1328
    %v1330 = vmul.f32 1.0, %v1329
    %v1332 = vrot.slane %v1316, 6
    %v1334 = vadd.f32 %v369, %v1332
    %v1335 = vxor.u32 %v1334, 2147483648
    %v1336 = vmul.f32 %v1335, 1.442695
    %v1337 = vpow.pop %v1336
    %v1338 = vadd.f32 %v1337, 1.0
    %v1339 = vrcp.pop %v1338
    %v1340 = vmul.f32 1.0, %v1339
    %1341 = vmatprep.subr.bf16.mxu0 0
    %1342 = vmatpush1.bf16.msra.mxu0 0
    %1343 = vmatprep.subr.bf16.mxu0 0
    %1344 = vmatpush1.bf16.msra.mxu0 0
    %1345 = vmatprep.subr.bf16.mxu0 0
    %1346 = vmatpush1.bf16.msra.mxu0 0
    %1347 = vmatprep.subr.bf16.mxu0 0
    %1348 = vmatpush1.bf16.msra.mxu0 0
    %1349 = vmatprep.subr.bf16.mxu0 0
    %1350 = vmatpush1.bf16.msra.mxu0 0
    %1351 = vmatprep.subr.bf16.mxu0 0
    %1352 = vmatpush1.bf16.msra.mxu0 0
    %1353 = vmatprep.subr.bf16.mxu0 0
    %1354 = vmatpush1.bf16.msra.mxu0 %v562
    %1355 = vmatprep.subr.bf16.mxu0 0
    %1356 = vmatpush1.bf16.msra.mxu0 %v561
    %1357 = vmatprep.subr.bf16.mxu0 0
    %1358 = vmatpush2.bf16.msra.mxu0 0
    %1359 = vmatprep.subr.bf16.mxu0 0
    %1360 = vmatpush2.bf16.msra.mxu0 0
    %1361 = vmatprep.subr.bf16.mxu0 0
    %1362 = vmatpush2.bf16.msra.mxu0 0
    %1363 = vmatprep.subr.bf16.mxu0 0
    %1364 = vmatpush2.bf16.msra.mxu0 0
    %1365 = vmatprep.subr.bf16.mxu0 0
    %1366 = vmatpush2.bf16.msra.mxu0 0
    %1367 = vmatprep.subr.bf16.mxu0 0
    %1368 = vmatpush2.bf16.msra.mxu0 0
    %1369 = vmatprep.subr.bf16.mxu0 0
    %1370 = vmatpush2.bf16.msra.mxu0 0
    %1371 = vmatprep.subr.bf16.mxu0 0
    %1372 = vmatpush2.bf16.msra.mxu0 0
    %1373 = vmatprep.mubr.bf16.mxu0 0
    %1374 = vmatmul.mubr.bf16.gmra.mxu0 %v1239
    %v1375 = vpop.f32.mrf.mxu0
    %v1376 = vadd.f32 %v551, %v1375
    %v1377 = vpop.f32.mrf.mxu0
    %v1378 = vpop.f32.mrf.mxu0
    %v1379 = vpop.f32.mrf.mxu0
    %1380 = vdwg.mxu0
    %v1382 = vrot.slane %v1376, 6
    %v1384 = vmul.f32 %v1330, %v1382
    %v1385 = vadd.f32 %v422, %v1384
    %v1386 = vtanh.pop %v1385
    %v1387 = vsub.f32 1.0, %v1340
    %v1388 = vmul.f32 %v1387, %v1386
    %v1390 = vrot.slane %v1236, 6
    %v1392 = vmul.f32 %v1340, %v1390
    %v1393 = vadd.f32 %v1388, %v1392
    %v1394 = vpack.c.bf16 %v1393, %v1393
    %v1396 = vrot.slane %v1394, 1
    %v1398 = vsel %vm437, %v1396, 0
    %1400 = vmatprep.subr.bf16.mxu0 0
    %1401 = vmatpush1.bf16.msra.mxu0 0
    %1402 = vmatprep.subr.bf16.mxu0 0
    %1403 = vmatpush1.bf16.msra.mxu0 0
    %1404 = vmatprep.subr.bf16.mxu0 0
    %1405 = vmatpush1.bf16.msra.mxu0 0
    %1406 = vmatprep.subr.bf16.mxu0 0
    %1407 = vmatpush1.bf16.msra.mxu0 0
    %1408 = vmatprep.subr.bf16.mxu0 0
    %1409 = vmatpush1.bf16.msra.mxu0 0
    %1410 = vmatprep.subr.bf16.mxu0 0
    %1411 = vmatpush1.bf16.msra.mxu0 0
    %1412 = vmatprep.subr.bf16.mxu0 0
    %1413 = vmatpush1.bf16.msra.mxu0 %v434
    %1414 = vmatprep.subr.bf16.mxu0 0
    %1415 = vmatpush1.bf16.msra.mxu0 %v433
    %1416 = vmatprep.subr.bf16.mxu0 0
    %1417 = vmatpush2.bf16.msra.mxu0 0
    %1418 = vmatprep.subr.bf16.mxu0 0
    %1419 = vmatpush2.bf16.msra.mxu0 0
    %1420 = vmatprep.subr.bf16.mxu0 0
    %1421 = vmatpush2.bf16.msra.mxu0 0
    %1422 = vmatprep.subr.bf16.mxu0 0
    %1423 = vmatpush2.bf16.msra.mxu0 0
    %1424 = vmatprep.subr.bf16.mxu0 0
    %1425 = vmatpush2.bf16.msra.mxu0 0
    %1426 = vmatprep.subr.bf16.mxu0 0
    %1427 = vmatpush2.bf16.msra.mxu0 0
    %1428 = vmatprep.subr.bf16.mxu0 0
    %1429 = vmatpush2.bf16.msra.mxu0 0
    %1430 = vmatprep.subr.bf16.mxu0 0
    %1431 = vmatpush2.bf16.msra.mxu0 0
    %1432 = vmatprep.mubr.bf16.mxu0 0
    %1433 = vmatmul.mubr.bf16.gmra.mxu0 %v1398
    %v1434 = vpop.f32.mrf.mxu0
    %v1435 = vadd.f32 0.0, %v1434
    %v1436 = vpop.f32.mrf.mxu0
    %v1437 = vpop.f32.mrf.mxu0
    %v1438 = vpop.f32.mrf.mxu0
    %1439 = vdwg.mxu0
    %1440 = vmatprep.subr.bf16.mxu0 0
    %1441 = vmatpush1.bf16.msra.mxu0 0
    %1442 = vmatprep.subr.bf16.mxu0 0
    %1443 = vmatpush1.bf16.msra.mxu0 0
    %1444 = vmatprep.subr.bf16.mxu0 0
    %1445 = vmatpush1.bf16.msra.mxu0 0
    %1446 = vmatprep.subr.bf16.mxu0 0
    %1447 = vmatpush1.bf16.msra.mxu0 0
    %1448 = vmatprep.subr.bf16.mxu0 0
    %1449 = vmatpush1.bf16.msra.mxu0 0
    %1450 = vmatprep.subr.bf16.mxu0 0
    %1451 = vmatpush1.bf16.msra.mxu0 0
    %1452 = vmatprep.subr.bf16.mxu0 0
    %1453 = vmatpush1.bf16.msra.mxu0 %v490
    %1454 = vmatprep.subr.bf16.mxu0 0
    %1455 = vmatpush1.bf16.msra.mxu0 %v489
    %1456 = vmatprep.subr.bf16.mxu0 0
    %1457 = vmatpush2.bf16.msra.mxu0 0
    %1458 = vmatprep.subr.bf16.mxu0 0
    %1459 = vmatpush2.bf16.msra.mxu0 0
    %1460 = vmatprep.subr.bf16.mxu0 0
    %1461 = vmatpush2.bf16.msra.mxu0 0
    %1462 = vmatprep.subr.bf16.mxu0 0
    %1463 = vmatpush2.bf16.msra.mxu0 0
    %1464 = vmatprep.subr.bf16.mxu0 0
    %1465 = vmatpush2.bf16.msra.mxu0 0
    %1466 = vmatprep.subr.bf16.mxu0 0
    %1467 = vmatpush2.bf16.msra.mxu0 0
    %1468 = vmatprep.subr.bf16.mxu0 0
    %1469 = vmatpush2.bf16.msra.mxu0 0
    %1470 = vmatprep.subr.bf16.mxu0 0
    %1471 = vmatpush2.bf16.msra.mxu0 0
    %1472 = vmatprep.mubr.bf16.mxu0 0
    %1473 = vmatmul.mubr.bf16.gmra.mxu0 %v1398
    %v1474 = vpop.f32.mrf.mxu0
    %v1475 = vadd.f32 0.0, %v1474
    %v1476 = vpop.f32.mrf.mxu0
    %v1477 = vpop.f32.mrf.mxu0
    %v1478 = vpop.f32.mrf.mxu0
    %1479 = vdwg.mxu0
    %v1481 = vrot.slane %v1435, 4
    %v1483 = vadd.f32 %v316, %v1481
    %v1484 = vxor.u32 %v1483, 2147483648
    %v1485 = vmul.f32 %v1484, 1.442695
    %v1486 = vpow.pop %v1485
    %v1487 = vadd.f32 %v1486, 1.0
    %v1488 = vrcp.pop %v1487
    %v1489 = vmul.f32 1.0, %v1488
    %v1491 = vrot.slane %v1475, 4
    %v1493 = vadd.f32 %v369, %v1491
    %v1494 = vxor.u32 %v1493, 2147483648
    %v1495 = vmul.f32 %v1494, 1.442695
    %v1496 = vpow.pop %v1495
    %v1497 = vadd.f32 %v1496, 1.0
    %v1498 = vrcp.pop %v1497
    %v1499 = vmul.f32 1.0, %v1498
    %1500 = vmatprep.subr.bf16.mxu0 0
    %1501 = vmatpush1.bf16.msra.mxu0 0
    %1502 = vmatprep.subr.bf16.mxu0 0
    %1503 = vmatpush1.bf16.msra.mxu0 0
    %1504 = vmatprep.subr.bf16.mxu0 0
    %1505 = vmatpush1.bf16.msra.mxu0 0
    %1506 = vmatprep.subr.bf16.mxu0 0
    %1507 = vmatpush1.bf16.msra.mxu0 0
    %1508 = vmatprep.subr.bf16.mxu0 0
    %1509 = vmatpush1.bf16.msra.mxu0 0
    %1510 = vmatprep.subr.bf16.mxu0 0
    %1511 = vmatpush1.bf16.msra.mxu0 0
    %1512 = vmatprep.subr.bf16.mxu0 0
    %1513 = vmatpush1.bf16.msra.mxu0 %v562
    %1514 = vmatprep.subr.bf16.mxu0 0
    %1515 = vmatpush1.bf16.msra.mxu0 %v561
    %1516 = vmatprep.subr.bf16.mxu0 0
    %1517 = vmatpush2.bf16.msra.mxu0 0
    %1518 = vmatprep.subr.bf16.mxu0 0
    %1519 = vmatpush2.bf16.msra.mxu0 0
    %1520 = vmatprep.subr.bf16.mxu0 0
    %1521 = vmatpush2.bf16.msra.mxu0 0
    %1522 = vmatprep.subr.bf16.mxu0 0
    %1523 = vmatpush2.bf16.msra.mxu0 0
    %1524 = vmatprep.subr.bf16.mxu0 0
    %1525 = vmatpush2.bf16.msra.mxu0 0
    %1526 = vmatprep.subr.bf16.mxu0 0
    %1527 = vmatpush2.bf16.msra.mxu0 0
    %1528 = vmatprep.subr.bf16.mxu0 0
    %1529 = vmatpush2.bf16.msra.mxu0 0
    %1530 = vmatprep.subr.bf16.mxu0 0
    %1531 = vmatpush2.bf16.msra.mxu0 0
    %1532 = vmatprep.mubr.bf16.mxu0 0
    %1533 = vmatmul.mubr.bf16.gmra.mxu0 %v1398
    %v1534 = vpop.f32.mrf.mxu0
    %v1535 = vadd.f32 %v551, %v1534
    %v1536 = vpop.f32.mrf.mxu0
    %v1537 = vpop.f32.mrf.mxu0
    %v1538 = vpop.f32.mrf.mxu0
    %1539 = vdwg.mxu0
    %v1541 = vrot.slane %v1535, 4
    %v1543 = vmul.f32 %v1489, %v1541
    %v1544 = vadd.f32 %v422, %v1543
    %v1545 = vtanh.pop %v1544
    %v1546 = vsub.f32 1.0, %v1499
    %v1547 = vmul.f32 %v1546, %v1545
    %v1549 = vrot.slane %v1393, 6
    %v1551 = vmul.f32 %v1499, %v1549
    %v1552 = vadd.f32 %v1547, %v1551
    %v1553 = vpack.c.bf16 %v1552, %v1552
    %v1555 = vrot.slane %v1553, 2
    %v1557 = vsel %vm437, %v1555, 0
    %1559 = vmatprep.subr.bf16.mxu0 0
    %1560 = vmatpush1.bf16.msra.mxu0 0
    %1561 = vmatprep.subr.bf16.mxu0 0
    %1562 = vmatpush1.bf16.msra.mxu0 0
    %1563 = vmatprep.subr.bf16.mxu0 0
    %1564 = vmatpush1.bf16.msra.mxu0 0
    %1565 = vmatprep.subr.bf16.mxu0 0
    %1566 = vmatpush1.bf16.msra.mxu0 0
    %1567 = vmatprep.subr.bf16.mxu0 0
    %1568 = vmatpush1.bf16.msra.mxu0 0
    %1569 = vmatprep.subr.bf16.mxu0 0
    %1570 = vmatpush1.bf16.msra.mxu0 0
    %1571 = vmatprep.subr.bf16.mxu0 0
    %1572 = vmatpush1.bf16.msra.mxu0 %v434
    %1573 = vmatprep.subr.bf16.mxu0 0
    %1574 = vmatpush1.bf16.msra.mxu0 %v433
    %1575 = vmatprep.subr.bf16.mxu0 0
    %1576 = vmatpush2.bf16.msra.mxu0 0
    %1577 = vmatprep.subr.bf16.mxu0 0
    %1578 = vmatpush2.bf16.msra.mxu0 0
    %1579 = vmatprep.subr.bf16.mxu0 0
    %1580 = vmatpush2.bf16.msra.mxu0 0
    %1581 = vmatprep.subr.bf16.mxu0 0
    %1582 = vmatpush2.bf16.msra.mxu0 0
    %1583 = vmatprep.subr.bf16.mxu0 0
    %1584 = vmatpush2.bf16.msra.mxu0 0
    %1585 = vmatprep.subr.bf16.mxu0 0
    %1586 = vmatpush2.bf16.msra.mxu0 0
    %1587 = vmatprep.subr.bf16.mxu0 0
    %1588 = vmatpush2.bf16.msra.mxu0 0
    %1589 = vmatprep.subr.bf16.mxu0 0
    %1590 = vmatpush2.bf16.msra.mxu0 0
    %1591 = vmatprep.mubr.bf16.mxu0 0
    %1592 = vmatmul.mubr.bf16.gmra.mxu0 %v1557
    %v1593 = vpop.f32.mrf.mxu0
    %v1594 = vadd.f32 0.0, %v1593
    %v1595 = vpop.f32.mrf.mxu0
    %v1596 = vpop.f32.mrf.mxu0
    %v1597 = vpop.f32.mrf.mxu0
    %1598 = vdwg.mxu0
    %1599 = vmatprep.subr.bf16.mxu0 0
    %1600 = vmatpush1.bf16.msra.mxu0 0
    %1601 = vmatprep.subr.bf16.mxu0 0
    %1602 = vmatpush1.bf16.msra.mxu0 0
    %1603 = vmatprep.subr.bf16.mxu0 0
    %1604 = vmatpush1.bf16.msra.mxu0 0
    %1605 = vmatprep.subr.bf16.mxu0 0
    %1606 = vmatpush1.bf16.msra.mxu0 0
    %1607 = vmatprep.subr.bf16.mxu0 0
    %1608 = vmatpush1.bf16.msra.mxu0 0
    %1609 = vmatprep.subr.bf16.mxu0 0
    %1610 = vmatpush1.bf16.msra.mxu0 0
    %1611 = vmatprep.subr.bf16.mxu0 0
    %1612 = vmatpush1.bf16.msra.mxu0 %v490
    %1613 = vmatprep.subr.bf16.mxu0 0
    %1614 = vmatpush1.bf16.msra.mxu0 %v489
    %1615 = vmatprep.subr.bf16.mxu0 0
    %1616 = vmatpush2.bf16.msra.mxu0 0
    %1617 = vmatprep.subr.bf16.mxu0 0
    %1618 = vmatpush2.bf16.msra.mxu0 0
    %1619 = vmatprep.subr.bf16.mxu0 0
    %1620 = vmatpush2.bf16.msra.mxu0 0
    %1621 = vmatprep.subr.bf16.mxu0 0
    %1622 = vmatpush2.bf16.msra.mxu0 0
    %1623 = vmatprep.subr.bf16.mxu0 0
    %1624 = vmatpush2.bf16.msra.mxu0 0
    %1625 = vmatprep.subr.bf16.mxu0 0
    %1626 = vmatpush2.bf16.msra.mxu0 0
    %1627 = vmatprep.subr.bf16.mxu0 0
    %1628 = vmatpush2.bf16.msra.mxu0 0
    %1629 = vmatprep.subr.bf16.mxu0 0
    %1630 = vmatpush2.bf16.msra.mxu0 0
    %1631 = vmatprep.mubr.bf16.mxu0 0
    %1632 = vmatmul.mubr.bf16.gmra.mxu0 %v1557
    %v1633 = vpop.f32.mrf.mxu0
    %v1634 = vadd.f32 0.0, %v1633
    %v1635 = vpop.f32.mrf.mxu0
    %v1636 = vpop.f32.mrf.mxu0
    %v1637 = vpop.f32.mrf.mxu0
    %1638 = vdwg.mxu0
    %v1640 = vrot.slane %v1594, 2
    %v1642 = vadd.f32 %v316, %v1640
    %v1643 = vxor.u32 %v1642, 2147483648
    %v1644 = vmul.f32 %v1643, 1.442695
    %v1645 = vpow.pop %v1644
    %v1646 = vadd.f32 %v1645, 1.0
    %v1647 = vrcp.pop %v1646
    %v1648 = vmul.f32 1.0, %v1647
    %v1650 = vrot.slane %v1634, 2
    %v1652 = vadd.f32 %v369, %v1650
    %v1653 = vxor.u32 %v1652, 2147483648
    %v1654 = vmul.f32 %v1653, 1.442695
    %v1655 = vpow.pop %v1654
    %v1656 = vadd.f32 %v1655, 1.0
    %v1657 = vrcp.pop %v1656
    %v1658 = vmul.f32 1.0, %v1657
    %1659 = vmatprep.subr.bf16.mxu0 0
    %1660 = vmatpush1.bf16.msra.mxu0 0
    %1661 = vmatprep.subr.bf16.mxu0 0
    %1662 = vmatpush1.bf16.msra.mxu0 0
    %1663 = vmatprep.subr.bf16.mxu0 0
    %1664 = vmatpush1.bf16.msra.mxu0 0
    %1665 = vmatprep.subr.bf16.mxu0 0
    %1666 = vmatpush1.bf16.msra.mxu0 0
    %1667 = vmatprep.subr.bf16.mxu0 0
    %1668 = vmatpush1.bf16.msra.mxu0 0
    %1669 = vmatprep.subr.bf16.mxu0 0
    %1670 = vmatpush1.bf16.msra.mxu0 0
    %1671 = vmatprep.subr.bf16.mxu0 0
    %1672 = vmatpush1.bf16.msra.mxu0 %v562
    %1673 = vmatprep.subr.bf16.mxu0 0
    %1674 = vmatpush1.bf16.msra.mxu0 %v561
    %1675 = vmatprep.subr.bf16.mxu0 0
    %1676 = vmatpush2.bf16.msra.mxu0 0
    %1677 = vmatprep.subr.bf16.mxu0 0
    %1678 = vmatpush2.bf16.msra.mxu0 0
    %1679 = vmatprep.subr.bf16.mxu0 0
    %1680 = vmatpush2.bf16.msra.mxu0 0
    %1681 = vmatprep.subr.bf16.mxu0 0
    %1682 = vmatpush2.bf16.msra.mxu0 0
    %1683 = vmatprep.subr.bf16.mxu0 0
    %1684 = vmatpush2.bf16.msra.mxu0 0
    %1685 = vmatprep.subr.bf16.mxu0 0
    %1686 = vmatpush2.bf16.msra.mxu0 0
    %1687 = vmatprep.subr.bf16.mxu0 0
    %1688 = vmatpush2.bf16.msra.mxu0 0
    %1689 = vmatprep.subr.bf16.mxu0 0
    %1690 = vmatpush2.bf16.msra.mxu0 0
    %1691 = vmatprep.mubr.bf16.mxu0 0
    %1692 = vmatmul.mubr.bf16.gmra.mxu0 %v1557
    %v1693 = vpop.f32.mrf.mxu0
    %v1694 = vadd.f32 %v551, %v1693
    %v1695 = vpop.f32.mrf.mxu0
    %v1696 = vpop.f32.mrf.mxu0
    %v1697 = vpop.f32.mrf.mxu0
    %1698 = vdwg.mxu0
    %v1700 = vrot.slane %v1694, 2
    %v1702 = vmul.f32 %v1648, %v1700
    %v1703 = vadd.f32 %v422, %v1702
    %v1704 = vtanh.pop %v1703
    %v1705 = vsub.f32 1.0, %v1658
    %v1706 = vmul.f32 %v1705, %v1704
    %v1708 = vrot.slane %v1552, 6
    %v1710 = vmul.f32 %v1658, %v1708
    %v1711 = vadd.f32 %v1706, %v1710
    %vm1712 = vcmask 1041408
    %v1713 = vsel %vm1712, %v611, %v768
    %vm1714 = vcmask 1043456
    %v1715 = vsel %vm1714, %v1713, %v927
    %vm1716 = vcmask 1045504
    %v1717 = vsel %vm1716, %v1715, %v1086
    %v1718 = vsel %vm1712, %v1236, %v1393
    %v1719 = vsel %vm1714, %v1718, %v1552
    %v1720 = vsel %vm1716, %v1719, %v1711
    %v1721 = vpack.c.bf16 %v1720, %v1717
    %v1722 = vld [vmem:[%s11] sm:$0xf]
    %v1723 = vld [vmem:[%s11 + $0x4] sm:$0xf]
    %v1724 = vld [vmem:[%s11 + $0x8] sm:$0xf]
    %v1725 = vld [vmem:[%s11 + $0xc] sm:$0xf]
    %v1726 = vld [vmem:[#allocation14] sm:$0xf]
    %v1727 = vld [vmem:[#allocation14 + $0x4] sm:$0xf]
    %v1728 = vld [vmem:[#allocation14 + $0x8] sm:$0xf]
    %v1729 = vld [vmem:[#allocation14 + $0xc] sm:$0xf]
    %v1730 = vld [vmem:[#allocation16] sm:$0xf]
    %v1731 = vld [vmem:[#allocation16 + $0x4] sm:$0xf]
    %v1732 = vld [vmem:[#allocation16 + $0x8] sm:$0xf]
    %v1733 = vld [vmem:[#allocation16 + $0xc] sm:$0xf]
    %v1734 = vld [vmem:[#allocation17] sm:$0xf]
    %v1735 = vld [vmem:[#allocation17 + $0x4] sm:$0xf]
    %v1736 = vld [vmem:[#allocation17 + $0x8] sm:$0xf]
    %v1737 = vld [vmem:[#allocation17 + $0xc] sm:$0xf]
    %v1738 = vld [vmem:[#allocation19] sm:$0xf]
    %v1739 = vld [vmem:[#allocation19 + $0x4] sm:$0xf]
    %v1740 = vld [vmem:[#allocation19 + $0x8] sm:$0xf]
    %v1741 = vld [vmem:[#allocation19 + $0xc] sm:$0xf]
    %v1742 = vld [vmem:[#allocation20] sm:$0xf]
    %v1743 = vld [vmem:[#allocation20 + $0x4] sm:$0xf]
    %v1744 = vld [vmem:[#allocation20 + $0x8] sm:$0xf]
    %v1745 = vld [vmem:[#allocation20 + $0xc] sm:$0xf]
    %v1746 = vld [vmem:[%s17] sm:$0x1]
    %v1747 = vld [vmem:[%s18] sm:$0x1]
    %v1748 = vld [vmem:[%s19] sm:$0x1]
    %v1749 = vld [vmem:[%s20] sm:$0x1]
    %v1751 = vlaneseq
    %v1752 = vshrl.u32 %v1751, 7
    %v1753 = vsub.s32 0, %v1752
    %v1754 = vrot.slane %v1746, %v1753
    %v1760 = vunpack.c.l.b16 %v1722
    %v1761 = vunpack.c.l.b16 %v1723
    %v1762 = vunpack.c.l.b16 %v1724
    %v1763 = vunpack.c.l.b16 %v1725
    %v1764 = vpack.c.b16 %v1761, %v1760
    %v1765 = vpack.c.b16 %v1763, %v1762
    %v1769 = vsel %vm437, %v1721, 0
    %1771 = vmatprep.subr.bf16.mxu0 0
    %1772 = vmatpush1.bf16.msra.mxu0 0
    %1773 = vmatprep.subr.bf16.mxu0 0
    %1774 = vmatpush1.bf16.msra.mxu0 0
    %1775 = vmatprep.subr.bf16.mxu0 0
    %1776 = vmatpush1.bf16.msra.mxu0 0
    %1777 = vmatprep.subr.bf16.mxu0 0
    %1778 = vmatpush1.bf16.msra.mxu0 0
    %1779 = vmatprep.subr.bf16.mxu0 0
    %1780 = vmatpush1.bf16.msra.mxu0 0
    %1781 = vmatprep.subr.bf16.mxu0 0
    %1782 = vmatpush1.bf16.msra.mxu0 0
    %1783 = vmatprep.subr.bf16.mxu0 0
    %1784 = vmatpush1.bf16.msra.mxu0 %v1765
    %1785 = vmatprep.subr.bf16.mxu0 0
    %1786 = vmatpush1.bf16.msra.mxu0 %v1764
    %1787 = vmatprep.subr.bf16.mxu0 0
    %1788 = vmatpush2.bf16.msra.mxu0 0
    %1789 = vmatprep.subr.bf16.mxu0 0
    %1790 = vmatpush2.bf16.msra.mxu0 0
    %1791 = vmatprep.subr.bf16.mxu0 0
    %1792 = vmatpush2.bf16.msra.mxu0 0
    %1793 = vmatprep.subr.bf16.mxu0 0
    %1794 = vmatpush2.bf16.msra.mxu0 0
    %1795 = vmatprep.subr.bf16.mxu0 0
    %1796 = vmatpush2.bf16.msra.mxu0 0
    %1797 = vmatprep.subr.bf16.mxu0 0
    %1798 = vmatpush2.bf16.msra.mxu0 0
    %1799 = vmatprep.subr.bf16.mxu0 0
    %1800 = vmatpush2.bf16.msra.mxu0 0
    %1801 = vmatprep.subr.bf16.mxu0 0
    %1802 = vmatpush2.bf16.msra.mxu0 0
    %1803 = vmatprep.mubr.bf16.mxu0 0
    %1804 = vmatmul.mubr.bf16.gmra.mxu0 %v1769
    %v1805 = vpop.f32.mrf.mxu0
    %v1806 = vadd.f32 %v1754, %v1805
    %v1807 = vpop.f32.mrf.mxu0
    %v1808 = vpop.f32.mrf.mxu0
    %v1809 = vadd.f32 %v1754, %v1808
    %v1810 = vpop.f32.mrf.mxu0
    %1811 = vdwg.mxu0
    %v1813 = vlaneseq
    %v1814 = vshrl.u32 %v1813, 7
    %v1815 = vsub.s32 0, %v1814
    %v1816 = vrot.slane %v1747, %v1815
    %v1822 = vunpack.c.l.b16 %v1726
    %v1823 = vunpack.c.l.b16 %v1727
    %v1824 = vunpack.c.l.b16 %v1728
    %v1825 = vunpack.c.l.b16 %v1729
    %v1826 = vpack.c.b16 %v1823, %v1822
    %v1827 = vpack.c.b16 %v1825, %v1824
    %1830 = vmatprep.subr.bf16.mxu0 0
    %1831 = vmatpush1.bf16.msra.mxu0 0
    %1832 = vmatprep.subr.bf16.mxu0 0
    %1833 = vmatpush1.bf16.msra.mxu0 0
    %1834 = vmatprep.subr.bf16.mxu0 0
    %1835 = vmatpush1.bf16.msra.mxu0 0
    %1836 = vmatprep.subr.bf16.mxu0 0
    %1837 = vmatpush1.bf16.msra.mxu0 0
    %1838 = vmatprep.subr.bf16.mxu0 0
    %1839 = vmatpush1.bf16.msra.mxu0 0
    %1840 = vmatprep.subr.bf16.mxu0 0
    %1841 = vmatpush1.bf16.msra.mxu0 0
    %1842 = vmatprep.subr.bf16.mxu0 0
    %1843 = vmatpush1.bf16.msra.mxu0 %v1827
    %1844 = vmatprep.subr.bf16.mxu0 0
    %1845 = vmatpush1.bf16.msra.mxu0 %v1826
    %1846 = vmatprep.subr.bf16.mxu0 0
    %1847 = vmatpush2.bf16.msra.mxu0 0
    %1848 = vmatprep.subr.bf16.mxu0 0
    %1849 = vmatpush2.bf16.msra.mxu0 0
    %1850 = vmatprep.subr.bf16.mxu0 0
    %1851 = vmatpush2.bf16.msra.mxu0 0
    %1852 = vmatprep.subr.bf16.mxu0 0
    %1853 = vmatpush2.bf16.msra.mxu0 0
    %1854 = vmatprep.subr.bf16.mxu0 0
    %1855 = vmatpush2.bf16.msra.mxu0 0
    %1856 = vmatprep.subr.bf16.mxu0 0
    %1857 = vmatpush2.bf16.msra.mxu0 0
    %1858 = vmatprep.subr.bf16.mxu0 0
    %1859 = vmatpush2.bf16.msra.mxu0 0
    %1860 = vmatprep.subr.bf16.mxu0 0
    %1861 = vmatpush2.bf16.msra.mxu0 0
    %1862 = vmatprep.mubr.bf16.mxu0 0
    %1863 = vmatmul.mubr.bf16.gmra.mxu0 %v1769
    %v1864 = vpop.f32.mrf.mxu0
    %v1865 = vadd.f32 %v1816, %v1864
    %v1866 = vpop.f32.mrf.mxu0
    %v1867 = vpop.f32.mrf.mxu0
    %v1868 = vadd.f32 %v1816, %v1867
    %v1869 = vpop.f32.mrf.mxu0
    %1870 = vdwg.mxu0
    %v1872 = vlaneseq
    %v1873 = vshrl.u32 %v1872, 7
    %v1874 = vsub.s32 0, %v1873
    %v1875 = vrot.slane %v1748, %v1874
    %v1881 = vunpack.c.l.b16 %v1730
    %v1882 = vunpack.c.l.b16 %v1731
    %v1883 = vunpack.c.l.b16 %v1732
    %v1884 = vunpack.c.l.b16 %v1733
    %v1885 = vpack.c.b16 %v1882, %v1881
    %v1886 = vpack.c.b16 %v1884, %v1883
    %1889 = vmatprep.subr.bf16.mxu0 0
    %1890 = vmatpush1.bf16.msra.mxu0 0
    %1891 = vmatprep.subr.bf16.mxu0 0
    %1892 = vmatpush1.bf16.msra.mxu0 0
    %1893 = vmatprep.subr.bf16.mxu0 0
    %1894 = vmatpush1.bf16.msra.mxu0 0
    %1895 = vmatprep.subr.bf16.mxu0 0
    %1896 = vmatpush1.bf16.msra.mxu0 0
    %1897 = vmatprep.subr.bf16.mxu0 0
    %1898 = vmatpush1.bf16.msra.mxu0 0
    %1899 = vmatprep.subr.bf16.mxu0 0
    %1900 = vmatpush1.bf16.msra.mxu0 0
    %1901 = vmatprep.subr.bf16.mxu0 0
    %1902 = vmatpush1.bf16.msra.mxu0 %v1886
    %1903 = vmatprep.subr.bf16.mxu0 0
    %1904 = vmatpush1.bf16.msra.mxu0 %v1885
    %1905 = vmatprep.subr.bf16.mxu0 0
    %1906 = vmatpush2.bf16.msra.mxu0 0
    %1907 = vmatprep.subr.bf16.mxu0 0
    %1908 = vmatpush2.bf16.msra.mxu0 0
    %1909 = vmatprep.subr.bf16.mxu0 0
    %1910 = vmatpush2.bf16.msra.mxu0 0
    %1911 = vmatprep.subr.bf16.mxu0 0
    %1912 = vmatpush2.bf16.msra.mxu0 0
    %1913 = vmatprep.subr.bf16.mxu0 0
    %1914 = vmatpush2.bf16.msra.mxu0 0
    %1915 = vmatprep.subr.bf16.mxu0 0
    %1916 = vmatpush2.bf16.msra.mxu0 0
    %1917 = vmatprep.subr.bf16.mxu0 0
    %1918 = vmatpush2.bf16.msra.mxu0 0
    %1919 = vmatprep.subr.bf16.mxu0 0
    %1920 = vmatpush2.bf16.msra.mxu0 0
    %1921 = vmatprep.mubr.bf16.mxu0 0
    %1922 = vmatmul.mubr.bf16.gmra.mxu0 %v1769
    %v1923 = vpop.f32.mrf.mxu0
    %v1924 = vadd.f32 %v1875, %v1923
    %v1925 = vpop.f32.mrf.mxu0
    %v1926 = vpop.f32.mrf.mxu0
    %v1927 = vadd.f32 %v1875, %v1926
    %v1928 = vpop.f32.mrf.mxu0
    %1929 = vdwg.mxu0
    %v1934 = vunpack.c.l.b16 %v1734
    %v1935 = vunpack.c.l.b16 %v1735
    %v1936 = vunpack.c.l.b16 %v1736
    %v1937 = vunpack.c.l.b16 %v1737
    %v1938 = vpack.c.b16 %v1935, %v1934
    %v1939 = vpack.c.b16 %v1937, %v1936
    %1942 = vmatprep.subr.bf16.mxu0 0
    %1943 = vmatpush1.bf16.msra.mxu0 0
    %1944 = vmatprep.subr.bf16.mxu0 0
    %1945 = vmatpush1.bf16.msra.mxu0 0
    %1946 = vmatprep.subr.bf16.mxu0 0
    %1947 = vmatpush1.bf16.msra.mxu0 0
    %1948 = vmatprep.subr.bf16.mxu0 0
    %1949 = vmatpush1.bf16.msra.mxu0 0
    %1950 = vmatprep.subr.bf16.mxu0 0
    %1951 = vmatpush1.bf16.msra.mxu0 0
    %1952 = vmatprep.subr.bf16.mxu0 0
    %1953 = vmatpush1.bf16.msra.mxu0 0
    %1954 = vmatprep.subr.bf16.mxu0 0
    %1955 = vmatpush1.bf16.msra.mxu0 %v1939
    %1956 = vmatprep.subr.bf16.mxu0 0
    %1957 = vmatpush1.bf16.msra.mxu0 %v1938
    %1958 = vmatprep.subr.bf16.mxu0 0
    %1959 = vmatpush2.bf16.msra.mxu0 0
    %1960 = vmatprep.subr.bf16.mxu0 0
    %1961 = vmatpush2.bf16.msra.mxu0 0
    %1962 = vmatprep.subr.bf16.mxu0 0
    %1963 = vmatpush2.bf16.msra.mxu0 0
    %1964 = vmatprep.subr.bf16.mxu0 0
    %1965 = vmatpush2.bf16.msra.mxu0 0
    %1966 = vmatprep.subr.bf16.mxu0 0
    %1967 = vmatpush2.bf16.msra.mxu0 0
    %1968 = vmatprep.subr.bf16.mxu0 0
    %1969 = vmatpush2.bf16.msra.mxu0 0
    %1970 = vmatprep.subr.bf16.mxu0 0
    %1971 = vmatpush2.bf16.msra.mxu0 0
    %1972 = vmatprep.subr.bf16.mxu0 0
    %1973 = vmatpush2.bf16.msra.mxu0 0
    %1974 = vmatprep.mubr.bf16.mxu0 0
    %1975 = vmatmul.mubr.bf16.gmra.mxu0 %v439
    %v1976 = vpop.f32.mrf.mxu0
    %v1977 = vadd.f32 0.0, %v1976
    %v1978 = vpop.f32.mrf.mxu0
    %v1979 = vpop.f32.mrf.mxu0
    %v1980 = vpop.f32.mrf.mxu0
    %1981 = vdwg.mxu0
    %v1986 = vunpack.c.l.b16 %v1738
    %v1987 = vunpack.c.l.b16 %v1739
    %v1988 = vunpack.c.l.b16 %v1740
    %v1989 = vunpack.c.l.b16 %v1741
    %v1990 = vpack.c.b16 %v1987, %v1986
    %v1991 = vpack.c.b16 %v1989, %v1988
    %1994 = vmatprep.subr.bf16.mxu0 0
    %1995 = vmatpush1.bf16.msra.mxu0 0
    %1996 = vmatprep.subr.bf16.mxu0 0
    %1997 = vmatpush1.bf16.msra.mxu0 0
    %1998 = vmatprep.subr.bf16.mxu0 0
    %1999 = vmatpush1.bf16.msra.mxu0 0
    %2000 = vmatprep.subr.bf16.mxu0 0
    %2001 = vmatpush1.bf16.msra.mxu0 0
    %2002 = vmatprep.subr.bf16.mxu0 0
    %2003 = vmatpush1.bf16.msra.mxu0 0
    %2004 = vmatprep.subr.bf16.mxu0 0
    %2005 = vmatpush1.bf16.msra.mxu0 0
    %2006 = vmatprep.subr.bf16.mxu0 0
    %2007 = vmatpush1.bf16.msra.mxu0 %v1991
    %2008 = vmatprep.subr.bf16.mxu0 0
    %2009 = vmatpush1.bf16.msra.mxu0 %v1990
    %2010 = vmatprep.subr.bf16.mxu0 0
    %2011 = vmatpush2.bf16.msra.mxu0 0
    %2012 = vmatprep.subr.bf16.mxu0 0
    %2013 = vmatpush2.bf16.msra.mxu0 0
    %2014 = vmatprep.subr.bf16.mxu0 0
    %2015 = vmatpush2.bf16.msra.mxu0 0
    %2016 = vmatprep.subr.bf16.mxu0 0
    %2017 = vmatpush2.bf16.msra.mxu0 0
    %2018 = vmatprep.subr.bf16.mxu0 0
    %2019 = vmatpush2.bf16.msra.mxu0 0
    %2020 = vmatprep.subr.bf16.mxu0 0
    %2021 = vmatpush2.bf16.msra.mxu0 0
    %2022 = vmatprep.subr.bf16.mxu0 0
    %2023 = vmatpush2.bf16.msra.mxu0 0
    %2024 = vmatprep.subr.bf16.mxu0 0
    %2025 = vmatpush2.bf16.msra.mxu0 0
    %2026 = vmatprep.mubr.bf16.mxu0 0
    %2027 = vmatmul.mubr.bf16.gmra.mxu0 %v439
    %v2028 = vpop.f32.mrf.mxu0
    %v2029 = vadd.f32 0.0, %v2028
    %v2030 = vpop.f32.mrf.mxu0
    %v2031 = vpop.f32.mrf.mxu0
    %v2032 = vpop.f32.mrf.mxu0
    %2033 = vdwg.mxu0
    %v2034 = vadd.f32 %v1806, %v1977
    %v2035 = vxor.u32 %v2034, 2147483648
    %v2036 = vmul.f32 %v2035, 1.442695
    %v2037 = vpow.pop %v2036
    %v2038 = vadd.f32 %v2037, 1.0
    %v2039 = vrcp.pop %v2038
    %v2040 = vmul.f32 1.0, %v2039
    %v2041 = vadd.f32 %v1865, %v2029
    %v2042 = vxor.u32 %v2041, 2147483648
    %v2043 = vmul.f32 %v2042, 1.442695
    %v2044 = vpow.pop %v2043
    %v2045 = vadd.f32 %v2044, 1.0
    %v2046 = vrcp.pop %v2045
    %v2047 = vmul.f32 1.0, %v2046
    %v2049 = vlaneseq
    %v2050 = vshrl.u32 %v2049, 7
    %v2051 = vsub.s32 0, %v2050
    %v2052 = vrot.slane %v1749, %v2051
    %v2058 = vunpack.c.l.b16 %v1742
    %v2059 = vunpack.c.l.b16 %v1743
    %v2060 = vunpack.c.l.b16 %v1744
    %v2061 = vunpack.c.l.b16 %v1745
    %v2062 = vpack.c.b16 %v2059, %v2058
    %v2063 = vpack.c.b16 %v2061, %v2060
    %2066 = vmatprep.subr.bf16.mxu0 0
    %2067 = vmatpush1.bf16.msra.mxu0 0
    %2068 = vmatprep.subr.bf16.mxu0 0
    %2069 = vmatpush1.bf16.msra.mxu0 0
    %2070 = vmatprep.subr.bf16.mxu0 0
    %2071 = vmatpush1.bf16.msra.mxu0 0
    %2072 = vmatprep.subr.bf16.mxu0 0
    %2073 = vmatpush1.bf16.msra.mxu0 0
    %2074 = vmatprep.subr.bf16.mxu0 0
    %2075 = vmatpush1.bf16.msra.mxu0 0
    %2076 = vmatprep.subr.bf16.mxu0 0
    %2077 = vmatpush1.bf16.msra.mxu0 0
    %2078 = vmatprep.subr.bf16.mxu0 0
    %2079 = vmatpush1.bf16.msra.mxu0 %v2063
    %2080 = vmatprep.subr.bf16.mxu0 0
    %2081 = vmatpush1.bf16.msra.mxu0 %v2062
    %2082 = vmatprep.subr.bf16.mxu0 0
    %2083 = vmatpush2.bf16.msra.mxu0 0
    %2084 = vmatprep.subr.bf16.mxu0 0
    %2085 = vmatpush2.bf16.msra.mxu0 0
    %2086 = vmatprep.subr.bf16.mxu0 0
    %2087 = vmatpush2.bf16.msra.mxu0 0
    %2088 = vmatprep.subr.bf16.mxu0 0
    %2089 = vmatpush2.bf16.msra.mxu0 0
    %2090 = vmatprep.subr.bf16.mxu0 0
    %2091 = vmatpush2.bf16.msra.mxu0 0
    %2092 = vmatprep.subr.bf16.mxu0 0
    %2093 = vmatpush2.bf16.msra.mxu0 0
    %2094 = vmatprep.subr.bf16.mxu0 0
    %2095 = vmatpush2.bf16.msra.mxu0 0
    %2096 = vmatprep.subr.bf16.mxu0 0
    %2097 = vmatpush2.bf16.msra.mxu0 0
    %2098 = vmatprep.mubr.bf16.mxu0 0
    %2099 = vmatmul.mubr.bf16.gmra.mxu0 %v439
    %v2100 = vpop.f32.mrf.mxu0
    %v2101 = vadd.f32 %v2052, %v2100
    %v2102 = vpop.f32.mrf.mxu0
    %v2103 = vpop.f32.mrf.mxu0
    %v2104 = vpop.f32.mrf.mxu0
    %2105 = vdwg.mxu0
    %v2106 = vmul.f32 %v2040, %v2101
    %v2107 = vadd.f32 %v1924, %v2106
    %v2108 = vtanh.pop %v2107
    %v2109 = vsub.f32 1.0, %v2047
    %v2110 = vmul.f32 %v2109, %v2108
    %v2111 = vmul.f32 %v2047, 0.0
    %v2112 = vadd.f32 %v2110, %v2111
    %v2113 = vpack.c.bf16 %v2112, %v2112
    %v2115 = vsel %vm437, %v2113, 0
    %2117 = vmatprep.subr.bf16.mxu0 0
    %2118 = vmatpush1.bf16.msra.mxu0 0
    %2119 = vmatprep.subr.bf16.mxu0 0
    %2120 = vmatpush1.bf16.msra.mxu0 0
    %2121 = vmatprep.subr.bf16.mxu0 0
    %2122 = vmatpush1.bf16.msra.mxu0 0
    %2123 = vmatprep.subr.bf16.mxu0 0
    %2124 = vmatpush1.bf16.msra.mxu0 0
    %2125 = vmatprep.subr.bf16.mxu0 0
    %2126 = vmatpush1.bf16.msra.mxu0 0
    %2127 = vmatprep.subr.bf16.mxu0 0
    %2128 = vmatpush1.bf16.msra.mxu0 0
    %2129 = vmatprep.subr.bf16.mxu0 0
    %2130 = vmatpush1.bf16.msra.mxu0 %v1939
    %2131 = vmatprep.subr.bf16.mxu0 0
    %2132 = vmatpush1.bf16.msra.mxu0 %v1938
    %2133 = vmatprep.subr.bf16.mxu0 0
    %2134 = vmatpush2.bf16.msra.mxu0 0
    %2135 = vmatprep.subr.bf16.mxu0 0
    %2136 = vmatpush2.bf16.msra.mxu0 0
    %2137 = vmatprep.subr.bf16.mxu0 0
    %2138 = vmatpush2.bf16.msra.mxu0 0
    %2139 = vmatprep.subr.bf16.mxu0 0
    %2140 = vmatpush2.bf16.msra.mxu0 0
    %2141 = vmatprep.subr.bf16.mxu0 0
    %2142 = vmatpush2.bf16.msra.mxu0 0
    %2143 = vmatprep.subr.bf16.mxu0 0
    %2144 = vmatpush2.bf16.msra.mxu0 0
    %2145 = vmatprep.subr.bf16.mxu0 0
    %2146 = vmatpush2.bf16.msra.mxu0 0
    %2147 = vmatprep.subr.bf16.mxu0 0
    %2148 = vmatpush2.bf16.msra.mxu0 0
    %2149 = vmatprep.mubr.bf16.mxu0 0
    %2150 = vmatmul.mubr.bf16.gmra.mxu0 %v2115
    %v2151 = vpop.f32.mrf.mxu0
    %v2152 = vadd.f32 0.0, %v2151
    %v2153 = vpop.f32.mrf.mxu0
    %v2154 = vpop.f32.mrf.mxu0
    %v2155 = vpop.f32.mrf.mxu0
    %2156 = vdwg.mxu0
    %2157 = vmatprep.subr.bf16.mxu0 0
    %2158 = vmatpush1.bf16.msra.mxu0 0
    %2159 = vmatprep.subr.bf16.mxu0 0
    %2160 = vmatpush1.bf16.msra.mxu0 0
    %2161 = vmatprep.subr.bf16.mxu0 0
    %2162 = vmatpush1.bf16.msra.mxu0 0
    %2163 = vmatprep.subr.bf16.mxu0 0
    %2164 = vmatpush1.bf16.msra.mxu0 0
    %2165 = vmatprep.subr.bf16.mxu0 0
    %2166 = vmatpush1.bf16.msra.mxu0 0
    %2167 = vmatprep.subr.bf16.mxu0 0
    %2168 = vmatpush1.bf16.msra.mxu0 0
    %2169 = vmatprep.subr.bf16.mxu0 0
    %2170 = vmatpush1.bf16.msra.mxu0 %v1991
    %2171 = vmatprep.subr.bf16.mxu0 0
    %2172 = vmatpush1.bf16.msra.mxu0 %v1990
    %2173 = vmatprep.subr.bf16.mxu0 0
    %2174 = vmatpush2.bf16.msra.mxu0 0
    %2175 = vmatprep.subr.bf16.mxu0 0
    %2176 = vmatpush2.bf16.msra.mxu0 0
    %2177 = vmatprep.subr.bf16.mxu0 0
    %2178 = vmatpush2.bf16.msra.mxu0 0
    %2179 = vmatprep.subr.bf16.mxu0 0
    %2180 = vmatpush2.bf16.msra.mxu0 0
    %2181 = vmatprep.subr.bf16.mxu0 0
    %2182 = vmatpush2.bf16.msra.mxu0 0
    %2183 = vmatprep.subr.bf16.mxu0 0
    %2184 = vmatpush2.bf16.msra.mxu0 0
    %2185 = vmatprep.subr.bf16.mxu0 0
    %2186 = vmatpush2.bf16.msra.mxu0 0
    %2187 = vmatprep.subr.bf16.mxu0 0
    %2188 = vmatpush2.bf16.msra.mxu0 0
    %2189 = vmatprep.mubr.bf16.mxu0 0
    %2190 = vmatmul.mubr.bf16.gmra.mxu0 %v2115
    %v2191 = vpop.f32.mrf.mxu0
    %v2192 = vadd.f32 0.0, %v2191
    %v2193 = vpop.f32.mrf.mxu0
    %v2194 = vpop.f32.mrf.mxu0
    %v2195 = vpop.f32.mrf.mxu0
    %2196 = vdwg.mxu0
    %v2198 = vrot.slane %v2152, 6
    %v2200 = vadd.f32 %v1806, %v2198
    %v2201 = vxor.u32 %v2200, 2147483648
    %v2202 = vmul.f32 %v2201, 1.442695
    %v2203 = vpow.pop %v2202
    %v2204 = vadd.f32 %v2203, 1.0
    %v2205 = vrcp.pop %v2204
    %v2206 = vmul.f32 1.0, %v2205
    %v2208 = vrot.slane %v2192, 6
    %v2210 = vadd.f32 %v1865, %v2208
    %v2211 = vxor.u32 %v2210, 2147483648
    %v2212 = vmul.f32 %v2211, 1.442695
    %v2213 = vpow.pop %v2212
    %v2214 = vadd.f32 %v2213, 1.0
    %v2215 = vrcp.pop %v2214
    %v2216 = vmul.f32 1.0, %v2215
    %2217 = vmatprep.subr.bf16.mxu0 0
    %2218 = vmatpush1.bf16.msra.mxu0 0
    %2219 = vmatprep.subr.bf16.mxu0 0
    %2220 = vmatpush1.bf16.msra.mxu0 0
    %2221 = vmatprep.subr.bf16.mxu0 0
    %2222 = vmatpush1.bf16.msra.mxu0 0
    %2223 = vmatprep.subr.bf16.mxu0 0
    %2224 = vmatpush1.bf16.msra.mxu0 0
    %2225 = vmatprep.subr.bf16.mxu0 0
    %2226 = vmatpush1.bf16.msra.mxu0 0
    %2227 = vmatprep.subr.bf16.mxu0 0
    %2228 = vmatpush1.bf16.msra.mxu0 0
    %2229 = vmatprep.subr.bf16.mxu0 0
    %2230 = vmatpush1.bf16.msra.mxu0 %v2063
    %2231 = vmatprep.subr.bf16.mxu0 0
    %2232 = vmatpush1.bf16.msra.mxu0 %v2062
    %2233 = vmatprep.subr.bf16.mxu0 0
    %2234 = vmatpush2.bf16.msra.mxu0 0
    %2235 = vmatprep.subr.bf16.mxu0 0
    %2236 = vmatpush2.bf16.msra.mxu0 0
    %2237 = vmatprep.subr.bf16.mxu0 0
    %2238 = vmatpush2.bf16.msra.mxu0 0
    %2239 = vmatprep.subr.bf16.mxu0 0
    %2240 = vmatpush2.bf16.msra.mxu0 0
    %2241 = vmatprep.subr.bf16.mxu0 0
    %2242 = vmatpush2.bf16.msra.mxu0 0
    %2243 = vmatprep.subr.bf16.mxu0 0
    %2244 = vmatpush2.bf16.msra.mxu0 0
    %2245 = vmatprep.subr.bf16.mxu0 0
    %2246 = vmatpush2.bf16.msra.mxu0 0
    %2247 = vmatprep.subr.bf16.mxu0 0
    %2248 = vmatpush2.bf16.msra.mxu0 0
    %2249 = vmatprep.mubr.bf16.mxu0 0
    %2250 = vmatmul.mubr.bf16.gmra.mxu0 %v2115
    %v2251 = vpop.f32.mrf.mxu0
    %v2252 = vadd.f32 %v2052, %v2251
    %v2253 = vpop.f32.mrf.mxu0
    %v2254 = vpop.f32.mrf.mxu0
    %v2255 = vpop.f32.mrf.mxu0
    %2256 = vdwg.mxu0
    %v2258 = vrot.slane %v2252, 6
    %v2260 = vmul.f32 %v2206, %v2258
    %v2261 = vadd.f32 %v1924, %v2260
    %v2262 = vtanh.pop %v2261
    %v2263 = vsub.f32 1.0, %v2216
    %v2264 = vmul.f32 %v2263, %v2262
    %v2266 = vrot.slane %v2112, 6
    %v2268 = vmul.f32 %v2216, %v2266
    %v2269 = vadd.f32 %v2264, %v2268
    %v2270 = vpack.c.bf16 %v2269, %v2269
    %v2272 = vrot.slane %v2270, 1
    %v2274 = vsel %vm437, %v2272, 0
    %2276 = vmatprep.subr.bf16.mxu0 0
    %2277 = vmatpush1.bf16.msra.mxu0 0
    %2278 = vmatprep.subr.bf16.mxu0 0
    %2279 = vmatpush1.bf16.msra.mxu0 0
    %2280 = vmatprep.subr.bf16.mxu0 0
    %2281 = vmatpush1.bf16.msra.mxu0 0
    %2282 = vmatprep.subr.bf16.mxu0 0
    %2283 = vmatpush1.bf16.msra.mxu0 0
    %2284 = vmatprep.subr.bf16.mxu0 0
    %2285 = vmatpush1.bf16.msra.mxu0 0
    %2286 = vmatprep.subr.bf16.mxu0 0
    %2287 = vmatpush1.bf16.msra.mxu0 0
    %2288 = vmatprep.subr.bf16.mxu0 0
    %2289 = vmatpush1.bf16.msra.mxu0 %v1939
    %2290 = vmatprep.subr.bf16.mxu0 0
    %2291 = vmatpush1.bf16.msra.mxu0 %v1938
    %2292 = vmatprep.subr.bf16.mxu0 0
    %2293 = vmatpush2.bf16.msra.mxu0 0
    %2294 = vmatprep.subr.bf16.mxu0 0
    %2295 = vmatpush2.bf16.msra.mxu0 0
    %2296 = vmatprep.subr.bf16.mxu0 0
    %2297 = vmatpush2.bf16.msra.mxu0 0
    %2298 = vmatprep.subr.bf16.mxu0 0
    %2299 = vmatpush2.bf16.msra.mxu0 0
    %2300 = vmatprep.subr.bf16.mxu0 0
    %2301 = vmatpush2.bf16.msra.mxu0 0
    %2302 = vmatprep.subr.bf16.mxu0 0
    %2303 = vmatpush2.bf16.msra.mxu0 0
    %2304 = vmatprep.subr.bf16.mxu0 0
    %2305 = vmatpush2.bf16.msra.mxu0 0
    %2306 = vmatprep.subr.bf16.mxu0 0
    %2307 = vmatpush2.bf16.msra.mxu0 0
    %2308 = vmatprep.mubr.bf16.mxu0 0
    %2309 = vmatmul.mubr.bf16.gmra.mxu0 %v2274
    %v2310 = vpop.f32.mrf.mxu0
    %v2311 = vadd.f32 0.0, %v2310
    %v2312 = vpop.f32.mrf.mxu0
    %v2313 = vpop.f32.mrf.mxu0
    %v2314 = vpop.f32.mrf.mxu0
    %2315 = vdwg.mxu0
    %2316 = vmatprep.subr.bf16.mxu0 0
    %2317 = vmatpush1.bf16.msra.mxu0 0
    %2318 = vmatprep.subr.bf16.mxu0 0
    %2319 = vmatpush1.bf16.msra.mxu0 0
    %2320 = vmatprep.subr.bf16.mxu0 0
    %2321 = vmatpush1.bf16.msra.mxu0 0
    %2322 = vmatprep.subr.bf16.mxu0 0
    %2323 = vmatpush1.bf16.msra.mxu0 0
    %2324 = vmatprep.subr.bf16.mxu0 0
    %2325 = vmatpush1.bf16.msra.mxu0 0
    %2326 = vmatprep.subr.bf16.mxu0 0
    %2327 = vmatpush1.bf16.msra.mxu0 0
    %2328 = vmatprep.subr.bf16.mxu0 0
    %2329 = vmatpush1.bf16.msra.mxu0 %v1991
    %2330 = vmatprep.subr.bf16.mxu0 0
    %2331 = vmatpush1.bf16.msra.mxu0 %v1990
    %2332 = vmatprep.subr.bf16.mxu0 0
    %2333 = vmatpush2.bf16.msra.mxu0 0
    %2334 = vmatprep.subr.bf16.mxu0 0
    %2335 = vmatpush2.bf16.msra.mxu0 0
    %2336 = vmatprep.subr.bf16.mxu0 0
    %2337 = vmatpush2.bf16.msra.mxu0 0
    %2338 = vmatprep.subr.bf16.mxu0 0
    %2339 = vmatpush2.bf16.msra.mxu0 0
    %2340 = vmatprep.subr.bf16.mxu0 0
    %2341 = vmatpush2.bf16.msra.mxu0 0
    %2342 = vmatprep.subr.bf16.mxu0 0
    %2343 = vmatpush2.bf16.msra.mxu0 0
    %2344 = vmatprep.subr.bf16.mxu0 0
    %2345 = vmatpush2.bf16.msra.mxu0 0
    %2346 = vmatprep.subr.bf16.mxu0 0
    %2347 = vmatpush2.bf16.msra.mxu0 0
    %2348 = vmatprep.mubr.bf16.mxu0 0
    %2349 = vmatmul.mubr.bf16.gmra.mxu0 %v2274
    %v2350 = vpop.f32.mrf.mxu0
    %v2351 = vadd.f32 0.0, %v2350
    %v2352 = vpop.f32.mrf.mxu0
    %v2353 = vpop.f32.mrf.mxu0
    %v2354 = vpop.f32.mrf.mxu0
    %2355 = vdwg.mxu0
    %v2357 = vrot.slane %v2311, 4
    %v2359 = vadd.f32 %v1806, %v2357
    %v2360 = vxor.u32 %v2359, 2147483648
    %v2361 = vmul.f32 %v2360, 1.442695
    %v2362 = vpow.pop %v2361
    %v2363 = vadd.f32 %v2362, 1.0
    %v2364 = vrcp.pop %v2363
    %v2365 = vmul.f32 1.0, %v2364
    %v2367 = vrot.slane %v2351, 4
    %v2369 = vadd.f32 %v1865, %v2367
    %v2370 = vxor.u32 %v2369, 2147483648
    %v2371 = vmul.f32 %v2370, 1.442695
    %v2372 = vpow.pop %v2371
    %v2373 = vadd.f32 %v2372, 1.0
    %v2374 = vrcp.pop %v2373
    %v2375 = vmul.f32 1.0, %v2374
    %2376 = vmatprep.subr.bf16.mxu0 0
    %2377 = vmatpush1.bf16.msra.mxu0 0
    %2378 = vmatprep.subr.bf16.mxu0 0
    %2379 = vmatpush1.bf16.msra.mxu0 0
    %2380 = vmatprep.subr.bf16.mxu0 0
    %2381 = vmatpush1.bf16.msra.mxu0 0
    %2382 = vmatprep.subr.bf16.mxu0 0
    %2383 = vmatpush1.bf16.msra.mxu0 0
    %2384 = vmatprep.subr.bf16.mxu0 0
    %2385 = vmatpush1.bf16.msra.mxu0 0
    %2386 = vmatprep.subr.bf16.mxu0 0
    %2387 = vmatpush1.bf16.msra.mxu0 0
    %2388 = vmatprep.subr.bf16.mxu0 0
    %2389 = vmatpush1.bf16.msra.mxu0 %v2063
    %2390 = vmatprep.subr.bf16.mxu0 0
    %2391 = vmatpush1.bf16.msra.mxu0 %v2062
    %2392 = vmatprep.subr.bf16.mxu0 0
    %2393 = vmatpush2.bf16.msra.mxu0 0
    %2394 = vmatprep.subr.bf16.mxu0 0
    %2395 = vmatpush2.bf16.msra.mxu0 0
    %2396 = vmatprep.subr.bf16.mxu0 0
    %2397 = vmatpush2.bf16.msra.mxu0 0
    %2398 = vmatprep.subr.bf16.mxu0 0
    %2399 = vmatpush2.bf16.msra.mxu0 0
    %2400 = vmatprep.subr.bf16.mxu0 0
    %2401 = vmatpush2.bf16.msra.mxu0 0
    %2402 = vmatprep.subr.bf16.mxu0 0
    %2403 = vmatpush2.bf16.msra.mxu0 0
    %2404 = vmatprep.subr.bf16.mxu0 0
    %2405 = vmatpush2.bf16.msra.mxu0 0
    %2406 = vmatprep.subr.bf16.mxu0 0
    %2407 = vmatpush2.bf16.msra.mxu0 0
    %2408 = vmatprep.mubr.bf16.mxu0 0
    %2409 = vmatmul.mubr.bf16.gmra.mxu0 %v2274
    %v2410 = vpop.f32.mrf.mxu0
    %v2411 = vadd.f32 %v2052, %v2410
    %v2412 = vpop.f32.mrf.mxu0
    %v2413 = vpop.f32.mrf.mxu0
    %v2414 = vpop.f32.mrf.mxu0
    %2415 = vdwg.mxu0
    %v2417 = vrot.slane %v2411, 4
    %v2419 = vmul.f32 %v2365, %v2417
    %v2420 = vadd.f32 %v1924, %v2419
    %v2421 = vtanh.pop %v2420
    %v2422 = vsub.f32 1.0, %v2375
    %v2423 = vmul.f32 %v2422, %v2421
    %v2425 = vrot.slane %v2269, 6
    %v2427 = vmul.f32 %v2375, %v2425
    %v2428 = vadd.f32 %v2423, %v2427
    %v2429 = vpack.c.bf16 %v2428, %v2428
    %v2431 = vrot.slane %v2429, 2
    %v2433 = vsel %vm437, %v2431, 0
    %2435 = vmatprep.subr.bf16.mxu0 0
    %2436 = vmatpush1.bf16.msra.mxu0 0
    %2437 = vmatprep.subr.bf16.mxu0 0
    %2438 = vmatpush1.bf16.msra.mxu0 0
    %2439 = vmatprep.subr.bf16.mxu0 0
    %2440 = vmatpush1.bf16.msra.mxu0 0
    %2441 = vmatprep.subr.bf16.mxu0 0
    %2442 = vmatpush1.bf16.msra.mxu0 0
    %2443 = vmatprep.subr.bf16.mxu0 0
    %2444 = vmatpush1.bf16.msra.mxu0 0
    %2445 = vmatprep.subr.bf16.mxu0 0
    %2446 = vmatpush1.bf16.msra.mxu0 0
    %2447 = vmatprep.subr.bf16.mxu0 0
    %2448 = vmatpush1.bf16.msra.mxu0 %v1939
    %2449 = vmatprep.subr.bf16.mxu0 0
    %2450 = vmatpush1.bf16.msra.mxu0 %v1938
    %2451 = vmatprep.subr.bf16.mxu0 0
    %2452 = vmatpush2.bf16.msra.mxu0 0
    %2453 = vmatprep.subr.bf16.mxu0 0
    %2454 = vmatpush2.bf16.msra.mxu0 0
    %2455 = vmatprep.subr.bf16.mxu0 0
    %2456 = vmatpush2.bf16.msra.mxu0 0
    %2457 = vmatprep.subr.bf16.mxu0 0
    %2458 = vmatpush2.bf16.msra.mxu0 0
    %2459 = vmatprep.subr.bf16.mxu0 0
    %2460 = vmatpush2.bf16.msra.mxu0 0
    %2461 = vmatprep.subr.bf16.mxu0 0
    %2462 = vmatpush2.bf16.msra.mxu0 0
    %2463 = vmatprep.subr.bf16.mxu0 0
    %2464 = vmatpush2.bf16.msra.mxu0 0
    %2465 = vmatprep.subr.bf16.mxu0 0
    %2466 = vmatpush2.bf16.msra.mxu0 0
    %2467 = vmatprep.mubr.bf16.mxu0 0
    %2468 = vmatmul.mubr.bf16.gmra.mxu0 %v2433
    %v2469 = vpop.f32.mrf.mxu0
    %v2470 = vadd.f32 0.0, %v2469
    %v2471 = vpop.f32.mrf.mxu0
    %v2472 = vpop.f32.mrf.mxu0
    %v2473 = vpop.f32.mrf.mxu0
    %2474 = vdwg.mxu0
    %2475 = vmatprep.subr.bf16.mxu0 0
    %2476 = vmatpush1.bf16.msra.mxu0 0
    %2477 = vmatprep.subr.bf16.mxu0 0
    %2478 = vmatpush1.bf16.msra.mxu0 0
    %2479 = vmatprep.subr.bf16.mxu0 0
    %2480 = vmatpush1.bf16.msra.mxu0 0
    %2481 = vmatprep.subr.bf16.mxu0 0
    %2482 = vmatpush1.bf16.msra.mxu0 0
    %2483 = vmatprep.subr.bf16.mxu0 0
    %2484 = vmatpush1.bf16.msra.mxu0 0
    %2485 = vmatprep.subr.bf16.mxu0 0
    %2486 = vmatpush1.bf16.msra.mxu0 0
    %2487 = vmatprep.subr.bf16.mxu0 0
    %2488 = vmatpush1.bf16.msra.mxu0 %v1991
    %2489 = vmatprep.subr.bf16.mxu0 0
    %2490 = vmatpush1.bf16.msra.mxu0 %v1990
    %2491 = vmatprep.subr.bf16.mxu0 0
    %2492 = vmatpush2.bf16.msra.mxu0 0
    %2493 = vmatprep.subr.bf16.mxu0 0
    %2494 = vmatpush2.bf16.msra.mxu0 0
    %2495 = vmatprep.subr.bf16.mxu0 0
    %2496 = vmatpush2.bf16.msra.mxu0 0
    %2497 = vmatprep.subr.bf16.mxu0 0
    %2498 = vmatpush2.bf16.msra.mxu0 0
    %2499 = vmatprep.subr.bf16.mxu0 0
    %2500 = vmatpush2.bf16.msra.mxu0 0
    %2501 = vmatprep.subr.bf16.mxu0 0
    %2502 = vmatpush2.bf16.msra.mxu0 0
    %2503 = vmatprep.subr.bf16.mxu0 0
    %2504 = vmatpush2.bf16.msra.mxu0 0
    %2505 = vmatprep.subr.bf16.mxu0 0
    %2506 = vmatpush2.bf16.msra.mxu0 0
    %2507 = vmatprep.mubr.bf16.mxu0 0
    %2508 = vmatmul.mubr.bf16.gmra.mxu0 %v2433
    %v2509 = vpop.f32.mrf.mxu0
    %v2510 = vadd.f32 0.0, %v2509
    %v2511 = vpop.f32.mrf.mxu0
    %v2512 = vpop.f32.mrf.mxu0
    %v2513 = vpop.f32.mrf.mxu0
    %2514 = vdwg.mxu0
    %v2516 = vrot.slane %v2470, 2
    %v2518 = vadd.f32 %v1806, %v2516
    %v2519 = vxor.u32 %v2518, 2147483648
    %v2520 = vmul.f32 %v2519, 1.442695
    %v2521 = vpow.pop %v2520
    %v2522 = vadd.f32 %v2521, 1.0
    %v2523 = vrcp.pop %v2522
    %v2524 = vmul.f32 1.0, %v2523
    %v2526 = vrot.slane %v2510, 2
    %v2528 = vadd.f32 %v1865, %v2526
    %v2529 = vxor.u32 %v2528, 2147483648
    %v2530 = vmul.f32 %v2529, 1.442695
    %v2531 = vpow.pop %v2530
    %v2532 = vadd.f32 %v2531, 1.0
    %v2533 = vrcp.pop %v2532
    %v2534 = vmul.f32 1.0, %v2533
    %2535 = vmatprep.subr.bf16.mxu0 0
    %2536 = vmatpush1.bf16.msra.mxu0 0
    %2537 = vmatprep.subr.bf16.mxu0 0
    %2538 = vmatpush1.bf16.msra.mxu0 0
    %2539 = vmatprep.subr.bf16.mxu0 0
    %2540 = vmatpush1.bf16.msra.mxu0 0
    %2541 = vmatprep.subr.bf16.mxu0 0
    %2542 = vmatpush1.bf16.msra.mxu0 0
    %2543 = vmatprep.subr.bf16.mxu0 0
    %2544 = vmatpush1.bf16.msra.mxu0 0
    %2545 = vmatprep.subr.bf16.mxu0 0
    %2546 = vmatpush1.bf16.msra.mxu0 0
    %2547 = vmatprep.subr.bf16.mxu0 0
    %2548 = vmatpush1.bf16.msra.mxu0 %v2063
    %2549 = vmatprep.subr.bf16.mxu0 0
    %2550 = vmatpush1.bf16.msra.mxu0 %v2062
    %2551 = vmatprep.subr.bf16.mxu0 0
    %2552 = vmatpush2.bf16.msra.mxu0 0
    %2553 = vmatprep.subr.bf16.mxu0 0
    %2554 = vmatpush2.bf16.msra.mxu0 0
    %2555 = vmatprep.subr.bf16.mxu0 0
    %2556 = vmatpush2.bf16.msra.mxu0 0
    %2557 = vmatprep.subr.bf16.mxu0 0
    %2558 = vmatpush2.bf16.msra.mxu0 0
    %2559 = vmatprep.subr.bf16.mxu0 0
    %2560 = vmatpush2.bf16.msra.mxu0 0
    %2561 = vmatprep.subr.bf16.mxu0 0
    %2562 = vmatpush2.bf16.msra.mxu0 0
    %2563 = vmatprep.subr.bf16.mxu0 0
    %2564 = vmatpush2.bf16.msra.mxu0 0
    %2565 = vmatprep.subr.bf16.mxu0 0
    %2566 = vmatpush2.bf16.msra.mxu0 0
    %2567 = vmatprep.mubr.bf16.mxu0 0
    %2568 = vmatmul.mubr.bf16.gmra.mxu0 %v2433
    %v2569 = vpop.f32.mrf.mxu0
    %v2570 = vadd.f32 %v2052, %v2569
    %v2571 = vpop.f32.mrf.mxu0
    %v2572 = vpop.f32.mrf.mxu0
    %v2573 = vpop.f32.mrf.mxu0
    %2574 = vdwg.mxu0
    %v2576 = vrot.slane %v2570, 2
    %v2578 = vmul.f32 %v2524, %v2576
    %v2579 = vadd.f32 %v1924, %v2578
    %v2580 = vtanh.pop %v2579
    %v2581 = vsub.f32 1.0, %v2534
    %v2582 = vmul.f32 %v2581, %v2580
    %v2584 = vrot.slane %v2428, 6
    %v2586 = vmul.f32 %v2534, %v2584
    %v2587 = vadd.f32 %v2582, %v2586
    %v2588 = vpack.c.bf16 %v2587, %v2587
    %v2590 = vrot.slane %v2588, 3
    %v2592 = vsel %vm437, %v2590, 0
    %2594 = vmatprep.subr.bf16.mxu0 0
    %2595 = vmatpush1.bf16.msra.mxu0 0
    %2596 = vmatprep.subr.bf16.mxu0 0
    %2597 = vmatpush1.bf16.msra.mxu0 0
    %2598 = vmatprep.subr.bf16.mxu0 0
    %2599 = vmatpush1.bf16.msra.mxu0 0
    %2600 = vmatprep.subr.bf16.mxu0 0
    %2601 = vmatpush1.bf16.msra.mxu0 0
    %2602 = vmatprep.subr.bf16.mxu0 0
    %2603 = vmatpush1.bf16.msra.mxu0 0
    %2604 = vmatprep.subr.bf16.mxu0 0
    %2605 = vmatpush1.bf16.msra.mxu0 0
    %2606 = vmatprep.subr.bf16.mxu0 0
    %2607 = vmatpush1.bf16.msra.mxu0 %v1939
    %2608 = vmatprep.subr.bf16.mxu0 0
    %2609 = vmatpush1.bf16.msra.mxu0 %v1938
    %2610 = vmatprep.subr.bf16.mxu0 0
    %2611 = vmatpush2.bf16.msra.mxu0 0
    %2612 = vmatprep.subr.bf16.mxu0 0
    %2613 = vmatpush2.bf16.msra.mxu0 0
    %2614 = vmatprep.subr.bf16.mxu0 0
    %2615 = vmatpush2.bf16.msra.mxu0 0
    %2616 = vmatprep.subr.bf16.mxu0 0
    %2617 = vmatpush2.bf16.msra.mxu0 0
    %2618 = vmatprep.subr.bf16.mxu0 0
    %2619 = vmatpush2.bf16.msra.mxu0 0
    %2620 = vmatprep.subr.bf16.mxu0 0
    %2621 = vmatpush2.bf16.msra.mxu0 0
    %2622 = vmatprep.subr.bf16.mxu0 0
    %2623 = vmatpush2.bf16.msra.mxu0 0
    %2624 = vmatprep.subr.bf16.mxu0 0
    %2625 = vmatpush2.bf16.msra.mxu0 0
    %2626 = vmatprep.mubr.bf16.mxu0 0
    %2627 = vmatmul.mubr.bf16.gmra.mxu0 %v2592
    %v2628 = vpop.f32.mrf.mxu0
    %v2629 = vadd.f32 0.0, %v2628
    %v2630 = vpop.f32.mrf.mxu0
    %v2631 = vpop.f32.mrf.mxu0
    %v2632 = vpop.f32.mrf.mxu0
    %2633 = vdwg.mxu0
    %2634 = vmatprep.subr.bf16.mxu0 0
    %2635 = vmatpush1.bf16.msra.mxu0 0
    %2636 = vmatprep.subr.bf16.mxu0 0
    %2637 = vmatpush1.bf16.msra.mxu0 0
    %2638 = vmatprep.subr.bf16.mxu0 0
    %2639 = vmatpush1.bf16.msra.mxu0 0
    %2640 = vmatprep.subr.bf16.mxu0 0
    %2641 = vmatpush1.bf16.msra.mxu0 0
    %2642 = vmatprep.subr.bf16.mxu0 0
    %2643 = vmatpush1.bf16.msra.mxu0 0
    %2644 = vmatprep.subr.bf16.mxu0 0
    %2645 = vmatpush1.bf16.msra.mxu0 0
    %2646 = vmatprep.subr.bf16.mxu0 0
    %2647 = vmatpush1.bf16.msra.mxu0 %v1991
    %2648 = vmatprep.subr.bf16.mxu0 0
    %2649 = vmatpush1.bf16.msra.mxu0 %v1990
    %2650 = vmatprep.subr.bf16.mxu0 0
    %2651 = vmatpush2.bf16.msra.mxu0 0
    %2652 = vmatprep.subr.bf16.mxu0 0
    %2653 = vmatpush2.bf16.msra.mxu0 0
    %2654 = vmatprep.subr.bf16.mxu0 0
    %2655 = vmatpush2.bf16.msra.mxu0 0
    %2656 = vmatprep.subr.bf16.mxu0 0
    %2657 = vmatpush2.bf16.msra.mxu0 0
    %2658 = vmatprep.subr.bf16.mxu0 0
    %2659 = vmatpush2.bf16.msra.mxu0 0
    %2660 = vmatprep.subr.bf16.mxu0 0
    %2661 = vmatpush2.bf16.msra.mxu0 0
    %2662 = vmatprep.subr.bf16.mxu0 0
    %2663 = vmatpush2.bf16.msra.mxu0 0
    %2664 = vmatprep.subr.bf16.mxu0 0
    %2665 = vmatpush2.bf16.msra.mxu0 0
    %2666 = vmatprep.mubr.bf16.mxu0 0
    %2667 = vmatmul.mubr.bf16.gmra.mxu0 %v2592
    %v2668 = vpop.f32.mrf.mxu0
    %v2669 = vadd.f32 0.0, %v2668
    %v2670 = vpop.f32.mrf.mxu0
    %v2671 = vpop.f32.mrf.mxu0
    %v2672 = vpop.f32.mrf.mxu0
    %2673 = vdwg.mxu0
    %v2674 = vadd.f32 %v1809, %v2629
    %v2675 = vxor.u32 %v2674, 2147483648
    %v2676 = vmul.f32 %v2675, 1.442695
    %v2677 = vpow.pop %v2676
    %v2678 = vadd.f32 %v2677, 1.0
    %v2679 = vrcp.pop %v2678
    %v2680 = vmul.f32 1.0, %v2679
    %v2681 = vadd.f32 %v1868, %v2669
    %v2682 = vxor.u32 %v2681, 2147483648
    %v2683 = vmul.f32 %v2682, 1.442695
    %v2684 = vpow.pop %v2683
    %v2685 = vadd.f32 %v2684, 1.0
    %v2686 = vrcp.pop %v2685
    %v2687 = vmul.f32 1.0, %v2686
    %2688 = vmatprep.subr.bf16.mxu0 0
    %2689 = vmatpush1.bf16.msra.mxu0 0
    %2690 = vmatprep.subr.bf16.mxu0 0
    %2691 = vmatpush1.bf16.msra.mxu0 0
    %2692 = vmatprep.subr.bf16.mxu0 0
    %2693 = vmatpush1.bf16.msra.mxu0 0
    %2694 = vmatprep.subr.bf16.mxu0 0
    %2695 = vmatpush1.bf16.msra.mxu0 0
    %2696 = vmatprep.subr.bf16.mxu0 0
    %2697 = vmatpush1.bf16.msra.mxu0 0
    %2698 = vmatprep.subr.bf16.mxu0 0
    %2699 = vmatpush1.bf16.msra.mxu0 0
    %2700 = vmatprep.subr.bf16.mxu0 0
    %2701 = vmatpush1.bf16.msra.mxu0 %v2063
    %2702 = vmatprep.subr.bf16.mxu0 0
    %2703 = vmatpush1.bf16.msra.mxu0 %v2062
    %2704 = vmatprep.subr.bf16.mxu0 0
    %2705 = vmatpush2.bf16.msra.mxu0 0
    %2706 = vmatprep.subr.bf16.mxu0 0
    %2707 = vmatpush2.bf16.msra.mxu0 0
    %2708 = vmatprep.subr.bf16.mxu0 0
    %2709 = vmatpush2.bf16.msra.mxu0 0
    %2710 = vmatprep.subr.bf16.mxu0 0
    %2711 = vmatpush2.bf16.msra.mxu0 0
    %2712 = vmatprep.subr.bf16.mxu0 0
    %2713 = vmatpush2.bf16.msra.mxu0 0
    %2714 = vmatprep.subr.bf16.mxu0 0
    %2715 = vmatpush2.bf16.msra.mxu0 0
    %2716 = vmatprep.subr.bf16.mxu0 0
    %2717 = vmatpush2.bf16.msra.mxu0 0
    %2718 = vmatprep.subr.bf16.mxu0 0
    %2719 = vmatpush2.bf16.msra.mxu0 0
    %2720 = vmatprep.mubr.bf16.mxu0 0
    %2721 = vmatmul.mubr.bf16.gmra.mxu0 %v2592
    %v2722 = vpop.f32.mrf.mxu0
    %v2723 = vadd.f32 %v2052, %v2722
    %v2724 = vpop.f32.mrf.mxu0
    %v2725 = vpop.f32.mrf.mxu0
    %v2726 = vpop.f32.mrf.mxu0
    %2727 = vdwg.mxu0
    %v2728 = vmul.f32 %v2680, %v2723
    %v2729 = vadd.f32 %v1927, %v2728
    %v2730 = vtanh.pop %v2729
    %v2731 = vsub.f32 1.0, %v2687
    %v2732 = vmul.f32 %v2731, %v2730
    %v2734 = vrot.slane %v2587, 6
    %v2736 = vmul.f32 %v2687, %v2734
    %v2737 = vadd.f32 %v2732, %v2736
    %v2738 = vpack.c.bf16 %v2737, %v2737
    %v2740 = vsel %vm437, %v2738, 0
    %2742 = vmatprep.subr.bf16.mxu0 0
    %2743 = vmatpush1.bf16.msra.mxu0 0
    %2744 = vmatprep.subr.bf16.mxu0 0
    %2745 = vmatpush1.bf16.msra.mxu0 0
    %2746 = vmatprep.subr.bf16.mxu0 0
    %2747 = vmatpush1.bf16.msra.mxu0 0
    %2748 = vmatprep.subr.bf16.mxu0 0
    %2749 = vmatpush1.bf16.msra.mxu0 0
    %2750 = vmatprep.subr.bf16.mxu0 0
    %2751 = vmatpush1.bf16.msra.mxu0 0
    %2752 = vmatprep.subr.bf16.mxu0 0
    %2753 = vmatpush1.bf16.msra.mxu0 0
    %2754 = vmatprep.subr.bf16.mxu0 0
    %2755 = vmatpush1.bf16.msra.mxu0 %v1939
    %2756 = vmatprep.subr.bf16.mxu0 0
    %2757 = vmatpush1.bf16.msra.mxu0 %v1938
    %2758 = vmatprep.subr.bf16.mxu0 0
    %2759 = vmatpush2.bf16.msra.mxu0 0
    %2760 = vmatprep.subr.bf16.mxu0 0
    %2761 = vmatpush2.bf16.msra.mxu0 0
    %2762 = vmatprep.subr.bf16.mxu0 0
    %2763 = vmatpush2.bf16.msra.mxu0 0
    %2764 = vmatprep.subr.bf16.mxu0 0
    %2765 = vmatpush2.bf16.msra.mxu0 0
    %2766 = vmatprep.subr.bf16.mxu0 0
    %2767 = vmatpush2.bf16.msra.mxu0 0
    %2768 = vmatprep.subr.bf16.mxu0 0
    %2769 = vmatpush2.bf16.msra.mxu0 0
    %2770 = vmatprep.subr.bf16.mxu0 0
    %2771 = vmatpush2.bf16.msra.mxu0 0
    %2772 = vmatprep.subr.bf16.mxu0 0
    %2773 = vmatpush2.bf16.msra.mxu0 0
    %2774 = vmatprep.mubr.bf16.mxu0 0
    %2775 = vmatmul.mubr.bf16.gmra.mxu0 %v2740
    %v2776 = vpop.f32.mrf.mxu0
    %v2777 = vadd.f32 0.0, %v2776
    %v2778 = vpop.f32.mrf.mxu0
    %v2779 = vpop.f32.mrf.mxu0
    %v2780 = vpop.f32.mrf.mxu0
    %2781 = vdwg.mxu0
    %2782 = vmatprep.subr.bf16.mxu0 0
    %2783 = vmatpush1.bf16.msra.mxu0 0
    %2784 = vmatprep.subr.bf16.mxu0 0
    %2785 = vmatpush1.bf16.msra.mxu0 0
    %2786 = vmatprep.subr.bf16.mxu0 0
    %2787 = vmatpush1.bf16.msra.mxu0 0
    %2788 = vmatprep.subr.bf16.mxu0 0
    %2789 = vmatpush1.bf16.msra.mxu0 0
    %2790 = vmatprep.subr.bf16.mxu0 0
    %2791 = vmatpush1.bf16.msra.mxu0 0
    %2792 = vmatprep.subr.bf16.mxu0 0
    %2793 = vmatpush1.bf16.msra.mxu0 0
    %2794 = vmatprep.subr.bf16.mxu0 0
    %2795 = vmatpush1.bf16.msra.mxu0 %v1991
    %2796 = vmatprep.subr.bf16.mxu0 0
    %2797 = vmatpush1.bf16.msra.mxu0 %v1990
    %2798 = vmatprep.subr.bf16.mxu0 0
    %2799 = vmatpush2.bf16.msra.mxu0 0
    %2800 = vmatprep.subr.bf16.mxu0 0
    %2801 = vmatpush2.bf16.msra.mxu0 0
    %2802 = vmatprep.subr.bf16.mxu0 0
    %2803 = vmatpush2.bf16.msra.mxu0 0
    %2804 = vmatprep.subr.bf16.mxu0 0
    %2805 = vmatpush2.bf16.msra.mxu0 0
    %2806 = vmatprep.subr.bf16.mxu0 0
    %2807 = vmatpush2.bf16.msra.mxu0 0
    %2808 = vmatprep.subr.bf16.mxu0 0
    %2809 = vmatpush2.bf16.msra.mxu0 0
    %2810 = vmatprep.subr.bf16.mxu0 0
    %2811 = vmatpush2.bf16.msra.mxu0 0
    %2812 = vmatprep.subr.bf16.mxu0 0
    %2813 = vmatpush2.bf16.msra.mxu0 0
    %2814 = vmatprep.mubr.bf16.mxu0 0
    %2815 = vmatmul.mubr.bf16.gmra.mxu0 %v2740
    %v2816 = vpop.f32.mrf.mxu0
    %v2817 = vadd.f32 0.0, %v2816
    %v2818 = vpop.f32.mrf.mxu0
    %v2819 = vpop.f32.mrf.mxu0
    %v2820 = vpop.f32.mrf.mxu0
    %2821 = vdwg.mxu0
    %v2823 = vrot.slane %v2777, 6
    %v2825 = vadd.f32 %v1809, %v2823
    %v2826 = vxor.u32 %v2825, 2147483648
    %v2827 = vmul.f32 %v2826, 1.442695
    %v2828 = vpow.pop %v2827
    %v2829 = vadd.f32 %v2828, 1.0
    %v2830 = vrcp.pop %v2829
    %v2831 = vmul.f32 1.0, %v2830
    %v2833 = vrot.slane %v2817, 6
    %v2835 = vadd.f32 %v1868, %v2833
    %v2836 = vxor.u32 %v2835, 2147483648
    %v2837 = vmul.f32 %v2836, 1.442695
    %v2838 = vpow.pop %v2837
    %v2839 = vadd.f32 %v2838, 1.0
    %v2840 = vrcp.pop %v2839
    %v2841 = vmul.f32 1.0, %v2840
    %2842 = vmatprep.subr.bf16.mxu0 0
    %2843 = vmatpush1.bf16.msra.mxu0 0
    %2844 = vmatprep.subr.bf16.mxu0 0
    %2845 = vmatpush1.bf16.msra.mxu0 0
    %2846 = vmatprep.subr.bf16.mxu0 0
    %2847 = vmatpush1.bf16.msra.mxu0 0
    %2848 = vmatprep.subr.bf16.mxu0 0
    %2849 = vmatpush1.bf16.msra.mxu0 0
    %2850 = vmatprep.subr.bf16.mxu0 0
    %2851 = vmatpush1.bf16.msra.mxu0 0
    %2852 = vmatprep.subr.bf16.mxu0 0
    %2853 = vmatpush1.bf16.msra.mxu0 0
    %2854 = vmatprep.subr.bf16.mxu0 0
    %2855 = vmatpush1.bf16.msra.mxu0 %v2063
    %2856 = vmatprep.subr.bf16.mxu0 0
    %2857 = vmatpush1.bf16.msra.mxu0 %v2062
    %2858 = vmatprep.subr.bf16.mxu0 0
    %2859 = vmatpush2.bf16.msra.mxu0 0
    %2860 = vmatprep.subr.bf16.mxu0 0
    %2861 = vmatpush2.bf16.msra.mxu0 0
    %2862 = vmatprep.subr.bf16.mxu0 0
    %2863 = vmatpush2.bf16.msra.mxu0 0
    %2864 = vmatprep.subr.bf16.mxu0 0
    %2865 = vmatpush2.bf16.msra.mxu0 0
    %2866 = vmatprep.subr.bf16.mxu0 0
    %2867 = vmatpush2.bf16.msra.mxu0 0
    %2868 = vmatprep.subr.bf16.mxu0 0
    %2869 = vmatpush2.bf16.msra.mxu0 0
    %2870 = vmatprep.subr.bf16.mxu0 0
    %2871 = vmatpush2.bf16.msra.mxu0 0
    %2872 = vmatprep.subr.bf16.mxu0 0
    %2873 = vmatpush2.bf16.msra.mxu0 0
    %2874 = vmatprep.mubr.bf16.mxu0 0
    %2875 = vmatmul.mubr.bf16.gmra.mxu0 %v2740
    %v2876 = vpop.f32.mrf.mxu0
    %v2877 = vadd.f32 %v2052, %v2876
    %v2878 = vpop.f32.mrf.mxu0
    %v2879 = vpop.f32.mrf.mxu0
    %v2880 = vpop.f32.mrf.mxu0
    %2881 = vdwg.mxu0
    %v2883 = vrot.slane %v2877, 6
    %v2885 = vmul.f32 %v2831, %v2883
    %v2886 = vadd.f32 %v1927, %v2885
    %v2887 = vtanh.pop %v2886
    %v2888 = vsub.f32 1.0, %v2841
    %v2889 = vmul.f32 %v2888, %v2887
    %v2891 = vrot.slane %v2737, 6
    %v2893 = vmul.f32 %v2841, %v2891
    %v2894 = vadd.f32 %v2889, %v2893
    %v2895 = vpack.c.bf16 %v2894, %v2894
    %v2897 = vrot.slane %v2895, 1
    %v2899 = vsel %vm437, %v2897, 0
    %2901 = vmatprep.subr.bf16.mxu0 0
    %2902 = vmatpush1.bf16.msra.mxu0 0
    %2903 = vmatprep.subr.bf16.mxu0 0
    %2904 = vmatpush1.bf16.msra.mxu0 0
    %2905 = vmatprep.subr.bf16.mxu0 0
    %2906 = vmatpush1.bf16.msra.mxu0 0
    %2907 = vmatprep.subr.bf16.mxu0 0
    %2908 = vmatpush1.bf16.msra.mxu0 0
    %2909 = vmatprep.subr.bf16.mxu0 0
    %2910 = vmatpush1.bf16.msra.mxu0 0
    %2911 = vmatprep.subr.bf16.mxu0 0
    %2912 = vmatpush1.bf16.msra.mxu0 0
    %2913 = vmatprep.subr.bf16.mxu0 0
    %2914 = vmatpush1.bf16.msra.mxu0 %v1939
    %2915 = vmatprep.subr.bf16.mxu0 0
    %2916 = vmatpush1.bf16.msra.mxu0 %v1938
    %2917 = vmatprep.subr.bf16.mxu0 0
    %2918 = vmatpush2.bf16.msra.mxu0 0
    %2919 = vmatprep.subr.bf16.mxu0 0
    %2920 = vmatpush2.bf16.msra.mxu0 0
    %2921 = vmatprep.subr.bf16.mxu0 0
    %2922 = vmatpush2.bf16.msra.mxu0 0
    %2923 = vmatprep.subr.bf16.mxu0 0
    %2924 = vmatpush2.bf16.msra.mxu0 0
    %2925 = vmatprep.subr.bf16.mxu0 0
    %2926 = vmatpush2.bf16.msra.mxu0 0
    %2927 = vmatprep.subr.bf16.mxu0 0
    %2928 = vmatpush2.bf16.msra.mxu0 0
    %2929 = vmatprep.subr.bf16.mxu0 0
    %2930 = vmatpush2.bf16.msra.mxu0 0
    %2931 = vmatprep.subr.bf16.mxu0 0
    %2932 = vmatpush2.bf16.msra.mxu0 0
    %2933 = vmatprep.mubr.bf16.mxu0 0
    %2934 = vmatmul.mubr.bf16.gmra.mxu0 %v2899
    %v2935 = vpop.f32.mrf.mxu0
    %v2936 = vadd.f32 0.0, %v2935
    %v2937 = vpop.f32.mrf.mxu0
    %v2938 = vpop.f32.mrf.mxu0
    %v2939 = vpop.f32.mrf.mxu0
    %2940 = vdwg.mxu0
    %2941 = vmatprep.subr.bf16.mxu0 0
    %2942 = vmatpush1.bf16.msra.mxu0 0
    %2943 = vmatprep.subr.bf16.mxu0 0
    %2944 = vmatpush1.bf16.msra.mxu0 0
    %2945 = vmatprep.subr.bf16.mxu0 0
    %2946 = vmatpush1.bf16.msra.mxu0 0
    %2947 = vmatprep.subr.bf16.mxu0 0
    %2948 = vmatpush1.bf16.msra.mxu0 0
    %2949 = vmatprep.subr.bf16.mxu0 0
    %2950 = vmatpush1.bf16.msra.mxu0 0
    %2951 = vmatprep.subr.bf16.mxu0 0
    %2952 = vmatpush1.bf16.msra.mxu0 0
    %2953 = vmatprep.subr.bf16.mxu0 0
    %2954 = vmatpush1.bf16.msra.mxu0 %v1991
    %2955 = vmatprep.subr.bf16.mxu0 0
    %2956 = vmatpush1.bf16.msra.mxu0 %v1990
    %2957 = vmatprep.subr.bf16.mxu0 0
    %2958 = vmatpush2.bf16.msra.mxu0 0
    %2959 = vmatprep.subr.bf16.mxu0 0
    %2960 = vmatpush2.bf16.msra.mxu0 0
    %2961 = vmatprep.subr.bf16.mxu0 0
    %2962 = vmatpush2.bf16.msra.mxu0 0
    %2963 = vmatprep.subr.bf16.mxu0 0
    %2964 = vmatpush2.bf16.msra.mxu0 0
    %2965 = vmatprep.subr.bf16.mxu0 0
    %2966 = vmatpush2.bf16.msra.mxu0 0
    %2967 = vmatprep.subr.bf16.mxu0 0
    %2968 = vmatpush2.bf16.msra.mxu0 0
    %2969 = vmatprep.subr.bf16.mxu0 0
    %2970 = vmatpush2.bf16.msra.mxu0 0
    %2971 = vmatprep.subr.bf16.mxu0 0
    %2972 = vmatpush2.bf16.msra.mxu0 0
    %2973 = vmatprep.mubr.bf16.mxu0 0
    %2974 = vmatmul.mubr.bf16.gmra.mxu0 %v2899
    %v2975 = vpop.f32.mrf.mxu0
    %v2976 = vadd.f32 0.0, %v2975
    %v2977 = vpop.f32.mrf.mxu0
    %v2978 = vpop.f32.mrf.mxu0
    %v2979 = vpop.f32.mrf.mxu0
    %2980 = vdwg.mxu0
    %v2982 = vrot.slane %v2936, 4
    %v2984 = vadd.f32 %v1809, %v2982
    %v2985 = vxor.u32 %v2984, 2147483648
    %v2986 = vmul.f32 %v2985, 1.442695
    %v2987 = vpow.pop %v2986
    %v2988 = vadd.f32 %v2987, 1.0
    %v2989 = vrcp.pop %v2988
    %v2990 = vmul.f32 1.0, %v2989
    %v2992 = vrot.slane %v2976, 4
    %v2994 = vadd.f32 %v1868, %v2992
    %v2995 = vxor.u32 %v2994, 2147483648
    %v2996 = vmul.f32 %v2995, 1.442695
    %v2997 = vpow.pop %v2996
    %v2998 = vadd.f32 %v2997, 1.0
    %v2999 = vrcp.pop %v2998
    %v3000 = vmul.f32 1.0, %v2999
    %3001 = vmatprep.subr.bf16.mxu0 0
    %3002 = vmatpush1.bf16.msra.mxu0 0
    %3003 = vmatprep.subr.bf16.mxu0 0
    %3004 = vmatpush1.bf16.msra.mxu0 0
    %3005 = vmatprep.subr.bf16.mxu0 0
    %3006 = vmatpush1.bf16.msra.mxu0 0
    %3007 = vmatprep.subr.bf16.mxu0 0
    %3008 = vmatpush1.bf16.msra.mxu0 0
    %3009 = vmatprep.subr.bf16.mxu0 0
    %3010 = vmatpush1.bf16.msra.mxu0 0
    %3011 = vmatprep.subr.bf16.mxu0 0
    %3012 = vmatpush1.bf16.msra.mxu0 0
    %3013 = vmatprep.subr.bf16.mxu0 0
    %3014 = vmatpush1.bf16.msra.mxu0 %v2063
    %3015 = vmatprep.subr.bf16.mxu0 0
    %3016 = vmatpush1.bf16.msra.mxu0 %v2062
    %3017 = vmatprep.subr.bf16.mxu0 0
    %3018 = vmatpush2.bf16.msra.mxu0 0
    %3019 = vmatprep.subr.bf16.mxu0 0
    %3020 = vmatpush2.bf16.msra.mxu0 0
    %3021 = vmatprep.subr.bf16.mxu0 0
    %3022 = vmatpush2.bf16.msra.mxu0 0
    %3023 = vmatprep.subr.bf16.mxu0 0
    %3024 = vmatpush2.bf16.msra.mxu0 0
    %3025 = vmatprep.subr.bf16.mxu0 0
    %3026 = vmatpush2.bf16.msra.mxu0 0
    %3027 = vmatprep.subr.bf16.mxu0 0
    %3028 = vmatpush2.bf16.msra.mxu0 0
    %3029 = vmatprep.subr.bf16.mxu0 0
    %3030 = vmatpush2.bf16.msra.mxu0 0
    %3031 = vmatprep.subr.bf16.mxu0 0
    %3032 = vmatpush2.bf16.msra.mxu0 0
    %3033 = vmatprep.mubr.bf16.mxu0 0
    %3034 = vmatmul.mubr.bf16.gmra.mxu0 %v2899
    %v3035 = vpop.f32.mrf.mxu0
    %v3036 = vadd.f32 %v2052, %v3035
    %v3037 = vpop.f32.mrf.mxu0
    %v3038 = vpop.f32.mrf.mxu0
    %v3039 = vpop.f32.mrf.mxu0
    %3040 = vdwg.mxu0
    %v3042 = vrot.slane %v3036, 4
    %v3044 = vmul.f32 %v2990, %v3042
    %v3045 = vadd.f32 %v1927, %v3044
    %v3046 = vtanh.pop %v3045
    %v3047 = vsub.f32 1.0, %v3000
    %v3048 = vmul.f32 %v3047, %v3046
    %v3050 = vrot.slane %v2894, 6
    %v3052 = vmul.f32 %v3000, %v3050
    %v3053 = vadd.f32 %v3048, %v3052
    %v3054 = vpack.c.bf16 %v3053, %v3053
    %v3056 = vrot.slane %v3054, 2
    %v3058 = vsel %vm437, %v3056, 0
    %3060 = vmatprep.subr.bf16.mxu0 0
    %3061 = vmatpush1.bf16.msra.mxu0 0
    %3062 = vmatprep.subr.bf16.mxu0 0
    %3063 = vmatpush1.bf16.msra.mxu0 0
    %3064 = vmatprep.subr.bf16.mxu0 0
    %3065 = vmatpush1.bf16.msra.mxu0 0
    %3066 = vmatprep.subr.bf16.mxu0 0
    %3067 = vmatpush1.bf16.msra.mxu0 0
    %3068 = vmatprep.subr.bf16.mxu0 0
    %3069 = vmatpush1.bf16.msra.mxu0 0
    %3070 = vmatprep.subr.bf16.mxu0 0
    %3071 = vmatpush1.bf16.msra.mxu0 0
    %3072 = vmatprep.subr.bf16.mxu0 0
    %3073 = vmatpush1.bf16.msra.mxu0 %v1939
    %3074 = vmatprep.subr.bf16.mxu0 0
    %3075 = vmatpush1.bf16.msra.mxu0 %v1938
    %3076 = vmatprep.subr.bf16.mxu0 0
    %3077 = vmatpush2.bf16.msra.mxu0 0
    %3078 = vmatprep.subr.bf16.mxu0 0
    %3079 = vmatpush2.bf16.msra.mxu0 0
    %3080 = vmatprep.subr.bf16.mxu0 0
    %3081 = vmatpush2.bf16.msra.mxu0 0
    %3082 = vmatprep.subr.bf16.mxu0 0
    %3083 = vmatpush2.bf16.msra.mxu0 0
    %3084 = vmatprep.subr.bf16.mxu0 0
    %3085 = vmatpush2.bf16.msra.mxu0 0
    %3086 = vmatprep.subr.bf16.mxu0 0
    %3087 = vmatpush2.bf16.msra.mxu0 0
    %3088 = vmatprep.subr.bf16.mxu0 0
    %3089 = vmatpush2.bf16.msra.mxu0 0
    %3090 = vmatprep.subr.bf16.mxu0 0
    %3091 = vmatpush2.bf16.msra.mxu0 0
    %3092 = vmatprep.mubr.bf16.mxu0 0
    %3093 = vmatmul.mubr.bf16.gmra.mxu0 %v3058
    %v3094 = vpop.f32.mrf.mxu0
    %v3095 = vadd.f32 0.0, %v3094
    %v3096 = vpop.f32.mrf.mxu0
    %v3097 = vpop.f32.mrf.mxu0
    %v3098 = vpop.f32.mrf.mxu0
    %3099 = vdwg.mxu0
    %3100 = vmatprep.subr.bf16.mxu0 0
    %3101 = vmatpush1.bf16.msra.mxu0 0
    %3102 = vmatprep.subr.bf16.mxu0 0
    %3103 = vmatpush1.bf16.msra.mxu0 0
    %3104 = vmatprep.subr.bf16.mxu0 0
    %3105 = vmatpush1.bf16.msra.mxu0 0
    %3106 = vmatprep.subr.bf16.mxu0 0
    %3107 = vmatpush1.bf16.msra.mxu0 0
    %3108 = vmatprep.subr.bf16.mxu0 0
    %3109 = vmatpush1.bf16.msra.mxu0 0
    %3110 = vmatprep.subr.bf16.mxu0 0
    %3111 = vmatpush1.bf16.msra.mxu0 0
    %3112 = vmatprep.subr.bf16.mxu0 0
    %3113 = vmatpush1.bf16.msra.mxu0 %v1991
    %3114 = vmatprep.subr.bf16.mxu0 0
    %3115 = vmatpush1.bf16.msra.mxu0 %v1990
    %3116 = vmatprep.subr.bf16.mxu0 0
    %3117 = vmatpush2.bf16.msra.mxu0 0
    %3118 = vmatprep.subr.bf16.mxu0 0
    %3119 = vmatpush2.bf16.msra.mxu0 0
    %3120 = vmatprep.subr.bf16.mxu0 0
    %3121 = vmatpush2.bf16.msra.mxu0 0
    %3122 = vmatprep.subr.bf16.mxu0 0
    %3123 = vmatpush2.bf16.msra.mxu0 0
    %3124 = vmatprep.subr.bf16.mxu0 0
    %3125 = vmatpush2.bf16.msra.mxu0 0
    %3126 = vmatprep.subr.bf16.mxu0 0
    %3127 = vmatpush2.bf16.msra.mxu0 0
    %3128 = vmatprep.subr.bf16.mxu0 0
    %3129 = vmatpush2.bf16.msra.mxu0 0
    %3130 = vmatprep.subr.bf16.mxu0 0
    %3131 = vmatpush2.bf16.msra.mxu0 0
    %3132 = vmatprep.mubr.bf16.mxu0 0
    %3133 = vmatmul.mubr.bf16.gmra.mxu0 %v3058
    %v3134 = vpop.f32.mrf.mxu0
    %v3135 = vadd.f32 0.0, %v3134
    %v3136 = vpop.f32.mrf.mxu0
    %v3137 = vpop.f32.mrf.mxu0
    %v3138 = vpop.f32.mrf.mxu0
    %3139 = vdwg.mxu0
    %v3141 = vrot.slane %v3095, 2
    %v3143 = vadd.f32 %v1809, %v3141
    %v3144 = vxor.u32 %v3143, 2147483648
    %v3145 = vmul.f32 %v3144, 1.442695
    %v3146 = vpow.pop %v3145
    %v3147 = vadd.f32 %v3146, 1.0
    %v3148 = vrcp.pop %v3147
    %v3149 = vmul.f32 1.0, %v3148
    %v3151 = vrot.slane %v3135, 2
    %v3153 = vadd.f32 %v1868, %v3151
    %v3154 = vxor.u32 %v3153, 2147483648
    %v3155 = vmul.f32 %v3154, 1.442695
    %v3156 = vpow.pop %v3155
    %v3157 = vadd.f32 %v3156, 1.0
    %v3158 = vrcp.pop %v3157
    %v3159 = vmul.f32 1.0, %v3158
    %3160 = vmatprep.subr.bf16.mxu0 0
    %3161 = vmatpush1.bf16.msra.mxu0 0
    %3162 = vmatprep.subr.bf16.mxu0 0
    %3163 = vmatpush1.bf16.msra.mxu0 0
    %3164 = vmatprep.subr.bf16.mxu0 0
    %3165 = vmatpush1.bf16.msra.mxu0 0
    %3166 = vmatprep.subr.bf16.mxu0 0
    %3167 = vmatpush1.bf16.msra.mxu0 0
    %3168 = vmatprep.subr.bf16.mxu0 0
    %3169 = vmatpush1.bf16.msra.mxu0 0
    %3170 = vmatprep.subr.bf16.mxu0 0
    %3171 = vmatpush1.bf16.msra.mxu0 0
    %3172 = vmatprep.subr.bf16.mxu0 0
    %3173 = vmatpush1.bf16.msra.mxu0 %v2063
    %3174 = vmatprep.subr.bf16.mxu0 0
    %3175 = vmatpush1.bf16.msra.mxu0 %v2062
    %3176 = vmatprep.subr.bf16.mxu0 0
    %3177 = vmatpush2.bf16.msra.mxu0 0
    %3178 = vmatprep.subr.bf16.mxu0 0
    %3179 = vmatpush2.bf16.msra.mxu0 0
    %3180 = vmatprep.subr.bf16.mxu0 0
    %3181 = vmatpush2.bf16.msra.mxu0 0
    %3182 = vmatprep.subr.bf16.mxu0 0
    %3183 = vmatpush2.bf16.msra.mxu0 0
    %3184 = vmatprep.subr.bf16.mxu0 0
    %3185 = vmatpush2.bf16.msra.mxu0 0
    %3186 = vmatprep.subr.bf16.mxu0 0
    %3187 = vmatpush2.bf16.msra.mxu0 0
    %3188 = vmatprep.subr.bf16.mxu0 0
    %3189 = vmatpush2.bf16.msra.mxu0 0
    %3190 = vmatprep.subr.bf16.mxu0 0
    %3191 = vmatpush2.bf16.msra.mxu0 0
    %3192 = vmatprep.mubr.bf16.mxu0 0
    %3193 = vmatmul.mubr.bf16.gmra.mxu0 %v3058
    %v3194 = vpop.f32.mrf.mxu0
    %v3195 = vadd.f32 %v2052, %v3194
    %v3196 = vpop.f32.mrf.mxu0
    %v3197 = vpop.f32.mrf.mxu0
    %v3198 = vpop.f32.mrf.mxu0
    %3199 = vdwg.mxu0
    %v3201 = vrot.slane %v3195, 2
    %v3203 = vmul.f32 %v3149, %v3201
    %v3204 = vadd.f32 %v1927, %v3203
    %v3205 = vtanh.pop %v3204
    %v3206 = vsub.f32 1.0, %v3159
    %v3207 = vmul.f32 %v3206, %v3205
    %v3209 = vrot.slane %v3053, 6
    %v3211 = vmul.f32 %v3159, %v3209
    %v3212 = vadd.f32 %v3207, %v3211
    %v3213 = vrot.slane %v2269, 2
    %3214 = vrot.lane.b32.xlu0 %v3213, 32
    %v3215 = vpop.permute.xlu0 %3214
    %v3217 = vrot.slane %v2428, 4
    %3218 = vrot.lane.b32.xlu0 %v3217, 64
    %v3219 = vpop.permute.xlu0 %3218
    %3221 = vrot.lane.b32.xlu0 %v2734, 96
    %v3222 = vpop.permute.xlu0 %3221
    %v3224 = vrot.slane %v2894, 2
    %3225 = vrot.lane.b32.xlu0 %v3224, 32
    %v3226 = vpop.permute.xlu0 %3225
    %v3228 = vrot.slane %v3053, 4
    %3229 = vrot.lane.b32.xlu0 %v3228, 64
    %v3230 = vpop.permute.xlu0 %3229
    %v3233 = vrot.slane %v3212, 6
    %3234 = vrot.lane.b32.xlu0 %v3233, 96
    %v3235 = vpop.permute.xlu0 %3234
    %v3237 = vsel %vm437, %v2112, %v3215
    %vm3238 = vcmask 523264
    %v3239 = vsel %vm3238, %v3237, %v3219
    %vm3240 = vcmask 785408
    %v3241 = vsel %vm3240, %v3239, %v3222
    %v3242 = vsel %vm437, %v2737, %v3226
    %v3243 = vsel %vm3238, %v3242, %v3230
    %v3244 = vsel %vm3240, %v3243, %v3235
    %v3247 = vcombine.low %v3241, %v3244
    %v3249 = vunpack.c.l.s4 1983009808
    %v3250 = vunpack.c.0.s8 %v3249
    %v3251 = vlaneseq
    %v3252 = vshrl.u32 %v3251, 7
    %v3253 = vsub.s32 %v3250, %v3252
    %v3254 = vrot.slane %v3247, %v3253
    %3256 = vst [vmem:[#allocation22] sm:$0xf] %v3254
    // Predicated region
    $region134: #{tpu_custom_call.1} parent=1 // pred_check
      _
    $region135: #{tpu_custom_call.1} parent=1 // pred_check_branch
      %3258 = sbr.rel (0) target = $region137
    $region136: #{tpu_custom_call.1} parent=1 // pred_region
      %s3260 = ssub.s32 64, 64
      %3261 = vsyncadd [#allocation4], %s3260
      %s3263 = sshll.u32 [#allocation22], 4
      %s3264 = int_to_ptr.vmem [resolvable:$true] %s3263
      %3266 = dma.vmem_to_hbm [thread:$0]  %s3264, 64, %s21, [#allocation4]
    $region137: #{tpu_custom_call.1} parent=1 // pred_fallthru
      _
    // Predicated region
    $region138: #{tpu_custom_call.1} parent=1 // pred_check
      _
    $region139: #{tpu_custom_call.1} parent=1 // pred_check_branch
      %3268 = sbr.rel (0) target = $region141
    $region140: #{tpu_custom_call.1} parent=1 // pred_region
      %3269 = dma.done [#allocation4], 64
    $region141: #{tpu_custom_call.1} parent=1 // pred_fallthru
      _
    %3270 = vsyncpa [#allocation3], 1
    %3271 = vsyncpa [#allocation6], 1
    %3272 = vsyncpa [#allocation9], 1
    %3273 = vsyncpa [#allocation12], 1
    %3274 = vsyncpa [#allocation15], 1
    %3275 = vsyncpa [#allocation18], 1
    %3276 = vsyncpa [#allocation21], 1
    %3277 = vsyncpa [#allocation4], 1

</llo_original>
